<compile_context>
chip_gen: v6e
topology: v6e:2x2x1
jax: 0.10.0
libtpu: 0.0.40
codegen_flags: <defaults>
</compile_context>

<pallas_src>
import functools

import jax
import jax.numpy as jnp
from jax.experimental import pallas as pl
from jax.experimental.pallas import tpu as pltpu

EPS = 1e-5  # nn.InstanceNorm2d default eps


def _resnet_block_kernel(x_ref,
                         w1_ref, g1_ref, be1_ref,
                         w2_ref, g2_ref, be2_ref,
                         o_ref, pad_ref, *, H, W, C, mm_dtype):
    # x_ref block : (1, H, W, C)            input (also the residual)
    # w*_ref      : (3, 3C, C) mm_dtype     K-packed conv weights [dy, dx*C+ci, co]
    # g*/be*_ref  : (1, C) f32              InstanceNorm gamma / beta
    # pad_ref     : (H+2, W+2, C) mm_dtype  shared zero-padded scratch

    # Zero only the 1-pixel border; the interior is always fully overwritten.
    zrow = jnp.zeros((1, W + 2, C), mm_dtype)
    zcol = jnp.zeros((H + 2, 1, C), mm_dtype)
    pad_ref[0:1, :, :] = zrow
    pad_ref[H + 1:H + 2, :, :] = zrow
    pad_ref[:, 0:1, :] = zcol
    pad_ref[:, W + 1:W + 2, :] = zcol

    def conv3x3(wp_ref):
        # K-packed 3x3 conv: three (H*W, 3C) x (3C, C) MXU matmuls with f32
        # accumulation (instead of nine K=C matmuls). No bias: it would be
        # cancelled by the InstanceNorm mean subtraction that always follows.
        padded = pad_ref[...]                                    # (H+2, W+2, C)
        # TODO(synk): pltpu.roll(padded, W+2-dx, axis=1) + aligned [:, :W]
        # slices would push the two sublane shifts onto the idle XLU slot.
        slab = jnp.concatenate(
            [padded[:, 0:W, :], padded[:, 1:W + 1, :], padded[:, 2:W + 2, :]],
            axis=-1)                                             # (H+2, W, 3C)
        wp = wp_ref[...]                                         # (3, 3C, C)
        # Init the accumulator with the first dot (no zeros + add pass);
        # chained dot adds accumulate in the MRB on v7x.
        acc = jnp.dot(slab[0:H].reshape(H * W, 3 * C), wp[0],
                      preferred_element_type=jnp.float32)
        acc = acc + jnp.dot(slab[1:H + 1].reshape(H * W, 3 * C), wp[1],
                            preferred_element_type=jnp.float32)
        acc = acc + jnp.dot(slab[2:H + 2].reshape(H * W, 3 * C), wp[2],
                            preferred_element_type=jnp.float32)
        return acc                                               # (H*W, C) f32

    def instance_norm(y, g_ref, be_ref):
        # Single-pass statistics (sum + sum-of-squares), variance clamped at 0
        # against bf16-operand roundoff, rsqrt*gamma folded into one scale.
        inv_n = 1.0 / (H * W)
        s = jnp.sum(y, axis=0, keepdims=True)
        ss = jnp.sum(y * y, axis=0, keepdims=True)
        mean = s * inv_n
        var = jnp.maximum(ss * inv_n - mean * mean, 0.0)
        scale = jax.lax.rsqrt(var + EPS) * g_ref[...]
        return (y - mean) * scale + be_ref[...]

    # Don't pin x across both convs: write the padded interior straight from
    # the pipeline-owned x block; re-read it only at the residual add.
    pad_ref[1:H + 1, 1:W + 1, :] = x_ref[0].astype(mm_dtype)

    # conv1 -> InstanceNorm -> ReLU
    h = conv3x3(w1_ref)
    h = instance_norm(h, g1_ref, be1_ref)
    h = jnp.maximum(h, 0.0)
    # TODO(synk): Dropout(0.5) omitted (use_dropout=False; identity in eval).

    # Reuse the same padded scratch for conv2 (border is still zero).
    pad_ref[1:H + 1, 1:W + 1, :] = h.reshape(H, W, C).astype(mm_dtype)

    # conv2 -> InstanceNorm
    h2 = conv3x3(w2_ref)
    h2 = instance_norm(h2, g2_ref, be2_ref)

    # Residual add (x block is still VMEM-resident; the re-read is free).
    o_ref[0] = (x_ref[0].astype(jnp.float32)
                + h2.reshape(H, W, C)).astype(o_ref.dtype)


def _vmem_limit_bytes():
    # Per-generation VMEM budget: ~56 MiB on v7x (64 MiB physical, headroom
    # for internal scratch), up to ~112 MiB on v5e/v6e (128 MiB physical).
    cap = 128 * 1024 * 1024
    try:
        cap = int(getattr(pltpu.get_tpu_info(), "vmem_capacity_bytes", cap))
    except Exception:
        pass
    return int(min(max(cap - 8 * 1024 * 1024, 32 * 1024 * 1024),
                   112 * 1024 * 1024))


def resnet_block_nhwc(x_nhwc, params, matmul_dtype=jnp.bfloat16):
    N, H, W, C = x_nhwc.shape
    kernel = functools.partial(_resnet_block_kernel, H=H, W=W, C=C,
                               mm_dtype=matmul_dtype)

    # K-pack conv weights outside the kernel: (3, 3, C, C) HWIO ->
    # (3, 3C, C) with the dx taps concatenated along the contraction axis
    # (matching the lane-concatenated activation slab); cast to the MXU dtype
    # (halves weight DMA/VMEM for bf16). IN / elementwise math stays f32.
    w1 = params["w1"].reshape(3, 3 * C, C).astype(matmul_dtype)
    w2 = params["w2"].reshape(3, 3 * C, C).astype(matmul_dtype)

    vec_spec = pl.BlockSpec((1, C), lambda n: (0, 0))
    wgt_spec = pl.BlockSpec((3, 3 * C, C), lambda n: (0, 0, 0))
    # Grid-invariant blocks (weights / IN params) keep the same block index for
    # every n, so Pallas only fetches them once.

    return pl.pallas_call(
        kernel,
        out_shape=jax.ShapeDtypeStruct((N, H, W, C), x_nhwc.dtype),
        grid_spec=pltpu.PrefetchScalarGridSpec(
            num_scalar_prefetch=0,
            grid=(N,),
            in_specs=[
                pl.BlockSpec((1, H, W, C), lambda n: (n, 0, 0, 0)),
                wgt_spec, vec_spec, vec_spec,   # conv1 weight / IN1 gamma, beta
                wgt_spec, vec_spec, vec_spec,   # conv2 weight / IN2 gamma, beta
            ],
            out_specs=pl.BlockSpec((1, H, W, C), lambda n: (n, 0, 0, 0)),
            scratch_shapes=[pltpu.VMEM((H + 2, W + 2, C), matmul_dtype)],
        ),
        compiler_params=pltpu.CompilerParams(
            dimension_semantics=("parallel",),      # shard N across v7x cores
            vmem_limit_bytes=_vmem_limit_bytes()),
    )(x_nhwc, w1, params["g1"], params["be1"],
      w2, params["g2"], params["be2"])


def resnet_block_nchw(x_nchw, params, matmul_dtype=jnp.bfloat16):
    """PyTorch-convention entry point: NCHW in, NCHW out.

    Prefer resnet_block_nhwc end-to-end across the resnet stack: these two
    transposes are full HBM read+writes that cost more than the kernel itself.
    """
    x_nhwc = jnp.transpose(x_nchw, (0, 2, 3, 1))
    out_nhwc = resnet_block_nhwc(x_nhwc, params, matmul_dtype)
    return jnp.transpose(out_nhwc, (0, 3, 1, 2))


# ---------------- pure-JAX reference (for verification) ----------------
def _ref_forward(x_nchw, params):
    def conv(x, w_hwio, b):
        w_oihw = jnp.transpose(w_hwio, (3, 2, 0, 1))
        y = jax.lax.conv_general_dilated(
            x, w_oihw, window_strides=(1, 1), padding=((1, 1), (1, 1)),
            dimension_numbers=("NCHW", "OIHW", "NCHW"))
        return y + b.reshape(1, -1, 1, 1)

    def inorm(x, g, be):
        mean = jnp.mean(x, axis=(2, 3), keepdims=True)
        var = jnp.mean((x - mean) ** 2, axis=(2, 3), keepdims=True)
        xn = (x - mean) * jax.lax.rsqrt(var + EPS)
        return xn * g.reshape(1, -1, 1, 1) + be.reshape(1, -1, 1, 1)

    h = conv(x_nchw, params["w1"], params["b1"])
    h = inorm(h, params["g1"], params["be1"])
    h = jnp.maximum(h, 0.0)
    h = conv(h, params["w2"], params["b2"])
    h = inorm(h, params["g2"], params["be2"])
    return x_nchw + h


if __name__ == "__main__":
    N, C, H, W = 2, 4, 16, 16   # dim = 4
    key = jax.random.PRNGKey(0)
    ks = jax.random.split(key, 11)

    x_nchw = jax.random.normal(ks[0], (N, C, H, W), jnp.float32)

    def mk(kw, kb, kg, kbe):
        return {
            "w": 0.1 * jax.random.normal(kw, (3, 3, C, C), jnp.float32),  # HWIO
            "b": 0.1 * jax.random.normal(kb, (1, C), jnp.float32),
            "g": 1.0 + 0.1 * jax.random.normal(kg, (1, C), jnp.float32),
            "be": 0.1 * jax.random.normal(kbe, (1, C), jnp.float32),
        }

    p1 = mk(ks[1], ks[2], ks[3], ks[4])
    p2 = mk(ks[5], ks[6], ks[7], ks[8])
    # The kernel ignores b1/b2 (cancelled by InstanceNorm); the reference keeps
    # them, which also validates the cancellation.
    params = {
        "w1": p1["w"], "b1": p1["b"], "g1": p1["g"], "be1": p1["be"],
        "w2": p2["w"], "b2": p2["b"], "g2": p2["g"], "be2": p2["be"],
    }

    ref = _ref_forward(x_nchw, params)

    # Strict check with f32 MXU operands / f32 scratch.
    out_f32 = jax.block_until_ready(
        resnet_block_nchw(x_nchw, params, matmul_dtype=jnp.float32))
    assert out_f32.shape == (N, C, H, W)
    err_f32 = float(jnp.max(jnp.abs(out_f32 - ref)))
    assert err_f32 < 1e-3, f"f32 max abs error too large: {err_f32}"

    # Default path: bf16 MXU operands + bf16 padded scratch, f32 accumulation
    # (looser tolerance for ~0.4% relative rounding of bf16 operands).
    out_bf16 = jax.block_until_ready(resnet_block_nchw(x_nchw, params))
    err_bf16 = float(jnp.max(jnp.abs(out_bf16 - ref)))
    assert err_bf16 < 1e-1, f"bf16 max abs error too large: {err_bf16}"

    print("KERNEL_OK")
</pallas_src>

<mosaic_0001>
module attributes {stable_mosaic.version = 11 : i64} {
  func.func @_resnet_block_kernel(%arg0: i32, %arg1: memref<1x16x16x4xf32, #tpu.memory_space<vmem>>, %arg2: memref<3x12x4xf32, #tpu.memory_space<vmem>>, %arg3: memref<1x4xf32, #tpu.memory_space<vmem>>, %arg4: memref<1x4xf32, #tpu.memory_space<vmem>>, %arg5: memref<3x12x4xf32, #tpu.memory_space<vmem>>, %arg6: memref<1x4xf32, #tpu.memory_space<vmem>>, %arg7: memref<1x4xf32, #tpu.memory_space<vmem>>, %arg8: memref<1x16x16x4xf32, #tpu.memory_space<vmem>>, %arg9: memref<18x18x4xf32, #tpu.memory_space<vmem>>) attributes {dimension_semantics = [#tpu.dimension_semantics<parallel>], iteration_bounds = array<i64: 2>, scalar_prefetch = 0 : i64, scratch_operands = 1 : i64, tpu.core_type = #tpu.core_type<tc>, window_params = [{transform_indices = @transform_0, window_bounds = array<i64: 1, 16, 16, 4>}, {pipeline_mode = #tpu.pipeline_mode<synchronous>, transform_indices = @transform_1, window_bounds = array<i64: 3, 12, 4>}, {pipeline_mode = #tpu.pipeline_mode<synchronous>, transform_indices = @transform_2, window_bounds = array<i64: 1, 4>}, {pipeline_mode = #tpu.pipeline_mode<synchronous>, transform_indices = @transform_3, window_bounds = array<i64: 1, 4>}, {pipeline_mode = #tpu.pipeline_mode<synchronous>, transform_indices = @transform_4, window_bounds = array<i64: 3, 12, 4>}, {pipeline_mode = #tpu.pipeline_mode<synchronous>, transform_indices = @transform_5, window_bounds = array<i64: 1, 4>}, {pipeline_mode = #tpu.pipeline_mode<synchronous>, transform_indices = @transform_6, window_bounds = array<i64: 1, 4>}, {transform_indices = @transform_7, window_bounds = array<i64: 1, 16, 16, 4>}]} {
    %cst = arith.constant 0.000000e+00 : f32
    %0 = vector.broadcast %cst : f32 to vector<1x18x4xf32>
    %cst_0 = arith.constant 0.000000e+00 : f32
    %1 = vector.broadcast %cst_0 : f32 to vector<18x1x4xf32>
    %c0 = arith.constant 0 : index
    %c0_1 = arith.constant 0 : index
    %c0_2 = arith.constant 0 : index
    %2 = vector.load %arg9[%c0, %c0_1, %c0_2] : memref<18x18x4xf32, #tpu.memory_space<vmem>>, vector<1x18x4xf32>
    tpu.vector_store %arg9[%c0, %c0_1, %c0_2], %0 {strides = array<i32>} : memref<18x18x4xf32, #tpu.memory_space<vmem>>, vector<1x18x4xf32>,
    %c17 = arith.constant 17 : index
    %c0_3 = arith.constant 0 : index
    %c0_4 = arith.constant 0 : index
    %3 = vector.load %arg9[%c17, %c0_3, %c0_4] : memref<18x18x4xf32, #tpu.memory_space<vmem>>, vector<1x18x4xf32>
    tpu.vector_store %arg9[%c17, %c0_3, %c0_4], %0 {strides = array<i32>} : memref<18x18x4xf32, #tpu.memory_space<vmem>>, vector<1x18x4xf32>,
    %c0_5 = arith.constant 0 : index
    %c0_6 = arith.constant 0 : index
    %c0_7 = arith.constant 0 : index
    %4 = vector.load %arg9[%c0_5, %c0_6, %c0_7] : memref<18x18x4xf32, #tpu.memory_space<vmem>>, vector<18x1x4xf32>
    tpu.vector_store %arg9[%c0_5, %c0_6, %c0_7], %1 {strides = array<i32>} : memref<18x18x4xf32, #tpu.memory_space<vmem>>, vector<18x1x4xf32>,
    %c0_8 = arith.constant 0 : index
    %c17_9 = arith.constant 17 : index
    %c0_10 = arith.constant 0 : index
    %5 = vector.load %arg9[%c0_8, %c17_9, %c0_10] : memref<18x18x4xf32, #tpu.memory_space<vmem>>, vector<18x1x4xf32>
    tpu.vector_store %arg9[%c0_8, %c17_9, %c0_10], %1 {strides = array<i32>} : memref<18x18x4xf32, #tpu.memory_space<vmem>>, vector<18x1x4xf32>,
    %c0_11 = arith.constant 0 : index
    %c0_12 = arith.constant 0 : index
    %c0_13 = arith.constant 0 : index
    %c0_14 = arith.constant 0 : index
    %6 = vector.load %arg1[%c0_11, %c0_12, %c0_13, %c0_14] : memref<1x16x16x4xf32, #tpu.memory_space<vmem>>, vector<1x16x16x4xf32>
    %7 = vector.shape_cast %6 : vector<1x16x16x4xf32> to vector<16x16x4xf32>
    %c1 = arith.constant 1 : index
    %c1_15 = arith.constant 1 : index
    %c0_16 = arith.constant 0 : index
    %8 = vector.load %arg9[%c1, %c1_15, %c0_16] : memref<18x18x4xf32, #tpu.memory_space<vmem>>, vector<16x16x4xf32>
    tpu.vector_store %arg9[%c1, %c1_15, %c0_16], %7 {strides = array<i32>} : memref<18x18x4xf32, #tpu.memory_space<vmem>>, vector<16x16x4xf32>,
    %c0_17 = arith.constant 0 : index
    %c0_18 = arith.constant 0 : index
    %c0_19 = arith.constant 0 : index
    %9 = vector.load %arg9[%c0_17, %c0_18, %c0_19] : memref<18x18x4xf32, #tpu.memory_space<vmem>>, vector<18x18x4xf32>
    %10 = vector.extract_strided_slice %9 {offsets = [0, 0, 0], sizes = [18, 16, 4], strides = [1, 1, 1]} : vector<18x18x4xf32> to vector<18x16x4xf32>
    %11 = vector.extract_strided_slice %9 {offsets = [0, 1, 0], sizes = [18, 16, 4], strides = [1, 1, 1]} : vector<18x18x4xf32> to vector<18x16x4xf32>
    %12 = vector.extract_strided_slice %9 {offsets = [0, 2, 0], sizes = [18, 16, 4], strides = [1, 1, 1]} : vector<18x18x4xf32> to vector<18x16x4xf32>
    %13 = tpu.concatenate %10, %11, %12 in 2 : vector<18x16x4xf32>, vector<18x16x4xf32>, vector<18x16x4xf32> -> vector<18x16x12xf32>
    %c0_20 = arith.constant 0 : index
    %c0_21 = arith.constant 0 : index
    %c0_22 = arith.constant 0 : index
    %14 = vector.load %arg2[%c0_20, %c0_21, %c0_22] : memref<3x12x4xf32, #tpu.memory_space<vmem>>, vector<3x12x4xf32>
    %15 = vector.extract_strided_slice %13 {offsets = [0, 0, 0], sizes = [16, 16, 12], strides = [1, 1, 1]} : vector<18x16x12xf32> to vector<16x16x12xf32>
    %16 = vector.shape_cast %15 : vector<16x16x12xf32> to vector<256x12xf32>
    %17 = vector.extract_strided_slice %14 {offsets = [0, 0, 0], sizes = [1, 12, 4], strides = [1, 1, 1]} : vector<3x12x4xf32> to vector<1x12x4xf32>
    %18 = vector.shape_cast %17 : vector<1x12x4xf32> to vector<12x4xf32>
    %cst_23 = arith.constant dense<0.000000e+00> : vector<256x4xf32>
    %19 = tpu.matmul %16, %18, %cst_23 {dimension_numbers = #tpu.dot_dimension_numbers<[1], [0], [0], [1], [0, 0, 1, 1], [], []>} : vector<256x12xf32>, vector<12x4xf32>, vector<256x4xf32> -> vector<256x4xf32>
    %20 = vector.extract_strided_slice %13 {offsets = [1, 0, 0], sizes = [16, 16, 12], strides = [1, 1, 1]} : vector<18x16x12xf32> to vector<16x16x12xf32>
    %21 = vector.shape_cast %20 : vector<16x16x12xf32> to vector<256x12xf32>
    %22 = vector.extract_strided_slice %14 {offsets = [1, 0, 0], sizes = [1, 12, 4], strides = [1, 1, 1]} : vector<3x12x4xf32> to vector<1x12x4xf32>
    %23 = vector.shape_cast %22 : vector<1x12x4xf32> to vector<12x4xf32>
    %cst_24 = arith.constant dense<0.000000e+00> : vector<256x4xf32>
    %24 = tpu.matmul %21, %23, %cst_24 {dimension_numbers = #tpu.dot_dimension_numbers<[1], [0], [0], [1], [0, 0, 1, 1], [], []>} : vector<256x12xf32>, vector<12x4xf32>, vector<256x4xf32> -> vector<256x4xf32>
    %25 = arith.addf %19, %24 : vector<256x4xf32>
    %26 = vector.extract_strided_slice %13 {offsets = [2, 0, 0], sizes = [16, 16, 12], strides = [1, 1, 1]} : vector<18x16x12xf32> to vector<16x16x12xf32>
    %27 = vector.shape_cast %26 : vector<16x16x12xf32> to vector<256x12xf32>
    %28 = vector.extract_strided_slice %14 {offsets = [2, 0, 0], sizes = [1, 12, 4], strides = [1, 1, 1]} : vector<3x12x4xf32> to vector<1x12x4xf32>
    %29 = vector.shape_cast %28 : vector<1x12x4xf32> to vector<12x4xf32>
    %cst_25 = arith.constant dense<0.000000e+00> : vector<256x4xf32>
    %30 = tpu.matmul %27, %29, %cst_25 {dimension_numbers = #tpu.dot_dimension_numbers<[1], [0], [0], [1], [0, 0, 1, 1], [], []>} : vector<256x12xf32>, vector<12x4xf32>, vector<256x4xf32> -> vector<256x4xf32>
    %31 = arith.addf %25, %30 : vector<256x4xf32>
    %cst_26 = arith.constant dense<0.000000e+00> : vector<4xf32>
    %32 = vector.multi_reduction <add>, %31, %cst_26 [0] : vector<256x4xf32> to vector<4xf32>
    %33 = vector.shape_cast %32 : vector<4xf32> to vector<1x4xf32>
    %34 = arith.mulf %31, %31 : vector<256x4xf32>
    %cst_27 = arith.constant dense<0.000000e+00> : vector<4xf32>
    %35 = vector.multi_reduction <add>, %34, %cst_27 [0] : vector<256x4xf32> to vector<4xf32>
    %36 = vector.shape_cast %35 : vector<4xf32> to vector<1x4xf32>
    %cst_28 = arith.constant 3.906250e-03 : f32
    %37 = vector.broadcast %cst_28 : f32 to vector<1x4xf32>
    %38 = arith.mulf %33, %37 : vector<1x4xf32>
    %cst_29 = arith.constant 3.906250e-03 : f32
    %39 = vector.broadcast %cst_29 : f32 to vector<1x4xf32>
    %40 = arith.mulf %36, %39 : vector<1x4xf32>
    %41 = arith.mulf %38, %38 : vector<1x4xf32>
    %42 = arith.subf %40, %41 : vector<1x4xf32>
    %cst_30 = arith.constant 0.000000e+00 : f32
    %43 = vector.broadcast %cst_30 : f32 to vector<1x4xf32>
    %44 = arith.maximumf %42, %43 : vector<1x4xf32>
    %cst_31 = arith.constant 9.99999974E-6 : f32
    %45 = vector.broadcast %cst_31 : f32 to vector<1x4xf32>
    %46 = arith.addf %44, %45 : vector<1x4xf32>
    %47 = math.rsqrt %46 : vector<1x4xf32>
    %c0_32 = arith.constant 0 : index
    %c0_33 = arith.constant 0 : index
    %48 = vector.load %arg3[%c0_32, %c0_33] : memref<1x4xf32, #tpu.memory_space<vmem>>, vector<1x4xf32>
    %49 = arith.mulf %47, %48 : vector<1x4xf32>
    %50 = vector.broadcast %38 : vector<1x4xf32> to vector<256x4xf32>
    %51 = arith.subf %31, %50 : vector<256x4xf32>
    %52 = vector.broadcast %49 : vector<1x4xf32> to vector<256x4xf32>
    %53 = arith.mulf %51, %52 : vector<256x4xf32>
    %c0_34 = arith.constant 0 : index
    %c0_35 = arith.constant 0 : index
    %54 = vector.load %arg4[%c0_34, %c0_35] : memref<1x4xf32, #tpu.memory_space<vmem>>, vector<1x4xf32>
    %55 = vector.broadcast %54 : vector<1x4xf32> to vector<256x4xf32>
    %56 = arith.addf %53, %55 : vector<256x4xf32>
    %cst_36 = arith.constant 0.000000e+00 : f32
    %57 = vector.broadcast %cst_36 : f32 to vector<256x4xf32>
    %58 = arith.maximumf %56, %57 : vector<256x4xf32>
    %59 = vector.shape_cast %58 : vector<256x4xf32> to vector<16x16x4xf32>
    %c1_37 = arith.constant 1 : index
    %c1_38 = arith.constant 1 : index
    %c0_39 = arith.constant 0 : index
    %60 = vector.load %arg9[%c1_37, %c1_38, %c0_39] : memref<18x18x4xf32, #tpu.memory_space<vmem>>, vector<16x16x4xf32>
    tpu.vector_store %arg9[%c1_37, %c1_38, %c0_39], %59 {strides = array<i32>} : memref<18x18x4xf32, #tpu.memory_space<vmem>>, vector<16x16x4xf32>,
    %c0_40 = arith.constant 0 : index
    %c0_41 = arith.constant 0 : index
    %c0_42 = arith.constant 0 : index
    %61 = vector.load %arg9[%c0_40, %c0_41, %c0_42] : memref<18x18x4xf32, #tpu.memory_space<vmem>>, vector<18x18x4xf32>
    %62 = vector.extract_strided_slice %61 {offsets = [0, 0, 0], sizes = [18, 16, 4], strides = [1, 1, 1]} : vector<18x18x4xf32> to vector<18x16x4xf32>
    %63 = vector.extract_strided_slice %61 {offsets = [0, 1, 0], sizes = [18, 16, 4], strides = [1, 1, 1]} : vector<18x18x4xf32> to vector<18x16x4xf32>
    %64 = vector.extract_strided_slice %61 {offsets = [0, 2, 0], sizes = [18, 16, 4], strides = [1, 1, 1]} : vector<18x18x4xf32> to vector<18x16x4xf32>
    %65 = tpu.concatenate %62, %63, %64 in 2 : vector<18x16x4xf32>, vector<18x16x4xf32>, vector<18x16x4xf32> -> vector<18x16x12xf32>
    %c0_43 = arith.constant 0 : index
    %c0_44 = arith.constant 0 : index
    %c0_45 = arith.constant 0 : index
    %66 = vector.load %arg5[%c0_43, %c0_44, %c0_45] : memref<3x12x4xf32, #tpu.memory_space<vmem>>, vector<3x12x4xf32>
    %67 = vector.extract_strided_slice %65 {offsets = [0, 0, 0], sizes = [16, 16, 12], strides = [1, 1, 1]} : vector<18x16x12xf32> to vector<16x16x12xf32>
    %68 = vector.shape_cast %67 : vector<16x16x12xf32> to vector<256x12xf32>
    %69 = vector.extract_strided_slice %66 {offsets = [0, 0, 0], sizes = [1, 12, 4], strides = [1, 1, 1]} : vector<3x12x4xf32> to vector<1x12x4xf32>
    %70 = vector.shape_cast %69 : vector<1x12x4xf32> to vector<12x4xf32>
    %cst_46 = arith.constant dense<0.000000e+00> : vector<256x4xf32>
    %71 = tpu.matmul %68, %70, %cst_46 {dimension_numbers = #tpu.dot_dimension_numbers<[1], [0], [0], [1], [0, 0, 1, 1], [], []>} : vector<256x12xf32>, vector<12x4xf32>, vector<256x4xf32> -> vector<256x4xf32>
    %72 = vector.extract_strided_slice %65 {offsets = [1, 0, 0], sizes = [16, 16, 12], strides = [1, 1, 1]} : vector<18x16x12xf32> to vector<16x16x12xf32>
    %73 = vector.shape_cast %72 : vector<16x16x12xf32> to vector<256x12xf32>
    %74 = vector.extract_strided_slice %66 {offsets = [1, 0, 0], sizes = [1, 12, 4], strides = [1, 1, 1]} : vector<3x12x4xf32> to vector<1x12x4xf32>
    %75 = vector.shape_cast %74 : vector<1x12x4xf32> to vector<12x4xf32>
    %cst_47 = arith.constant dense<0.000000e+00> : vector<256x4xf32>
    %76 = tpu.matmul %73, %75, %cst_47 {dimension_numbers = #tpu.dot_dimension_numbers<[1], [0], [0], [1], [0, 0, 1, 1], [], []>} : vector<256x12xf32>, vector<12x4xf32>, vector<256x4xf32> -> vector<256x4xf32>
    %77 = arith.addf %71, %76 : vector<256x4xf32>
    %78 = vector.extract_strided_slice %65 {offsets = [2, 0, 0], sizes = [16, 16, 12], strides = [1, 1, 1]} : vector<18x16x12xf32> to vector<16x16x12xf32>
    %79 = vector.shape_cast %78 : vector<16x16x12xf32> to vector<256x12xf32>
    %80 = vector.extract_strided_slice %66 {offsets = [2, 0, 0], sizes = [1, 12, 4], strides = [1, 1, 1]} : vector<3x12x4xf32> to vector<1x12x4xf32>
    %81 = vector.shape_cast %80 : vector<1x12x4xf32> to vector<12x4xf32>
    %cst_48 = arith.constant dense<0.000000e+00> : vector<256x4xf32>
    %82 = tpu.matmul %79, %81, %cst_48 {dimension_numbers = #tpu.dot_dimension_numbers<[1], [0], [0], [1], [0, 0, 1, 1], [], []>} : vector<256x12xf32>, vector<12x4xf32>, vector<256x4xf32> -> vector<256x4xf32>
    %83 = arith.addf %77, %82 : vector<256x4xf32>
    %cst_49 = arith.constant dense<0.000000e+00> : vector<4xf32>
    %84 = vector.multi_reduction <add>, %83, %cst_49 [0] : vector<256x4xf32> to vector<4xf32>
    %85 = vector.shape_cast %84 : vector<4xf32> to vector<1x4xf32>
    %86 = arith.mulf %83, %83 : vector<256x4xf32>
    %cst_50 = arith.constant dense<0.000000e+00> : vector<4xf32>
    %87 = vector.multi_reduction <add>, %86, %cst_50 [0] : vector<256x4xf32> to vector<4xf32>
    %88 = vector.shape_cast %87 : vector<4xf32> to vector<1x4xf32>
    %cst_51 = arith.constant 3.906250e-03 : f32
    %89 = vector.broadcast %cst_51 : f32 to vector<1x4xf32>
    %90 = arith.mulf %85, %89 : vector<1x4xf32>
    %cst_52 = arith.constant 3.906250e-03 : f32
    %91 = vector.broadcast %cst_52 : f32 to vector<1x4xf32>
    %92 = arith.mulf %88, %91 : vector<1x4xf32>
    %93 = arith.mulf %90, %90 : vector<1x4xf32>
    %94 = arith.subf %92, %93 : vector<1x4xf32>
    %cst_53 = arith.constant 0.000000e+00 : f32
    %95 = vector.broadcast %cst_53 : f32 to vector<1x4xf32>
    %96 = arith.maximumf %94, %95 : vector<1x4xf32>
    %cst_54 = arith.constant 9.99999974E-6 : f32
    %97 = vector.broadcast %cst_54 : f32 to vector<1x4xf32>
    %98 = arith.addf %96, %97 : vector<1x4xf32>
    %99 = math.rsqrt %98 : vector<1x4xf32>
    %c0_55 = arith.constant 0 : index
    %c0_56 = arith.constant 0 : index
    %100 = vector.load %arg6[%c0_55, %c0_56] : memref<1x4xf32, #tpu.memory_space<vmem>>, vector<1x4xf32>
    %101 = arith.mulf %99, %100 : vector<1x4xf32>
    %102 = vector.broadcast %90 : vector<1x4xf32> to vector<256x4xf32>
    %103 = arith.subf %83, %102 : vector<256x4xf32>
    %104 = vector.broadcast %101 : vector<1x4xf32> to vector<256x4xf32>
    %105 = arith.mulf %103, %104 : vector<256x4xf32>
    %c0_57 = arith.constant 0 : index
    %c0_58 = arith.constant 0 : index
    %106 = vector.load %arg7[%c0_57, %c0_58] : memref<1x4xf32, #tpu.memory_space<vmem>>, vector<1x4xf32>
    %107 = vector.broadcast %106 : vector<1x4xf32> to vector<256x4xf32>
    %108 = arith.addf %105, %107 : vector<256x4xf32>
    %c0_59 = arith.constant 0 : index
    %c0_60 = arith.constant 0 : index
    %c0_61 = arith.constant 0 : index
    %c0_62 = arith.constant 0 : index
    %109 = vector.load %arg1[%c0_59, %c0_60, %c0_61, %c0_62] : memref<1x16x16x4xf32, #tpu.memory_space<vmem>>, vector<1x16x16x4xf32>
    %110 = vector.shape_cast %109 : vector<1x16x16x4xf32> to vector<16x16x4xf32>
    %111 = vector.shape_cast %108 : vector<256x4xf32> to vector<16x16x4xf32>
    %112 = arith.addf %110, %111 : vector<16x16x4xf32>
    %c0_63 = arith.constant 0 : index
    %c0_64 = arith.constant 0 : index
    %c0_65 = arith.constant 0 : index
    %c0_66 = arith.constant 0 : index
    %113 = vector.load %arg8[%c0_63, %c0_64, %c0_65, %c0_66] : memref<1x16x16x4xf32, #tpu.memory_space<vmem>>, vector<1x16x16x4xf32>
    %114 = vector.shape_cast %113 : vector<1x16x16x4xf32> to vector<16x16x4xf32>
    %115 = vector.shape_cast %112 : vector<16x16x4xf32> to vector<1x16x16x4xf32>
    tpu.vector_store %arg8[%c0_63, %c0_64, %c0_65, %c0_66], %115 {strides = array<i32>} : memref<1x16x16x4xf32, #tpu.memory_space<vmem>>, vector<1x16x16x4xf32>,
    return
  }
  func.func @transform_0(%arg0: i32) -> (i32, i32, i32, i32) {
    %c0_i32 = arith.constant 0 : i32
    %c0_i32_0 = arith.constant 0 : i32
    %c0_i32_1 = arith.constant 0 : i32
    %c0_i32_2 = arith.constant 0 : i32
    return %arg0, %c0_i32, %c0_i32_0, %c0_i32_1 : i32, i32, i32, i32
  }
  func.func @transform_1(%arg0: i32) -> (i32, i32, i32) {
    %c0_i32 = arith.constant 0 : i32
    %c0_i32_0 = arith.constant 0 : i32
    %c0_i32_1 = arith.constant 0 : i32
    %c0_i32_2 = arith.constant 0 : i32
    return %c0_i32, %c0_i32_0, %c0_i32_1 : i32, i32, i32
  }
  func.func @transform_2(%arg0: i32) -> (i32, i32) {
    %c0_i32 = arith.constant 0 : i32
    %c0_i32_0 = arith.constant 0 : i32
    %c0_i32_1 = arith.constant 0 : i32
    return %c0_i32, %c0_i32_0 : i32, i32
  }
  func.func @transform_3(%arg0: i32) -> (i32, i32) {
    %c0_i32 = arith.constant 0 : i32
    %c0_i32_0 = arith.constant 0 : i32
    %c0_i32_1 = arith.constant 0 : i32
    return %c0_i32, %c0_i32_0 : i32, i32
  }
  func.func @transform_4(%arg0: i32) -> (i32, i32, i32) {
    %c0_i32 = arith.constant 0 : i32
    %c0_i32_0 = arith.constant 0 : i32
    %c0_i32_1 = arith.constant 0 : i32
    %c0_i32_2 = arith.constant 0 : i32
    return %c0_i32, %c0_i32_0, %c0_i32_1 : i32, i32, i32
  }
  func.func @transform_5(%arg0: i32) -> (i32, i32) {
    %c0_i32 = arith.constant 0 : i32
    %c0_i32_0 = arith.constant 0 : i32
    %c0_i32_1 = arith.constant 0 : i32
    return %c0_i32, %c0_i32_0 : i32, i32
  }
  func.func @transform_6(%arg0: i32) -> (i32, i32) {
    %c0_i32 = arith.constant 0 : i32
    %c0_i32_0 = arith.constant 0 : i32
    %c0_i32_1 = arith.constant 0 : i32
    return %c0_i32, %c0_i32_0 : i32, i32
  }
  func.func @transform_7(%arg0: i32) -> (i32, i32, i32, i32) {
    %c0_i32 = arith.constant 0 : i32
    %c0_i32_0 = arith.constant 0 : i32
    %c0_i32_1 = arith.constant 0 : i32
    %c0_i32_2 = arith.constant 0 : i32
    return %arg0, %c0_i32, %c0_i32_0, %c0_i32_1 : i32, i32, i32, i32
  }
}

</mosaic_0001>

<llo_original>
// kernel: tpu_custom_call.1
$region0: #{tpu_custom_call.1}
  #allocation0 [shape = 'u32[]', space=smem, size = 0x4, offset = 0x4, fixed_abs, tag = 'smem constant byte address 0x4 - core index']
  #allocation1 [shape = 'u32[144,128]{1,0:T(1,128)}', space=vmem, size = 0x12000, scoped, tag = 'internal scratch']
  #allocation2 [shape = 'f32[18,18,4]{2,1,0:T(8,128)}', space=vmem, size = 0x36000, scoped, tag = 'scratch operand']
  %s0 = inlined_call_operand.vmem [shape: f32[2,16,16,4], index: 0, kind: input, shape index: {}]
  %s1 = inlined_call_operand.vmem [shape: f32[3,12,4], index: 1, kind: input, shape index: {}]
  %s2 = inlined_call_operand.vmem [shape: f32[1,4], index: 2, kind: input, shape index: {}]
  %s3 = inlined_call_operand.vmem [shape: f32[1,4], index: 3, kind: input, shape index: {}]
  %s4 = inlined_call_operand.vmem [shape: f32[3,12,4], index: 4, kind: input, shape index: {}]
  %s5 = inlined_call_operand.vmem [shape: f32[1,4], index: 5, kind: input, shape index: {}]
  %s6 = inlined_call_operand.vmem [shape: f32[1,4], index: 6, kind: input, shape index: {}]
  %s7 = inlined_call_operand.vmem [shape: f32[2,16,16,4], index: 7, kind: output, shape index: {}]
  %s8 = sld [smem:[#allocation0]]
  $region61: #{tpu_custom_call.1} parent=0
    _
  %s10 = ssub.s32 1, %s8
  %s11 = scalar_select 0, %s10, %s8
  loop: start=0, step=1, limit=4
  $region2: #{tpu_custom_call.1} parent=0 // loop_pre_header
    _
  $region3: #{tpu_custom_call.1} parent=0 // loop_header
    %s13 = sphi 0, %s17
    %p14 = scmp.ge.s32.totalorder %s13, 4
    %s23 = sphi 0, %s25
    %s26 = sphi 0, %s23
    %s27 = sphi 0, %s26
    %s43 = sphi 0, %s27
    %s47 = sphi 0, %s47
    %s49 = sphi 0, %s47
    %s50 = sphi 0, %s49
    %s64 = sphi 0, %s50
    %s68 = sphi 0, %s68
    %s70 = sphi 0, %s68
    %s71 = sphi 0, %s70
    %s85 = sphi 0, %s71
    %s89 = sphi 0, %s89
    %s91 = sphi 0, %s89
    %s92 = sphi 0, %s91
    %s106 = sphi 0, %s92
    %s110 = sphi 0, %s110
    %s112 = sphi 0, %s110
    %s113 = sphi 0, %s112
    %s127 = sphi 0, %s113
    %s131 = sphi 0, %s131
    %s133 = sphi 0, %s131
    %s134 = sphi 0, %s133
    %s148 = sphi 0, %s134
    %s152 = sphi 0, %s152
    %s154 = sphi 0, %s152
    %s155 = sphi 0, %s154
    %s169 = sphi 0, %s155
    %s175 = sphi 0, %s177
    %s178 = sphi 0, %s175
    %s179 = sphi 0, %s178
    %s195 = sphi 0, %s179
  $region4: #{tpu_custom_call.1} parent=0 // loop_header_branch
    %16 = sbr.rel (%p14) target = $region8
  $region5: #{tpu_custom_call.1} parent=0 // loop_body
    %s18 = ssub.s32 %s13, 1
    %s19 = ssub.s32 %s13, 2
    %s20 = sadd.s32 %s13, 1
    %s21 = ssub.s32 %s13, %s20
    %p22 = scmp.eq.s32.totalorder %s21, 0
    %s24 = sadd.s32 %s23, 1
    %s25 = scalar_select %p22, %s23, %s24
    %p28 = pneg %p22
    %p29 = scmp.eq.s32.totalorder %s13, 1
    %p30 = por %p28, %p29
    %p31 = scmp.ne.s32.totalorder %s23, %s26
    %p32 = scmp.eq.s32.totalorder %s13, 0
    %p33 = por %p31, %p32
    %p34 = scmp.ne.s32.totalorder %s23, %s26
    %p35 = scmp.eq.s32.totalorder %s18, 1
    %p36 = por %p34, %p35
    %p37 = scmp.ne.s32.totalorder %s26, %s27
    %p38 = scmp.eq.s32.totalorder %s18, 0
    %p39 = por %p37, %p38
    %p40 = scmp.ne.s32.totalorder %s26, %s27
    %p41 = scmp.eq.s32.totalorder %s19, 1
    %p42 = por %p40, %p41
    %p44 = scmp.ne.s32.totalorder %s27, %s43
    %p45 = scmp.eq.s32.totalorder %s19, 0
    %p46 = por %p44, %p45
    %s48 = sadd.s32 %s47, 1
    %p51 = scmp.eq.s32.totalorder %s13, 1
    %p52 = scmp.ne.s32.totalorder %s47, %s49
    %p53 = scmp.eq.s32.totalorder %s13, 0
    %p54 = por %p52, %p53
    %p55 = scmp.ne.s32.totalorder %s47, %s49
    %p56 = scmp.eq.s32.totalorder %s18, 1
    %p57 = por %p55, %p56
    %p58 = scmp.ne.s32.totalorder %s49, %s50
    %p59 = scmp.eq.s32.totalorder %s18, 0
    %p60 = por %p58, %p59
    %p61 = scmp.ne.s32.totalorder %s49, %s50
    %p62 = scmp.eq.s32.totalorder %s19, 1
    %p63 = por %p61, %p62
    %p65 = scmp.ne.s32.totalorder %s50, %s64
    %p66 = scmp.eq.s32.totalorder %s19, 0
    %p67 = por %p65, %p66
    %s69 = sadd.s32 %s68, 1
    %p72 = scmp.eq.s32.totalorder %s13, 1
    %p73 = scmp.ne.s32.totalorder %s68, %s70
    %p74 = scmp.eq.s32.totalorder %s13, 0
    %p75 = por %p73, %p74
    %p76 = scmp.ne.s32.totalorder %s68, %s70
    %p77 = scmp.eq.s32.totalorder %s18, 1
    %p78 = por %p76, %p77
    %p79 = scmp.ne.s32.totalorder %s70, %s71
    %p80 = scmp.eq.s32.totalorder %s18, 0
    %p81 = por %p79, %p80
    %p82 = scmp.ne.s32.totalorder %s70, %s71
    %p83 = scmp.eq.s32.totalorder %s19, 1
    %p84 = por %p82, %p83
    %p86 = scmp.ne.s32.totalorder %s71, %s85
    %p87 = scmp.eq.s32.totalorder %s19, 0
    %p88 = por %p86, %p87
    %s90 = sadd.s32 %s89, 1
    %p93 = scmp.eq.s32.totalorder %s13, 1
    %p94 = scmp.ne.s32.totalorder %s89, %s91
    %p95 = scmp.eq.s32.totalorder %s13, 0
    %p96 = por %p94, %p95
    %p97 = scmp.ne.s32.totalorder %s89, %s91
    %p98 = scmp.eq.s32.totalorder %s18, 1
    %p99 = por %p97, %p98
    %p100 = scmp.ne.s32.totalorder %s91, %s92
    %p101 = scmp.eq.s32.totalorder %s18, 0
    %p102 = por %p100, %p101
    %p103 = scmp.ne.s32.totalorder %s91, %s92
    %p104 = scmp.eq.s32.totalorder %s19, 1
    %p105 = por %p103, %p104
    %p107 = scmp.ne.s32.totalorder %s92, %s106
    %p108 = scmp.eq.s32.totalorder %s19, 0
    %p109 = por %p107, %p108
    %s111 = sadd.s32 %s110, 1
    %p114 = scmp.eq.s32.totalorder %s13, 1
    %p115 = scmp.ne.s32.totalorder %s110, %s112
    %p116 = scmp.eq.s32.totalorder %s13, 0
    %p117 = por %p115, %p116
    %p118 = scmp.ne.s32.totalorder %s110, %s112
    %p119 = scmp.eq.s32.totalorder %s18, 1
    %p120 = por %p118, %p119
    %p121 = scmp.ne.s32.totalorder %s112, %s113
    %p122 = scmp.eq.s32.totalorder %s18, 0
    %p123 = por %p121, %p122
    %p124 = scmp.ne.s32.totalorder %s112, %s113
    %p125 = scmp.eq.s32.totalorder %s19, 1
    %p126 = por %p124, %p125
    %p128 = scmp.ne.s32.totalorder %s113, %s127
    %p129 = scmp.eq.s32.totalorder %s19, 0
    %p130 = por %p128, %p129
    %s132 = sadd.s32 %s131, 1
    %p135 = scmp.eq.s32.totalorder %s13, 1
    %p136 = scmp.ne.s32.totalorder %s131, %s133
    %p137 = scmp.eq.s32.totalorder %s13, 0
    %p138 = por %p136, %p137
    %p139 = scmp.ne.s32.totalorder %s131, %s133
    %p140 = scmp.eq.s32.totalorder %s18, 1
    %p141 = por %p139, %p140
    %p142 = scmp.ne.s32.totalorder %s133, %s134
    %p143 = scmp.eq.s32.totalorder %s18, 0
    %p144 = por %p142, %p143
    %p145 = scmp.ne.s32.totalorder %s133, %s134
    %p146 = scmp.eq.s32.totalorder %s19, 1
    %p147 = por %p145, %p146
    %p149 = scmp.ne.s32.totalorder %s134, %s148
    %p150 = scmp.eq.s32.totalorder %s19, 0
    %p151 = por %p149, %p150
    %s153 = sadd.s32 %s152, 1
    %p156 = scmp.eq.s32.totalorder %s13, 1
    %p157 = scmp.ne.s32.totalorder %s152, %s154
    %p158 = scmp.eq.s32.totalorder %s13, 0
    %p159 = por %p157, %p158
    %p160 = scmp.ne.s32.totalorder %s152, %s154
    %p161 = scmp.eq.s32.totalorder %s18, 1
    %p162 = por %p160, %p161
    %p163 = scmp.ne.s32.totalorder %s154, %s155
    %p164 = scmp.eq.s32.totalorder %s18, 0
    %p165 = por %p163, %p164
    %p166 = scmp.ne.s32.totalorder %s154, %s155
    %p167 = scmp.eq.s32.totalorder %s19, 1
    %p168 = por %p166, %p167
    %p170 = scmp.ne.s32.totalorder %s155, %s169
    %p171 = scmp.eq.s32.totalorder %s19, 0
    %p172 = por %p170, %p171
    %s173 = ssub.s32 %s13, %s20
    %p174 = scmp.eq.s32.totalorder %s173, 0
    %s176 = sadd.s32 %s175, 1
    %s177 = scalar_select %p174, %s175, %s176
    %p180 = pneg %p174
    %p181 = scmp.eq.s32.totalorder %s13, 1
    %p182 = por %p180, %p181
    %p183 = scmp.ne.s32.totalorder %s175, %s178
    %p184 = scmp.eq.s32.totalorder %s13, 0
    %p185 = por %p183, %p184
    %p186 = scmp.ne.s32.totalorder %s175, %s178
    %p187 = scmp.eq.s32.totalorder %s18, 1
    %p188 = por %p186, %p187
    %p189 = scmp.ne.s32.totalorder %s178, %s179
    %p190 = scmp.eq.s32.totalorder %s18, 0
    %p191 = por %p189, %p190
    %p192 = scmp.ne.s32.totalorder %s178, %s179
    %p193 = scmp.eq.s32.totalorder %s19, 1
    %p194 = por %p192, %p193
    %p196 = scmp.ne.s32.totalorder %s179, %s195
    %p197 = scmp.eq.s32.totalorder %s19, 0
    %p198 = por %p196, %p197
    %p199 = scmp.le.s32.totalorder 1, %s13
    %p200 = scmp.lt.s32.totalorder %s13, 3
    %p201 = pnand %p199, %p200
    %p202 = pneg %p201
    // Predicated region
    $region9: #{tpu_custom_call.1} parent=5 // pred_check
      _
    $region10: #{tpu_custom_call.1} parent=5 // pred_check_branch
      %204 = sbr.rel (%p201) target = $region12
    $region11: #{tpu_custom_call.1} parent=5 // pred_region
      %s205 = ssub.s32 %s13, 1
      // Predicated region
      $region13: #{tpu_custom_call.1} parent=11 // pred_check
        %p206 = pneg %p60
      $region14: #{tpu_custom_call.1} parent=11 // pred_check_branch
        %208 = sbr.rel (%p206) target = $region16
      $region15: #{tpu_custom_call.1} parent=11 // pred_region
        _
      $region16: #{tpu_custom_call.1} parent=11 // pred_fallthru
        _
      // Predicated region
      $region17: #{tpu_custom_call.1} parent=11 // pred_check
        %p209 = pneg %p81
      $region18: #{tpu_custom_call.1} parent=11 // pred_check_branch
        %211 = sbr.rel (%p209) target = $region20
      $region19: #{tpu_custom_call.1} parent=11 // pred_region
        _
      $region20: #{tpu_custom_call.1} parent=11 // pred_fallthru
        _
      // Predicated region
      $region21: #{tpu_custom_call.1} parent=11 // pred_check
        %p212 = pneg %p102
      $region22: #{tpu_custom_call.1} parent=11 // pred_check_branch
        %214 = sbr.rel (%p212) target = $region24
      $region23: #{tpu_custom_call.1} parent=11 // pred_region
        _
      $region24: #{tpu_custom_call.1} parent=11 // pred_fallthru
        _
      // Predicated region
      $region25: #{tpu_custom_call.1} parent=11 // pred_check
        %p215 = pneg %p123
      $region26: #{tpu_custom_call.1} parent=11 // pred_check_branch
        %217 = sbr.rel (%p215) target = $region28
      $region27: #{tpu_custom_call.1} parent=11 // pred_region
        _
      $region28: #{tpu_custom_call.1} parent=11 // pred_fallthru
        _
      // Predicated region
      $region29: #{tpu_custom_call.1} parent=11 // pred_check
        %p218 = pneg %p144
      $region30: #{tpu_custom_call.1} parent=11 // pred_check_branch
        %220 = sbr.rel (%p218) target = $region32
      $region31: #{tpu_custom_call.1} parent=11 // pred_region
        _
      $region32: #{tpu_custom_call.1} parent=11 // pred_fallthru
        _
      // Predicated region
      $region33: #{tpu_custom_call.1} parent=11 // pred_check
        %p221 = pneg %p165
      $region34: #{tpu_custom_call.1} parent=11 // pred_check_branch
        %223 = sbr.rel (%p221) target = $region36
      $region35: #{tpu_custom_call.1} parent=11 // pred_region
        _
      $region36: #{tpu_custom_call.1} parent=11 // pred_fallthru
        _
    $region12: #{tpu_custom_call.1} parent=5 // pred_fallthru
      _
    %p224 = scmp.lt.s32.totalorder %s13, 2
    // Predicated region
    $region37: #{tpu_custom_call.1} parent=5 // pred_check
      %p225 = pneg %p224
    $region38: #{tpu_custom_call.1} parent=5 // pred_check_branch
      %227 = sbr.rel (%p225) target = $region40
    $region39: #{tpu_custom_call.1} parent=5 // pred_region
      // Predicated region
      $region41: #{tpu_custom_call.1} parent=39 // pred_check
        %p228 = pneg %p33
      $region42: #{tpu_custom_call.1} parent=39 // pred_check_branch
        %230 = sbr.rel (%p228) target = $region44
      $region43: #{tpu_custom_call.1} parent=39 // pred_region
        %p231 = scmp.lt.s32.totalorder %s13, 1
        %s232 = scalar_select %p231, %s13, 1
        %s233 = smul.addr %s232, 32
        %s234 = smul.addr %s233, 8
        %s235 = scalar_lea.vmem %s0, %s234
      $region44: #{tpu_custom_call.1} parent=39 // pred_fallthru
        _
    $region40: #{tpu_custom_call.1} parent=5 // pred_fallthru
      _
    %p236 = scmp.le.s32.totalorder 1, %s13
    %p237 = scmp.lt.s32.totalorder %s13, 3
    %p238 = pnand %p236, %p237
    %p239 = pneg %p238
    // Predicated region
    $region45: #{tpu_custom_call.1} parent=5 // pred_check
      _
    $region46: #{tpu_custom_call.1} parent=5 // pred_check_branch
      %241 = sbr.rel (%p238) target = $region48
    $region47: #{tpu_custom_call.1} parent=5 // pred_region
      %s242 = ssub.s32 %s13, 1
      %p243 = scmp.lt.s32.totalorder %s18, 1
      %s244 = scalar_select %p243, %s18, 1
      %s245 = smul.addr %s244, 32
      %s246 = smul.addr %s245, 8
      %s247 = scalar_lea.vmem %s0, %s246
      %p248 = pneg %p39
      %p249 = pneg %p36
      %p250 = pneg %p60
      %p251 = pneg %p57
      %p252 = pneg %p81
      %p253 = pneg %p78
      %p254 = pneg %p102
      %p255 = pneg %p99
      %p256 = pneg %p123
      %p257 = pneg %p120
      %p258 = pneg %p144
      %p259 = pneg %p141
      %p260 = pneg %p165
      %p261 = pneg %p162
      %p262 = pneg %p191
      %p263 = pneg %p188
      %p264 = scmp.lt.s32.totalorder %s18, 1
      %s265 = scalar_select %p264, %s18, 1
      %s266 = smul.addr %s265, 32
      %s267 = smul.addr %s266, 8
      %s268 = scalar_lea.vmem %s7, %s267
      %p269 = scmp.lt.s32.totalorder %s18, 1
      %s270 = scalar_select %p269, %s18, 1
      %s271 = smul.addr %s270, 32
      %s272 = smul.addr %s271, 8
      %s273 = scalar_lea.vmem %s0, %s272
      %p274 = scmp.lt.s32.totalorder %s18, 1
      %s275 = scalar_select %p274, %s18, 1
      %s276 = smul.addr %s275, 32
      %s277 = smul.addr %s276, 8
      %s278 = scalar_lea.vmem %s7, %s277
      %vm279 = vcmask 31744
      %280 = vst.msk [vmem:[#allocation2] sm:$0xff] %vm279, 0.0
      %281 = vst.msk [vmem:[#allocation2 + $0x8] sm:$0xff] %vm279, 0.0
      %vm282 = vcmask 25600
      %283 = vst.msk [vmem:[#allocation2 + $0x10] sm:$0x3] %vm282, 0.0
      %s284 = scalar_lea.vmem [#allocation2], 408
      %285 = vst.msk [vmem:[%s284] sm:$0xff] %vm279, 0.0
      %286 = vst.msk [vmem:[%s284 + $0x8] sm:$0xff] %vm279, 0.0
      %287 = vst.msk [vmem:[%s284 + $0x10] sm:$0x3] %vm282, 0.0
      %vm288 = vcmask 24576
      %289 = vst.msk [vmem:[#allocation2] sm:$0x1] %vm288, 0.0
      %290 = vst.msk [vmem:[#allocation2 + $0x18] sm:$0x1] %vm288, 0.0
      %291 = vst.msk [vmem:[#allocation2 + $0x30] sm:$0x1] %vm288, 0.0
      %292 = vst.msk [vmem:[#allocation2 + $0x48] sm:$0x1] %vm288, 0.0
      %293 = vst.msk [vmem:[#allocation2 + $0x60] sm:$0x1] %vm288, 0.0
      %294 = vst.msk [vmem:[#allocation2 + $0x78] sm:$0x1] %vm288, 0.0
      %295 = vst.msk [vmem:[#allocation2 + $0x90] sm:$0x1] %vm288, 0.0
      %296 = vst.msk [vmem:[#allocation2 + $0xa8] sm:$0x1] %vm288, 0.0
      %297 = vst.msk [vmem:[#allocation2 + $0xc0] sm:$0x1] %vm288, 0.0
      %298 = vst.msk [vmem:[#allocation2 + $0xd8] sm:$0x1] %vm288, 0.0
      %299 = vst.msk [vmem:[#allocation2 + $0xf0] sm:$0x1] %vm288, 0.0
      %300 = vst.msk [vmem:[#allocation2 + $0x108] sm:$0x1] %vm288, 0.0
      %301 = vst.msk [vmem:[#allocation2 + $0x120] sm:$0x1] %vm288, 0.0
      %302 = vst.msk [vmem:[#allocation2 + $0x138] sm:$0x1] %vm288, 0.0
      %303 = vst.msk [vmem:[#allocation2 + $0x150] sm:$0x1] %vm288, 0.0
      %304 = vst.msk [vmem:[#allocation2 + $0x168] sm:$0x1] %vm288, 0.0
      %305 = vst.msk [vmem:[#allocation2 + $0x180] sm:$0x1] %vm288, 0.0
      %306 = vst.msk [vmem:[#allocation2 + $0x198] sm:$0x1] %vm288, 0.0
      %307 = vst.msk [vmem:[#allocation2 + $0x11] sm:$0x1] %vm288, 0.0
      %308 = vst.msk [vmem:[#allocation2 + $0x29] sm:$0x1] %vm288, 0.0
      %309 = vst.msk [vmem:[#allocation2 + $0x41] sm:$0x1] %vm288, 0.0
      %310 = vst.msk [vmem:[#allocation2 + $0x59] sm:$0x1] %vm288, 0.0
      %311 = vst.msk [vmem:[#allocation2 + $0x71] sm:$0x1] %vm288, 0.0
      %312 = vst.msk [vmem:[#allocation2 + $0x89] sm:$0x1] %vm288, 0.0
      %313 = vst.msk [vmem:[#allocation2 + $0xa1] sm:$0x1] %vm288, 0.0
      %314 = vst.msk [vmem:[#allocation2 + $0xb9] sm:$0x1] %vm288, 0.0
      %315 = vst.msk [vmem:[#allocation2 + $0xd1] sm:$0x1] %vm288, 0.0
      %316 = vst.msk [vmem:[#allocation2 + $0xe9] sm:$0x1] %vm288, 0.0
      %317 = vst.msk [vmem:[#allocation2 + $0x101] sm:$0x1] %vm288, 0.0
      %318 = vst.msk [vmem:[#allocation2 + $0x119] sm:$0x1] %vm288, 0.0
      %319 = vst.msk [vmem:[#allocation2 + $0x131] sm:$0x1] %vm288, 0.0
      %320 = vst.msk [vmem:[#allocation2 + $0x149] sm:$0x1] %vm288, 0.0
      %321 = vst.msk [vmem:[#allocation2 + $0x161] sm:$0x1] %vm288, 0.0
      %322 = vst.msk [vmem:[#allocation2 + $0x179] sm:$0x1] %vm288, 0.0
      %323 = vst.msk [vmem:[#allocation2 + $0x191] sm:$0x1] %vm288, 0.0
      %324 = vst.msk [vmem:[#allocation2 + $0x1a9] sm:$0x1] %vm288, 0.0
      %v325 = vld [vmem:[%s273] sm:$0xff]
      %v326 = vld [vmem:[%s273 + $0x8] sm:$0xff]
      %v327 = vld [vmem:[%s273 + $0x10] sm:$0xff]
      %v328 = vld [vmem:[%s273 + $0x18] sm:$0xff]
      %v329 = vld [vmem:[%s273 + $0x20] sm:$0xff]
      %v330 = vld [vmem:[%s273 + $0x28] sm:$0xff]
      %v331 = vld [vmem:[%s273 + $0x30] sm:$0xff]
      %v332 = vld [vmem:[%s273 + $0x38] sm:$0xff]
      %v333 = vld [vmem:[%s273 + $0x40] sm:$0xff]
      %v334 = vld [vmem:[%s273 + $0x48] sm:$0xff]
      %v335 = vld [vmem:[%s273 + $0x50] sm:$0xff]
      %v336 = vld [vmem:[%s273 + $0x58] sm:$0xff]
      %v337 = vld [vmem:[%s273 + $0x60] sm:$0xff]
      %v338 = vld [vmem:[%s273 + $0x68] sm:$0xff]
      %v339 = vld [vmem:[%s273 + $0x70] sm:$0xff]
      %v340 = vld [vmem:[%s273 + $0x78] sm:$0xff]
      %v341 = vld [vmem:[%s273 + $0x80] sm:$0xff]
      %v342 = vld [vmem:[%s273 + $0x88] sm:$0xff]
      %v343 = vld [vmem:[%s273 + $0x90] sm:$0xff]
      %v344 = vld [vmem:[%s273 + $0x98] sm:$0xff]
      %v345 = vld [vmem:[%s273 + $0xa0] sm:$0xff]
      %v346 = vld [vmem:[%s273 + $0xa8] sm:$0xff]
      %v347 = vld [vmem:[%s273 + $0xb0] sm:$0xff]
      %v348 = vld [vmem:[%s273 + $0xb8] sm:$0xff]
      %v349 = vld [vmem:[%s273 + $0xc0] sm:$0xff]
      %v350 = vld [vmem:[%s273 + $0xc8] sm:$0xff]
      %v351 = vld [vmem:[%s273 + $0xd0] sm:$0xff]
      %v352 = vld [vmem:[%s273 + $0xd8] sm:$0xff]
      %v353 = vld [vmem:[%s273 + $0xe0] sm:$0xff]
      %v354 = vld [vmem:[%s273 + $0xe8] sm:$0xff]
      %v355 = vld [vmem:[%s273 + $0xf0] sm:$0xff]
      %v356 = vld [vmem:[%s273 + $0xf8] sm:$0xff]
      %s357 = scalar_lea.vmem [#allocation2], 24
      %358 = vst.msk [vmem:[%s357 + $0x1] sm:$0xff] %vm279, %v325
      %359 = vst.msk [vmem:[%s357 + $0x9] sm:$0xff] %vm279, %v326
      %360 = vst.msk [vmem:[%s357 + $0x19] sm:$0xff] %vm279, %v327
      %361 = vst.msk [vmem:[%s357 + $0x21] sm:$0xff] %vm279, %v328
      %362 = vst.msk [vmem:[%s357 + $0x31] sm:$0xff] %vm279, %v329
      %363 = vst.msk [vmem:[%s357 + $0x39] sm:$0xff] %vm279, %v330
      %364 = vst.msk [vmem:[%s357 + $0x49] sm:$0xff] %vm279, %v331
      %365 = vst.msk [vmem:[%s357 + $0x51] sm:$0xff] %vm279, %v332
      %366 = vst.msk [vmem:[%s357 + $0x61] sm:$0xff] %vm279, %v333
      %367 = vst.msk [vmem:[%s357 + $0x69] sm:$0xff] %vm279, %v334
      %368 = vst.msk [vmem:[%s357 + $0x79] sm:$0xff] %vm279, %v335
      %369 = vst.msk [vmem:[%s357 + $0x81] sm:$0xff] %vm279, %v336
      %370 = vst.msk [vmem:[%s357 + $0x91] sm:$0xff] %vm279, %v337
      %371 = vst.msk [vmem:[%s357 + $0x99] sm:$0xff] %vm279, %v338
      %372 = vst.msk [vmem:[%s357 + $0xa9] sm:$0xff] %vm279, %v339
      %373 = vst.msk [vmem:[%s357 + $0xb1] sm:$0xff] %vm279, %v340
      %374 = vst.msk [vmem:[%s357 + $0xc1] sm:$0xff] %vm279, %v341
      %375 = vst.msk [vmem:[%s357 + $0xc9] sm:$0xff] %vm279, %v342
      %376 = vst.msk [vmem:[%s357 + $0xd9] sm:$0xff] %vm279, %v343
      %377 = vst.msk [vmem:[%s357 + $0xe1] sm:$0xff] %vm279, %v344
      %378 = vst.msk [vmem:[%s357 + $0xf1] sm:$0xff] %vm279, %v345
      %379 = vst.msk [vmem:[%s357 + $0xf9] sm:$0xff] %vm279, %v346
      %380 = vst.msk [vmem:[%s357 + $0x109] sm:$0xff] %vm279, %v347
      %381 = vst.msk [vmem:[%s357 + $0x111] sm:$0xff] %vm279, %v348
      %382 = vst.msk [vmem:[%s357 + $0x121] sm:$0xff] %vm279, %v349
      %383 = vst.msk [vmem:[%s357 + $0x129] sm:$0xff] %vm279, %v350
      %384 = vst.msk [vmem:[%s357 + $0x139] sm:$0xff] %vm279, %v351
      %385 = vst.msk [vmem:[%s357 + $0x141] sm:$0xff] %vm279, %v352
      %386 = vst.msk [vmem:[%s357 + $0x151] sm:$0xff] %vm279, %v353
      %387 = vst.msk [vmem:[%s357 + $0x159] sm:$0xff] %vm279, %v354
      %388 = vst.msk [vmem:[%s357 + $0x169] sm:$0xff] %vm279, %v355
      %389 = vst.msk [vmem:[%s357 + $0x171] sm:$0xff] %vm279, %v356
      %v390 = vld [vmem:[#allocation2] sm:$0xff]
      %v391 = vld [vmem:[#allocation2 + $0x8] sm:$0xff]
      %v392 = vld [vmem:[#allocation2 + $0x10] sm:$0x3]
      %v393 = vld [vmem:[#allocation2 + $0x18] sm:$0xff]
      %v394 = vld [vmem:[#allocation2 + $0x20] sm:$0xff]
      %v395 = vld [vmem:[#allocation2 + $0x28] sm:$0x3]
      %v396 = vld [vmem:[#allocation2 + $0x30] sm:$0xff]
      %v397 = vld [vmem:[#allocation2 + $0x38] sm:$0xff]
      %v398 = vld [vmem:[#allocation2 + $0x40] sm:$0x3]
      %v399 = vld [vmem:[#allocation2 + $0x48] sm:$0xff]
      %v400 = vld [vmem:[#allocation2 + $0x50] sm:$0xff]
      %v401 = vld [vmem:[#allocation2 + $0x58] sm:$0x3]
      %v402 = vld [vmem:[#allocation2 + $0x60] sm:$0xff]
      %v403 = vld [vmem:[#allocation2 + $0x68] sm:$0xff]
      %v404 = vld [vmem:[#allocation2 + $0x70] sm:$0x3]
      %v405 = vld [vmem:[#allocation2 + $0x78] sm:$0xff]
      %v406 = vld [vmem:[#allocation2 + $0x80] sm:$0xff]
      %v407 = vld [vmem:[#allocation2 + $0x88] sm:$0x3]
      %v408 = vld [vmem:[#allocation2 + $0x90] sm:$0xff]
      %v409 = vld [vmem:[#allocation2 + $0x98] sm:$0xff]
      %v410 = vld [vmem:[#allocation2 + $0xa0] sm:$0x3]
      %v411 = vld [vmem:[#allocation2 + $0xa8] sm:$0xff]
      %v412 = vld [vmem:[#allocation2 + $0xb0] sm:$0xff]
      %v413 = vld [vmem:[#allocation2 + $0xb8] sm:$0x3]
      %v414 = vld [vmem:[#allocation2 + $0xc0] sm:$0xff]
      %v415 = vld [vmem:[#allocation2 + $0xc8] sm:$0xff]
      %v416 = vld [vmem:[#allocation2 + $0xd0] sm:$0x3]
      %v417 = vld [vmem:[#allocation2 + $0xd8] sm:$0xff]
      %v418 = vld [vmem:[#allocation2 + $0xe0] sm:$0xff]
      %v419 = vld [vmem:[#allocation2 + $0xe8] sm:$0x3]
      %v420 = vld [vmem:[#allocation2 + $0xf0] sm:$0xff]
      %v421 = vld [vmem:[#allocation2 + $0xf8] sm:$0xff]
      %v422 = vld [vmem:[#allocation2 + $0x100] sm:$0x3]
      %v423 = vld [vmem:[#allocation2 + $0x108] sm:$0xff]
      %v424 = vld [vmem:[#allocation2 + $0x110] sm:$0xff]
      %v425 = vld [vmem:[#allocation2 + $0x118] sm:$0x3]
      %v426 = vld [vmem:[#allocation2 + $0x120] sm:$0xff]
      %v427 = vld [vmem:[#allocation2 + $0x128] sm:$0xff]
      %v428 = vld [vmem:[#allocation2 + $0x130] sm:$0x3]
      %v429 = vld [vmem:[#allocation2 + $0x138] sm:$0xff]
      %v430 = vld [vmem:[#allocation2 + $0x140] sm:$0xff]
      %v431 = vld [vmem:[#allocation2 + $0x148] sm:$0x3]
      %v432 = vld [vmem:[#allocation2 + $0x150] sm:$0xff]
      %v433 = vld [vmem:[#allocation2 + $0x158] sm:$0xff]
      %v434 = vld [vmem:[#allocation2 + $0x160] sm:$0x3]
      %v435 = vld [vmem:[#allocation2 + $0x168] sm:$0xff]
      %v436 = vld [vmem:[#allocation2 + $0x170] sm:$0xff]
      %v437 = vld [vmem:[#allocation2 + $0x178] sm:$0x3]
      %v438 = vld [vmem:[#allocation2 + $0x180] sm:$0xff]
      %v439 = vld [vmem:[#allocation2 + $0x188] sm:$0xff]
      %v440 = vld [vmem:[#allocation2 + $0x190] sm:$0x3]
      %v441 = vld [vmem:[#allocation2 + $0x198] sm:$0xff]
      %v442 = vld [vmem:[#allocation2 + $0x1a0] sm:$0xff]
      %v443 = vld [vmem:[#allocation2 + $0x1a8] sm:$0x3]
      %vm498 = vcmask 1046528
      %v499 = vrot.slane %v390, 1
      %v500 = vrot.slane %v391, 1
      %v501 = vsel %vm498, %v499, %v500
      %v502 = vrot.slane %v392, 1
      %v503 = vsel %vm498, %v500, %v502
      %v504 = vrot.slane %v393, 1
      %v505 = vrot.slane %v394, 1
      %v506 = vsel %vm498, %v504, %v505
      %v507 = vrot.slane %v395, 1
      %v508 = vsel %vm498, %v505, %v507
      %v509 = vrot.slane %v396, 1
      %v510 = vrot.slane %v397, 1
      %v511 = vsel %vm498, %v509, %v510
      %v512 = vrot.slane %v398, 1
      %v513 = vsel %vm498, %v510, %v512
      %v514 = vrot.slane %v399, 1
      %v515 = vrot.slane %v400, 1
      %v516 = vsel %vm498, %v514, %v515
      %v517 = vrot.slane %v401, 1
      %v518 = vsel %vm498, %v515, %v517
      %v519 = vrot.slane %v402, 1
      %v520 = vrot.slane %v403, 1
      %v521 = vsel %vm498, %v519, %v520
      %v522 = vrot.slane %v404, 1
      %v523 = vsel %vm498, %v520, %v522
      %v524 = vrot.slane %v405, 1
      %v525 = vrot.slane %v406, 1
      %v526 = vsel %vm498, %v524, %v525
      %v527 = vrot.slane %v407, 1
      %v528 = vsel %vm498, %v525, %v527
      %v529 = vrot.slane %v408, 1
      %v530 = vrot.slane %v409, 1
      %v531 = vsel %vm498, %v529, %v530
      %v532 = vrot.slane %v410, 1
      %v533 = vsel %vm498, %v530, %v532
      %v534 = vrot.slane %v411, 1
      %v535 = vrot.slane %v412, 1
      %v536 = vsel %vm498, %v534, %v535
      %v537 = vrot.slane %v413, 1
      %v538 = vsel %vm498, %v535, %v537
      %v539 = vrot.slane %v414, 1
      %v540 = vrot.slane %v415, 1
      %v541 = vsel %vm498, %v539, %v540
      %v542 = vrot.slane %v416, 1
      %v543 = vsel %vm498, %v540, %v542
      %v544 = vrot.slane %v417, 1
      %v545 = vrot.slane %v418, 1
      %v546 = vsel %vm498, %v544, %v545
      %v547 = vrot.slane %v419, 1
      %v548 = vsel %vm498, %v545, %v547
      %v549 = vrot.slane %v420, 1
      %v550 = vrot.slane %v421, 1
      %v551 = vsel %vm498, %v549, %v550
      %v552 = vrot.slane %v422, 1
      %v553 = vsel %vm498, %v550, %v552
      %v554 = vrot.slane %v423, 1
      %v555 = vrot.slane %v424, 1
      %v556 = vsel %vm498, %v554, %v555
      %v557 = vrot.slane %v425, 1
      %v558 = vsel %vm498, %v555, %v557
      %v559 = vrot.slane %v426, 1
      %v560 = vrot.slane %v427, 1
      %v561 = vsel %vm498, %v559, %v560
      %v562 = vrot.slane %v428, 1
      %v563 = vsel %vm498, %v560, %v562
      %v564 = vrot.slane %v429, 1
      %v565 = vrot.slane %v430, 1
      %v566 = vsel %vm498, %v564, %v565
      %v567 = vrot.slane %v431, 1
      %v568 = vsel %vm498, %v565, %v567
      %v569 = vrot.slane %v432, 1
      %v570 = vrot.slane %v433, 1
      %v571 = vsel %vm498, %v569, %v570
      %v572 = vrot.slane %v434, 1
      %v573 = vsel %vm498, %v570, %v572
      %v574 = vrot.slane %v435, 1
      %v575 = vrot.slane %v436, 1
      %v576 = vsel %vm498, %v574, %v575
      %v577 = vrot.slane %v437, 1
      %v578 = vsel %vm498, %v575, %v577
      %v579 = vrot.slane %v438, 1
      %v580 = vrot.slane %v439, 1
      %v581 = vsel %vm498, %v579, %v580
      %v582 = vrot.slane %v440, 1
      %v583 = vsel %vm498, %v580, %v582
      %v584 = vrot.slane %v441, 1
      %v585 = vrot.slane %v442, 1
      %v586 = vsel %vm498, %v584, %v585
      %v587 = vrot.slane %v443, 1
      %v588 = vsel %vm498, %v585, %v587
      %589 = vrot.lane.b32.xlu0 %v501, 4
      %v590 = vpop.permute.xlu0 %589
      %591 = vrot.lane.b32.xlu0 %v503, 4
      %v592 = vpop.permute.xlu0 %591
      %593 = vrot.lane.b32.xlu0 %v506, 4
      %v594 = vpop.permute.xlu0 %593
      %595 = vrot.lane.b32.xlu0 %v508, 4
      %v596 = vpop.permute.xlu0 %595
      %597 = vrot.lane.b32.xlu0 %v511, 4
      %v598 = vpop.permute.xlu0 %597
      %599 = vrot.lane.b32.xlu0 %v513, 4
      %v600 = vpop.permute.xlu0 %599
      %601 = vrot.lane.b32.xlu0 %v516, 4
      %v602 = vpop.permute.xlu0 %601
      %603 = vrot.lane.b32.xlu0 %v518, 4
      %v604 = vpop.permute.xlu0 %603
      %605 = vrot.lane.b32.xlu0 %v521, 4
      %v606 = vpop.permute.xlu0 %605
      %607 = vrot.lane.b32.xlu0 %v523, 4
      %v608 = vpop.permute.xlu0 %607
      %609 = vrot.lane.b32.xlu0 %v526, 4
      %v610 = vpop.permute.xlu0 %609
      %611 = vrot.lane.b32.xlu0 %v528, 4
      %v612 = vpop.permute.xlu0 %611
      %613 = vrot.lane.b32.xlu0 %v531, 4
      %v614 = vpop.permute.xlu0 %613
      %615 = vrot.lane.b32.xlu0 %v533, 4
      %v616 = vpop.permute.xlu0 %615
      %617 = vrot.lane.b32.xlu0 %v536, 4
      %v618 = vpop.permute.xlu0 %617
      %619 = vrot.lane.b32.xlu0 %v538, 4
      %v620 = vpop.permute.xlu0 %619
      %621 = vrot.lane.b32.xlu0 %v541, 4
      %v622 = vpop.permute.xlu0 %621
      %623 = vrot.lane.b32.xlu0 %v543, 4
      %v624 = vpop.permute.xlu0 %623
      %625 = vrot.lane.b32.xlu0 %v546, 4
      %v626 = vpop.permute.xlu0 %625
      %627 = vrot.lane.b32.xlu0 %v548, 4
      %v628 = vpop.permute.xlu0 %627
      %629 = vrot.lane.b32.xlu0 %v551, 4
      %v630 = vpop.permute.xlu0 %629
      %631 = vrot.lane.b32.xlu0 %v553, 4
      %v632 = vpop.permute.xlu0 %631
      %633 = vrot.lane.b32.xlu0 %v556, 4
      %v634 = vpop.permute.xlu0 %633
      %635 = vrot.lane.b32.xlu0 %v558, 4
      %v636 = vpop.permute.xlu0 %635
      %637 = vrot.lane.b32.xlu0 %v561, 4
      %v638 = vpop.permute.xlu0 %637
      %639 = vrot.lane.b32.xlu0 %v563, 4
      %v640 = vpop.permute.xlu0 %639
      %641 = vrot.lane.b32.xlu0 %v566, 4
      %v642 = vpop.permute.xlu0 %641
      %643 = vrot.lane.b32.xlu0 %v568, 4
      %v644 = vpop.permute.xlu0 %643
      %645 = vrot.lane.b32.xlu0 %v571, 4
      %v646 = vpop.permute.xlu0 %645
      %647 = vrot.lane.b32.xlu0 %v573, 4
      %v648 = vpop.permute.xlu0 %647
      %649 = vrot.lane.b32.xlu0 %v576, 4
      %v650 = vpop.permute.xlu0 %649
      %651 = vrot.lane.b32.xlu0 %v578, 4
      %v652 = vpop.permute.xlu0 %651
      %653 = vrot.lane.b32.xlu0 %v581, 4
      %v654 = vpop.permute.xlu0 %653
      %655 = vrot.lane.b32.xlu0 %v583, 4
      %v656 = vpop.permute.xlu0 %655
      %657 = vrot.lane.b32.xlu0 %v586, 4
      %v658 = vpop.permute.xlu0 %657
      %659 = vrot.lane.b32.xlu0 %v588, 4
      %v660 = vpop.permute.xlu0 %659
      %vm697 = vcmask 1045504
      %v698 = vrot.slane %v390, 2
      %v699 = vrot.slane %v391, 2
      %v700 = vsel %vm697, %v698, %v699
      %v701 = vrot.slane %v392, 2
      %v702 = vsel %vm697, %v699, %v701
      %v703 = vrot.slane %v393, 2
      %v704 = vrot.slane %v394, 2
      %v705 = vsel %vm697, %v703, %v704
      %v706 = vrot.slane %v395, 2
      %v707 = vsel %vm697, %v704, %v706
      %v708 = vrot.slane %v396, 2
      %v709 = vrot.slane %v397, 2
      %v710 = vsel %vm697, %v708, %v709
      %v711 = vrot.slane %v398, 2
      %v712 = vsel %vm697, %v709, %v711
      %v713 = vrot.slane %v399, 2
      %v714 = vrot.slane %v400, 2
      %v715 = vsel %vm697, %v713, %v714
      %v716 = vrot.slane %v401, 2
      %v717 = vsel %vm697, %v714, %v716
      %v718 = vrot.slane %v402, 2
      %v719 = vrot.slane %v403, 2
      %v720 = vsel %vm697, %v718, %v719
      %v721 = vrot.slane %v404, 2
      %v722 = vsel %vm697, %v719, %v721
      %v723 = vrot.slane %v405, 2
      %v724 = vrot.slane %v406, 2
      %v725 = vsel %vm697, %v723, %v724
      %v726 = vrot.slane %v407, 2
      %v727 = vsel %vm697, %v724, %v726
      %v728 = vrot.slane %v408, 2
      %v729 = vrot.slane %v409, 2
      %v730 = vsel %vm697, %v728, %v729
      %v731 = vrot.slane %v410, 2
      %v732 = vsel %vm697, %v729, %v731
      %v733 = vrot.slane %v411, 2
      %v734 = vrot.slane %v412, 2
      %v735 = vsel %vm697, %v733, %v734
      %v736 = vrot.slane %v413, 2
      %v737 = vsel %vm697, %v734, %v736
      %v738 = vrot.slane %v414, 2
      %v739 = vrot.slane %v415, 2
      %v740 = vsel %vm697, %v738, %v739
      %v741 = vrot.slane %v416, 2
      %v742 = vsel %vm697, %v739, %v741
      %v743 = vrot.slane %v417, 2
      %v744 = vrot.slane %v418, 2
      %v745 = vsel %vm697, %v743, %v744
      %v746 = vrot.slane %v419, 2
      %v747 = vsel %vm697, %v744, %v746
      %v748 = vrot.slane %v420, 2
      %v749 = vrot.slane %v421, 2
      %v750 = vsel %vm697, %v748, %v749
      %v751 = vrot.slane %v422, 2
      %v752 = vsel %vm697, %v749, %v751
      %v753 = vrot.slane %v423, 2
      %v754 = vrot.slane %v424, 2
      %v755 = vsel %vm697, %v753, %v754
      %v756 = vrot.slane %v425, 2
      %v757 = vsel %vm697, %v754, %v756
      %v758 = vrot.slane %v426, 2
      %v759 = vrot.slane %v427, 2
      %v760 = vsel %vm697, %v758, %v759
      %v761 = vrot.slane %v428, 2
      %v762 = vsel %vm697, %v759, %v761
      %v763 = vrot.slane %v429, 2
      %v764 = vrot.slane %v430, 2
      %v765 = vsel %vm697, %v763, %v764
      %v766 = vrot.slane %v431, 2
      %v767 = vsel %vm697, %v764, %v766
      %v768 = vrot.slane %v432, 2
      %v769 = vrot.slane %v433, 2
      %v770 = vsel %vm697, %v768, %v769
      %v771 = vrot.slane %v434, 2
      %v772 = vsel %vm697, %v769, %v771
      %v773 = vrot.slane %v435, 2
      %v774 = vrot.slane %v436, 2
      %v775 = vsel %vm697, %v773, %v774
      %v776 = vrot.slane %v437, 2
      %v777 = vsel %vm697, %v774, %v776
      %v778 = vrot.slane %v438, 2
      %v779 = vrot.slane %v439, 2
      %v780 = vsel %vm697, %v778, %v779
      %v781 = vrot.slane %v440, 2
      %v782 = vsel %vm697, %v779, %v781
      %v783 = vrot.slane %v441, 2
      %v784 = vrot.slane %v442, 2
      %v785 = vsel %vm697, %v783, %v784
      %v786 = vrot.slane %v443, 2
      %v787 = vsel %vm697, %v784, %v786
      %788 = vrot.lane.b32.xlu0 %v700, 8
      %v789 = vpop.permute.xlu0 %788
      %790 = vrot.lane.b32.xlu0 %v702, 8
      %v791 = vpop.permute.xlu0 %790
      %792 = vrot.lane.b32.xlu0 %v705, 8
      %v793 = vpop.permute.xlu0 %792
      %794 = vrot.lane.b32.xlu0 %v707, 8
      %v795 = vpop.permute.xlu0 %794
      %796 = vrot.lane.b32.xlu0 %v710, 8
      %v797 = vpop.permute.xlu0 %796
      %798 = vrot.lane.b32.xlu0 %v712, 8
      %v799 = vpop.permute.xlu0 %798
      %800 = vrot.lane.b32.xlu0 %v715, 8
      %v801 = vpop.permute.xlu0 %800
      %802 = vrot.lane.b32.xlu0 %v717, 8
      %v803 = vpop.permute.xlu0 %802
      %804 = vrot.lane.b32.xlu0 %v720, 8
      %v805 = vpop.permute.xlu0 %804
      %806 = vrot.lane.b32.xlu0 %v722, 8
      %v807 = vpop.permute.xlu0 %806
      %808 = vrot.lane.b32.xlu0 %v725, 8
      %v809 = vpop.permute.xlu0 %808
      %810 = vrot.lane.b32.xlu0 %v727, 8
      %v811 = vpop.permute.xlu0 %810
      %812 = vrot.lane.b32.xlu0 %v730, 8
      %v813 = vpop.permute.xlu0 %812
      %814 = vrot.lane.b32.xlu0 %v732, 8
      %v815 = vpop.permute.xlu0 %814
      %816 = vrot.lane.b32.xlu0 %v735, 8
      %v817 = vpop.permute.xlu0 %816
      %818 = vrot.lane.b32.xlu0 %v737, 8
      %v819 = vpop.permute.xlu0 %818
      %820 = vrot.lane.b32.xlu0 %v740, 8
      %v821 = vpop.permute.xlu0 %820
      %822 = vrot.lane.b32.xlu0 %v742, 8
      %v823 = vpop.permute.xlu0 %822
      %824 = vrot.lane.b32.xlu0 %v745, 8
      %v825 = vpop.permute.xlu0 %824
      %826 = vrot.lane.b32.xlu0 %v747, 8
      %v827 = vpop.permute.xlu0 %826
      %828 = vrot.lane.b32.xlu0 %v750, 8
      %v829 = vpop.permute.xlu0 %828
      %830 = vrot.lane.b32.xlu0 %v752, 8
      %v831 = vpop.permute.xlu0 %830
      %832 = vrot.lane.b32.xlu0 %v755, 8
      %v833 = vpop.permute.xlu0 %832
      %834 = vrot.lane.b32.xlu0 %v757, 8
      %v835 = vpop.permute.xlu0 %834
      %836 = vrot.lane.b32.xlu0 %v760, 8
      %v837 = vpop.permute.xlu0 %836
      %838 = vrot.lane.b32.xlu0 %v762, 8
      %v839 = vpop.permute.xlu0 %838
      %840 = vrot.lane.b32.xlu0 %v765, 8
      %v841 = vpop.permute.xlu0 %840
      %842 = vrot.lane.b32.xlu0 %v767, 8
      %v843 = vpop.permute.xlu0 %842
      %844 = vrot.lane.b32.xlu0 %v770, 8
      %v845 = vpop.permute.xlu0 %844
      %846 = vrot.lane.b32.xlu0 %v772, 8
      %v847 = vpop.permute.xlu0 %846
      %848 = vrot.lane.b32.xlu0 %v775, 8
      %v849 = vpop.permute.xlu0 %848
      %850 = vrot.lane.b32.xlu0 %v777, 8
      %v851 = vpop.permute.xlu0 %850
      %852 = vrot.lane.b32.xlu0 %v780, 8
      %v853 = vpop.permute.xlu0 %852
      %854 = vrot.lane.b32.xlu0 %v782, 8
      %v855 = vpop.permute.xlu0 %854
      %856 = vrot.lane.b32.xlu0 %v785, 8
      %v857 = vpop.permute.xlu0 %856
      %858 = vrot.lane.b32.xlu0 %v787, 8
      %v859 = vpop.permute.xlu0 %858
      %v896 = vsel %vm279, %v390, %v590
      %v897 = vsel %vm279, %v391, %v592
      %v898 = vsel %vm279, %v393, %v594
      %v899 = vsel %vm279, %v394, %v596
      %v900 = vsel %vm279, %v396, %v598
      %v901 = vsel %vm279, %v397, %v600
      %v902 = vsel %vm279, %v399, %v602
      %v903 = vsel %vm279, %v400, %v604
      %v904 = vsel %vm279, %v402, %v606
      %v905 = vsel %vm279, %v403, %v608
      %v906 = vsel %vm279, %v405, %v610
      %v907 = vsel %vm279, %v406, %v612
      %v908 = vsel %vm279, %v408, %v614
      %v909 = vsel %vm279, %v409, %v616
      %v910 = vsel %vm279, %v411, %v618
      %v911 = vsel %vm279, %v412, %v620
      %v912 = vsel %vm279, %v414, %v622
      %v913 = vsel %vm279, %v415, %v624
      %v914 = vsel %vm279, %v417, %v626
      %v915 = vsel %vm279, %v418, %v628
      %v916 = vsel %vm279, %v420, %v630
      %v917 = vsel %vm279, %v421, %v632
      %v918 = vsel %vm279, %v423, %v634
      %v919 = vsel %vm279, %v424, %v636
      %v920 = vsel %vm279, %v426, %v638
      %v921 = vsel %vm279, %v427, %v640
      %v922 = vsel %vm279, %v429, %v642
      %v923 = vsel %vm279, %v430, %v644
      %v924 = vsel %vm279, %v432, %v646
      %v925 = vsel %vm279, %v433, %v648
      %v926 = vsel %vm279, %v435, %v650
      %v927 = vsel %vm279, %v436, %v652
      %v928 = vsel %vm279, %v438, %v654
      %v929 = vsel %vm279, %v439, %v656
      %v930 = vsel %vm279, %v441, %v658
      %v931 = vsel %vm279, %v442, %v660
      %vm932 = vcmask 64512
      %v933 = vsel %vm932, %v896, %v789
      %v934 = vsel %vm932, %v897, %v791
      %v935 = vsel %vm932, %v898, %v793
      %v936 = vsel %vm932, %v899, %v795
      %v937 = vsel %vm932, %v900, %v797
      %v938 = vsel %vm932, %v901, %v799
      %v939 = vsel %vm932, %v902, %v801
      %v940 = vsel %vm932, %v903, %v803
      %v941 = vsel %vm932, %v904, %v805
      %v942 = vsel %vm932, %v905, %v807
      %v943 = vsel %vm932, %v906, %v809
      %v944 = vsel %vm932, %v907, %v811
      %v945 = vsel %vm932, %v908, %v813
      %v946 = vsel %vm932, %v909, %v815
      %v947 = vsel %vm932, %v910, %v817
      %v948 = vsel %vm932, %v911, %v819
      %v949 = vsel %vm932, %v912, %v821
      %v950 = vsel %vm932, %v913, %v823
      %v951 = vsel %vm932, %v914, %v825
      %v952 = vsel %vm932, %v915, %v827
      %v953 = vsel %vm932, %v916, %v829
      %v954 = vsel %vm932, %v917, %v831
      %v955 = vsel %vm932, %v918, %v833
      %v956 = vsel %vm932, %v919, %v835
      %v957 = vsel %vm932, %v920, %v837
      %v958 = vsel %vm932, %v921, %v839
      %v959 = vsel %vm932, %v922, %v841
      %v960 = vsel %vm932, %v923, %v843
      %v961 = vsel %vm932, %v924, %v845
      %v962 = vsel %vm932, %v925, %v847
      %v963 = vsel %vm932, %v926, %v849
      %v964 = vsel %vm932, %v927, %v851
      %v965 = vsel %vm932, %v928, %v853
      %v966 = vsel %vm932, %v929, %v855
      %v967 = vsel %vm932, %v930, %v857
      %v968 = vsel %vm932, %v931, %v859
      %v969 = vld [vmem:[%s1] sm:$0xff]
      %v970 = vld [vmem:[%s1 + $0x8] sm:$0xf]
      %v971 = vld [vmem:[%s1 + $0x10] sm:$0xff]
      %v972 = vld [vmem:[%s1 + $0x18] sm:$0xf]
      %v973 = vld [vmem:[%s1 + $0x20] sm:$0xff]
      %v974 = vld [vmem:[%s1 + $0x28] sm:$0xf]
      %vm975 = vcmask 97280
      %v977 = vsel %vm975, %v935, 0
      %v980 = vsel %vm975, %v936, 0
      %v983 = vsel %vm975, %v937, 0
      %v986 = vsel %vm975, %v938, 0
      %v989 = vsel %vm975, %v939, 0
      %v992 = vsel %vm975, %v940, 0
      %v995 = vsel %vm975, %v941, 0
      %v998 = vsel %vm975, %v942, 0
      %v1001 = vsel %vm975, %v943, 0
      %v1004 = vsel %vm975, %v944, 0
      %v1007 = vsel %vm975, %v945, 0
      %v1010 = vsel %vm975, %v946, 0
      %v1013 = vsel %vm975, %v947, 0
      %v1016 = vsel %vm975, %v948, 0
      %v1019 = vsel %vm975, %v949, 0
      %v1022 = vsel %vm975, %v950, 0
      %v1025 = vsel %vm975, %v951, 0
      %v1028 = vsel %vm975, %v952, 0
      %v1031 = vsel %vm975, %v953, 0
      %v1034 = vsel %vm975, %v954, 0
      %v1037 = vsel %vm975, %v955, 0
      %v1040 = vsel %vm975, %v956, 0
      %v1043 = vsel %vm975, %v957, 0
      %v1046 = vsel %vm975, %v958, 0
      %v1049 = vsel %vm975, %v959, 0
      %v1052 = vsel %vm975, %v960, 0
      %v1055 = vsel %vm975, %v961, 0
      %v1058 = vsel %vm975, %v962, 0
      %v1061 = vsel %vm975, %v963, 0
      %v1064 = vsel %vm975, %v964, 0
      %v1067 = vsel %vm975, %v965, 0
      %v1070 = vsel %vm975, %v966, 0
      %vm1072 = vcmask 1043456
      %v1074 = vsel %vm1072, %v972, 0
      %1076 = vmatprep.subr.mxu0 0.0
      %1077 = vmatpush1.msra.mxu0 0.0
      %1078 = vmatprep.subr.mxu0 0.0
      %1079 = vmatpush1.msra.mxu0 0.0
      %1080 = vmatprep.subr.mxu0 0.0
      %1081 = vmatpush1.msra.mxu0 0.0
      %1082 = vmatprep.subr.mxu0 0.0
      %1083 = vmatpush1.msra.mxu0 0.0
      %1084 = vmatprep.subr.mxu0 0.0
      %1085 = vmatpush1.msra.mxu0 0.0
      %1086 = vmatprep.subr.mxu0 0.0
      %1087 = vmatpush1.msra.mxu0 0.0
      %1088 = vmatprep.subr.mxu0 0.0
      %1089 = vmatpush1.msra.mxu0 0.0
      %1090 = vmatprep.subr.mxu0 0.0
      %1091 = vmatpush1.msra.mxu0 0.0
      %1092 = vmatprep.subr.mxu0 0.0
      %1093 = vmatpush1.msra.mxu0 0.0
      %1094 = vmatprep.subr.mxu0 0.0
      %1095 = vmatpush1.msra.mxu0 0.0
      %1096 = vmatprep.subr.mxu0 0.0
      %1097 = vmatpush1.msra.mxu0 0.0
      %1098 = vmatprep.subr.mxu0 0.0
      %1099 = vmatpush1.msra.mxu0 0.0
      %1100 = vmatprep.subr.mxu0 0.0
      %1101 = vmatpush1.msra.mxu0 0.0
      %1102 = vmatprep.subr.mxu0 0.0
      %1103 = vmatpush1.msra.mxu0 0.0
      %1104 = vmatprep.subr.mxu0 0.0
      %1105 = vmatpush1.msra.mxu0 %v1074
      %1106 = vmatprep.subr.mxu0 0.0
      %1107 = vmatpush1.msra.mxu0 %v971
      %1108 = vmatprep.subr.mxu0 0.0
      %1109 = vmatpush2.msra.mxu0 0.0
      %1110 = vmatprep.subr.mxu0 0.0
      %1111 = vmatpush2.msra.mxu0 0.0
      %1112 = vmatprep.subr.mxu0 0.0
      %1113 = vmatpush2.msra.mxu0 0.0
      %1114 = vmatprep.subr.mxu0 0.0
      %1115 = vmatpush2.msra.mxu0 0.0
      %1116 = vmatprep.subr.mxu0 0.0
      %1117 = vmatpush2.msra.mxu0 0.0
      %1118 = vmatprep.subr.mxu0 0.0
      %1119 = vmatpush2.msra.mxu0 0.0
      %1120 = vmatprep.subr.mxu0 0.0
      %1121 = vmatpush2.msra.mxu0 0.0
      %1122 = vmatprep.subr.mxu0 0.0
      %1123 = vmatpush2.msra.mxu0 0.0
      %1124 = vmatprep.subr.mxu0 0.0
      %1125 = vmatpush2.msra.mxu0 0.0
      %1126 = vmatprep.subr.mxu0 0.0
      %1127 = vmatpush2.msra.mxu0 0.0
      %1128 = vmatprep.subr.mxu0 0.0
      %1129 = vmatpush2.msra.mxu0 0.0
      %1130 = vmatprep.subr.mxu0 0.0
      %1131 = vmatpush2.msra.mxu0 0.0
      %1132 = vmatprep.subr.mxu0 0.0
      %1133 = vmatpush2.msra.mxu0 0.0
      %1134 = vmatprep.subr.mxu0 0.0
      %1135 = vmatpush2.msra.mxu0 0.0
      %1136 = vmatprep.subr.mxu0 0.0
      %1137 = vmatpush2.msra.mxu0 0.0
      %1138 = vmatprep.subr.mxu0 0.0
      %1139 = vmatpush2.msra.mxu0 0.0
      %1140 = vmatprep.mubr.f32.mxu0 0.0
      %1141 = vmatmul.mubr.f32.gmra.mxu0 %v977
      %v1142 = vpop.f32.mrf.mxu0
      %v1143 = vadd.f32 0.0, %v1142
      %v1144 = vpop.f32.mrf.mxu0
      %1145 = vmatprep.mubr.f32.mxu0 0.0
      %1146 = vmatmul.mubr.f32.gmra.mxu0 %v980
      %v1147 = vpop.f32.mrf.mxu0
      %v1148 = vadd.f32 0.0, %v1147
      %v1149 = vpop.f32.mrf.mxu0
      %1150 = vmatprep.mubr.f32.mxu0 0.0
      %1151 = vmatmul.mubr.f32.gmra.mxu0 %v983
      %v1152 = vpop.f32.mrf.mxu0
      %v1153 = vadd.f32 0.0, %v1152
      %v1154 = vpop.f32.mrf.mxu0
      %1155 = vmatprep.mubr.f32.mxu0 0.0
      %1156 = vmatmul.mubr.f32.gmra.mxu0 %v986
      %v1157 = vpop.f32.mrf.mxu0
      %v1158 = vadd.f32 0.0, %v1157
      %v1159 = vpop.f32.mrf.mxu0
      %1160 = vmatprep.mubr.f32.mxu0 0.0
      %1161 = vmatmul.mubr.f32.gmra.mxu0 %v989
      %v1162 = vpop.f32.mrf.mxu0
      %v1163 = vadd.f32 0.0, %v1162
      %v1164 = vpop.f32.mrf.mxu0
      %1165 = vmatprep.mubr.f32.mxu0 0.0
      %1166 = vmatmul.mubr.f32.gmra.mxu0 %v992
      %v1167 = vpop.f32.mrf.mxu0
      %v1168 = vadd.f32 0.0, %v1167
      %v1169 = vpop.f32.mrf.mxu0
      %1170 = vmatprep.mubr.f32.mxu0 0.0
      %1171 = vmatmul.mubr.f32.gmra.mxu0 %v995
      %v1172 = vpop.f32.mrf.mxu0
      %v1173 = vadd.f32 0.0, %v1172
      %v1174 = vpop.f32.mrf.mxu0
      %1175 = vmatprep.mubr.f32.mxu0 0.0
      %1176 = vmatmul.mubr.f32.gmra.mxu0 %v998
      %v1177 = vpop.f32.mrf.mxu0
      %v1178 = vadd.f32 0.0, %v1177
      %v1179 = vpop.f32.mrf.mxu0
      %1180 = vmatprep.mubr.f32.mxu0 0.0
      %1181 = vmatmul.mubr.f32.gmra.mxu0 %v1001
      %v1182 = vpop.f32.mrf.mxu0
      %v1183 = vadd.f32 0.0, %v1182
      %v1184 = vpop.f32.mrf.mxu0
      %1185 = vmatprep.mubr.f32.mxu0 0.0
      %1186 = vmatmul.mubr.f32.gmra.mxu0 %v1004
      %v1187 = vpop.f32.mrf.mxu0
      %v1188 = vadd.f32 0.0, %v1187
      %v1189 = vpop.f32.mrf.mxu0
      %1190 = vmatprep.mubr.f32.mxu0 0.0
      %1191 = vmatmul.mubr.f32.gmra.mxu0 %v1007
      %v1192 = vpop.f32.mrf.mxu0
      %v1193 = vadd.f32 0.0, %v1192
      %v1194 = vpop.f32.mrf.mxu0
      %1195 = vmatprep.mubr.f32.mxu0 0.0
      %1196 = vmatmul.mubr.f32.gmra.mxu0 %v1010
      %v1197 = vpop.f32.mrf.mxu0
      %v1198 = vadd.f32 0.0, %v1197
      %v1199 = vpop.f32.mrf.mxu0
      %1200 = vmatprep.mubr.f32.mxu0 0.0
      %1201 = vmatmul.mubr.f32.gmra.mxu0 %v1013
      %v1202 = vpop.f32.mrf.mxu0
      %v1203 = vadd.f32 0.0, %v1202
      %v1204 = vpop.f32.mrf.mxu0
      %1205 = vmatprep.mubr.f32.mxu0 0.0
      %1206 = vmatmul.mubr.f32.gmra.mxu0 %v1016
      %v1207 = vpop.f32.mrf.mxu0
      %v1208 = vadd.f32 0.0, %v1207
      %v1209 = vpop.f32.mrf.mxu0
      %1210 = vmatprep.mubr.f32.mxu0 0.0
      %1211 = vmatmul.mubr.f32.gmra.mxu0 %v1019
      %v1212 = vpop.f32.mrf.mxu0
      %v1213 = vadd.f32 0.0, %v1212
      %v1214 = vpop.f32.mrf.mxu0
      %1215 = vmatprep.mubr.f32.mxu0 0.0
      %1216 = vmatmul.mubr.f32.gmra.mxu0 %v1022
      %v1217 = vpop.f32.mrf.mxu0
      %v1218 = vadd.f32 0.0, %v1217
      %v1219 = vpop.f32.mrf.mxu0
      %1220 = vmatprep.mubr.f32.mxu0 0.0
      %1221 = vmatmul.mubr.f32.gmra.mxu0 %v1025
      %v1222 = vpop.f32.mrf.mxu0
      %v1223 = vadd.f32 0.0, %v1222
      %v1224 = vpop.f32.mrf.mxu0
      %1225 = vmatprep.mubr.f32.mxu0 0.0
      %1226 = vmatmul.mubr.f32.gmra.mxu0 %v1028
      %v1227 = vpop.f32.mrf.mxu0
      %v1228 = vadd.f32 0.0, %v1227
      %v1229 = vpop.f32.mrf.mxu0
      %1230 = vmatprep.mubr.f32.mxu0 0.0
      %1231 = vmatmul.mubr.f32.gmra.mxu0 %v1031
      %v1232 = vpop.f32.mrf.mxu0
      %v1233 = vadd.f32 0.0, %v1232
      %v1234 = vpop.f32.mrf.mxu0
      %1235 = vmatprep.mubr.f32.mxu0 0.0
      %1236 = vmatmul.mubr.f32.gmra.mxu0 %v1034
      %v1237 = vpop.f32.mrf.mxu0
      %v1238 = vadd.f32 0.0, %v1237
      %v1239 = vpop.f32.mrf.mxu0
      %1240 = vmatprep.mubr.f32.mxu0 0.0
      %1241 = vmatmul.mubr.f32.gmra.mxu0 %v1037
      %v1242 = vpop.f32.mrf.mxu0
      %v1243 = vadd.f32 0.0, %v1242
      %v1244 = vpop.f32.mrf.mxu0
      %1245 = vmatprep.mubr.f32.mxu0 0.0
      %1246 = vmatmul.mubr.f32.gmra.mxu0 %v1040
      %v1247 = vpop.f32.mrf.mxu0
      %v1248 = vadd.f32 0.0, %v1247
      %v1249 = vpop.f32.mrf.mxu0
      %1250 = vmatprep.mubr.f32.mxu0 0.0
      %1251 = vmatmul.mubr.f32.gmra.mxu0 %v1043
      %v1252 = vpop.f32.mrf.mxu0
      %v1253 = vadd.f32 0.0, %v1252
      %v1254 = vpop.f32.mrf.mxu0
      %1255 = vmatprep.mubr.f32.mxu0 0.0
      %1256 = vmatmul.mubr.f32.gmra.mxu0 %v1046
      %v1257 = vpop.f32.mrf.mxu0
      %v1258 = vadd.f32 0.0, %v1257
      %v1259 = vpop.f32.mrf.mxu0
      %1260 = vmatprep.mubr.f32.mxu0 0.0
      %1261 = vmatmul.mubr.f32.gmra.mxu0 %v1049
      %v1262 = vpop.f32.mrf.mxu0
      %v1263 = vadd.f32 0.0, %v1262
      %v1264 = vpop.f32.mrf.mxu0
      %1265 = vmatprep.mubr.f32.mxu0 0.0
      %1266 = vmatmul.mubr.f32.gmra.mxu0 %v1052
      %v1267 = vpop.f32.mrf.mxu0
      %v1268 = vadd.f32 0.0, %v1267
      %v1269 = vpop.f32.mrf.mxu0
      %1270 = vmatprep.mubr.f32.mxu0 0.0
      %1271 = vmatmul.mubr.f32.gmra.mxu0 %v1055
      %v1272 = vpop.f32.mrf.mxu0
      %v1273 = vadd.f32 0.0, %v1272
      %v1274 = vpop.f32.mrf.mxu0
      %1275 = vmatprep.mubr.f32.mxu0 0.0
      %1276 = vmatmul.mubr.f32.gmra.mxu0 %v1058
      %v1277 = vpop.f32.mrf.mxu0
      %v1278 = vadd.f32 0.0, %v1277
      %v1279 = vpop.f32.mrf.mxu0
      %1280 = vmatprep.mubr.f32.mxu0 0.0
      %1281 = vmatmul.mubr.f32.gmra.mxu0 %v1061
      %v1282 = vpop.f32.mrf.mxu0
      %v1283 = vadd.f32 0.0, %v1282
      %v1284 = vpop.f32.mrf.mxu0
      %1285 = vmatprep.mubr.f32.mxu0 0.0
      %1286 = vmatmul.mubr.f32.gmra.mxu0 %v1064
      %v1287 = vpop.f32.mrf.mxu0
      %v1288 = vadd.f32 0.0, %v1287
      %v1289 = vpop.f32.mrf.mxu0
      %1290 = vmatprep.mubr.f32.mxu0 0.0
      %1291 = vmatmul.mubr.f32.gmra.mxu0 %v1067
      %v1292 = vpop.f32.mrf.mxu0
      %v1293 = vadd.f32 0.0, %v1292
      %v1294 = vpop.f32.mrf.mxu0
      %1295 = vmatprep.mubr.f32.mxu0 0.0
      %1296 = vmatmul.mubr.f32.gmra.mxu0 %v1070
      %v1297 = vpop.f32.mrf.mxu0
      %v1298 = vadd.f32 0.0, %v1297
      %v1299 = vpop.f32.mrf.mxu0
      %1300 = vdwg.mxu0
      %v1302 = vsel %vm975, %v933, 0
      %v1305 = vsel %vm975, %v934, 0
      %v1308 = vsel %vm1072, %v970, 0
      %1310 = vmatprep.subr.mxu0 0.0
      %1311 = vmatpush1.msra.mxu0 0.0
      %1312 = vmatprep.subr.mxu0 0.0
      %1313 = vmatpush1.msra.mxu0 0.0
      %1314 = vmatprep.subr.mxu0 0.0
      %1315 = vmatpush1.msra.mxu0 0.0
      %1316 = vmatprep.subr.mxu0 0.0
      %1317 = vmatpush1.msra.mxu0 0.0
      %1318 = vmatprep.subr.mxu0 0.0
      %1319 = vmatpush1.msra.mxu0 0.0
      %1320 = vmatprep.subr.mxu0 0.0
      %1321 = vmatpush1.msra.mxu0 0.0
      %1322 = vmatprep.subr.mxu0 0.0
      %1323 = vmatpush1.msra.mxu0 0.0
      %1324 = vmatprep.subr.mxu0 0.0
      %1325 = vmatpush1.msra.mxu0 0.0
      %1326 = vmatprep.subr.mxu0 0.0
      %1327 = vmatpush1.msra.mxu0 0.0
      %1328 = vmatprep.subr.mxu0 0.0
      %1329 = vmatpush1.msra.mxu0 0.0
      %1330 = vmatprep.subr.mxu0 0.0
      %1331 = vmatpush1.msra.mxu0 0.0
      %1332 = vmatprep.subr.mxu0 0.0
      %1333 = vmatpush1.msra.mxu0 0.0
      %1334 = vmatprep.subr.mxu0 0.0
      %1335 = vmatpush1.msra.mxu0 0.0
      %1336 = vmatprep.subr.mxu0 0.0
      %1337 = vmatpush1.msra.mxu0 0.0
      %1338 = vmatprep.subr.mxu0 0.0
      %1339 = vmatpush1.msra.mxu0 %v1308
      %1340 = vmatprep.subr.mxu0 0.0
      %1341 = vmatpush1.msra.mxu0 %v969
      %1342 = vmatprep.subr.mxu0 0.0
      %1343 = vmatpush2.msra.mxu0 0.0
      %1344 = vmatprep.subr.mxu0 0.0
      %1345 = vmatpush2.msra.mxu0 0.0
      %1346 = vmatprep.subr.mxu0 0.0
      %1347 = vmatpush2.msra.mxu0 0.0
      %1348 = vmatprep.subr.mxu0 0.0
      %1349 = vmatpush2.msra.mxu0 0.0
      %1350 = vmatprep.subr.mxu0 0.0
      %1351 = vmatpush2.msra.mxu0 0.0
      %1352 = vmatprep.subr.mxu0 0.0
      %1353 = vmatpush2.msra.mxu0 0.0
      %1354 = vmatprep.subr.mxu0 0.0
      %1355 = vmatpush2.msra.mxu0 0.0
      %1356 = vmatprep.subr.mxu0 0.0
      %1357 = vmatpush2.msra.mxu0 0.0
      %1358 = vmatprep.subr.mxu0 0.0
      %1359 = vmatpush2.msra.mxu0 0.0
      %1360 = vmatprep.subr.mxu0 0.0
      %1361 = vmatpush2.msra.mxu0 0.0
      %1362 = vmatprep.subr.mxu0 0.0
      %1363 = vmatpush2.msra.mxu0 0.0
      %1364 = vmatprep.subr.mxu0 0.0
      %1365 = vmatpush2.msra.mxu0 0.0
      %1366 = vmatprep.subr.mxu0 0.0
      %1367 = vmatpush2.msra.mxu0 0.0
      %1368 = vmatprep.subr.mxu0 0.0
      %1369 = vmatpush2.msra.mxu0 0.0
      %1370 = vmatprep.subr.mxu0 0.0
      %1371 = vmatpush2.msra.mxu0 0.0
      %1372 = vmatprep.subr.mxu0 0.0
      %1373 = vmatpush2.msra.mxu0 0.0
      %1374 = vmatprep.mubr.f32.mxu0 0.0
      %1375 = vmatmul.mubr.f32.gmra.mxu0 %v1302
      %v1376 = vpop.f32.mrf.mxu0
      %v1377 = vadd.f32 %v1143, %v1376
      %v1378 = vpop.f32.mrf.mxu0
      %1379 = vmatprep.mubr.f32.mxu0 0.0
      %1380 = vmatmul.mubr.f32.gmra.mxu0 %v1305
      %v1381 = vpop.f32.mrf.mxu0
      %v1382 = vadd.f32 %v1148, %v1381
      %v1383 = vpop.f32.mrf.mxu0
      %1384 = vmatprep.mubr.f32.mxu0 0.0
      %1385 = vmatmul.mubr.f32.gmra.mxu0 %v977
      %v1386 = vpop.f32.mrf.mxu0
      %v1387 = vadd.f32 %v1153, %v1386
      %v1388 = vpop.f32.mrf.mxu0
      %1389 = vmatprep.mubr.f32.mxu0 0.0
      %1390 = vmatmul.mubr.f32.gmra.mxu0 %v980
      %v1391 = vpop.f32.mrf.mxu0
      %v1392 = vadd.f32 %v1158, %v1391
      %v1393 = vpop.f32.mrf.mxu0
      %1394 = vmatprep.mubr.f32.mxu0 0.0
      %1395 = vmatmul.mubr.f32.gmra.mxu0 %v983
      %v1396 = vpop.f32.mrf.mxu0
      %v1397 = vadd.f32 %v1163, %v1396
      %v1398 = vpop.f32.mrf.mxu0
      %1399 = vmatprep.mubr.f32.mxu0 0.0
      %1400 = vmatmul.mubr.f32.gmra.mxu0 %v986
      %v1401 = vpop.f32.mrf.mxu0
      %v1402 = vadd.f32 %v1168, %v1401
      %v1403 = vpop.f32.mrf.mxu0
      %1404 = vmatprep.mubr.f32.mxu0 0.0
      %1405 = vmatmul.mubr.f32.gmra.mxu0 %v989
      %v1406 = vpop.f32.mrf.mxu0
      %v1407 = vadd.f32 %v1173, %v1406
      %v1408 = vpop.f32.mrf.mxu0
      %1409 = vmatprep.mubr.f32.mxu0 0.0
      %1410 = vmatmul.mubr.f32.gmra.mxu0 %v992
      %v1411 = vpop.f32.mrf.mxu0
      %v1412 = vadd.f32 %v1178, %v1411
      %v1413 = vpop.f32.mrf.mxu0
      %1414 = vmatprep.mubr.f32.mxu0 0.0
      %1415 = vmatmul.mubr.f32.gmra.mxu0 %v995
      %v1416 = vpop.f32.mrf.mxu0
      %v1417 = vadd.f32 %v1183, %v1416
      %v1418 = vpop.f32.mrf.mxu0
      %1419 = vmatprep.mubr.f32.mxu0 0.0
      %1420 = vmatmul.mubr.f32.gmra.mxu0 %v998
      %v1421 = vpop.f32.mrf.mxu0
      %v1422 = vadd.f32 %v1188, %v1421
      %v1423 = vpop.f32.mrf.mxu0
      %1424 = vmatprep.mubr.f32.mxu0 0.0
      %1425 = vmatmul.mubr.f32.gmra.mxu0 %v1001
      %v1426 = vpop.f32.mrf.mxu0
      %v1427 = vadd.f32 %v1193, %v1426
      %v1428 = vpop.f32.mrf.mxu0
      %1429 = vmatprep.mubr.f32.mxu0 0.0
      %1430 = vmatmul.mubr.f32.gmra.mxu0 %v1004
      %v1431 = vpop.f32.mrf.mxu0
      %v1432 = vadd.f32 %v1198, %v1431
      %v1433 = vpop.f32.mrf.mxu0
      %1434 = vmatprep.mubr.f32.mxu0 0.0
      %1435 = vmatmul.mubr.f32.gmra.mxu0 %v1007
      %v1436 = vpop.f32.mrf.mxu0
      %v1437 = vadd.f32 %v1203, %v1436
      %v1438 = vpop.f32.mrf.mxu0
      %1439 = vmatprep.mubr.f32.mxu0 0.0
      %1440 = vmatmul.mubr.f32.gmra.mxu0 %v1010
      %v1441 = vpop.f32.mrf.mxu0
      %v1442 = vadd.f32 %v1208, %v1441
      %v1443 = vpop.f32.mrf.mxu0
      %1444 = vmatprep.mubr.f32.mxu0 0.0
      %1445 = vmatmul.mubr.f32.gmra.mxu0 %v1013
      %v1446 = vpop.f32.mrf.mxu0
      %v1447 = vadd.f32 %v1213, %v1446
      %v1448 = vpop.f32.mrf.mxu0
      %1449 = vmatprep.mubr.f32.mxu0 0.0
      %1450 = vmatmul.mubr.f32.gmra.mxu0 %v1016
      %v1451 = vpop.f32.mrf.mxu0
      %v1452 = vadd.f32 %v1218, %v1451
      %v1453 = vpop.f32.mrf.mxu0
      %1454 = vmatprep.mubr.f32.mxu0 0.0
      %1455 = vmatmul.mubr.f32.gmra.mxu0 %v1019
      %v1456 = vpop.f32.mrf.mxu0
      %v1457 = vadd.f32 %v1223, %v1456
      %v1458 = vpop.f32.mrf.mxu0
      %1459 = vmatprep.mubr.f32.mxu0 0.0
      %1460 = vmatmul.mubr.f32.gmra.mxu0 %v1022
      %v1461 = vpop.f32.mrf.mxu0
      %v1462 = vadd.f32 %v1228, %v1461
      %v1463 = vpop.f32.mrf.mxu0
      %1464 = vmatprep.mubr.f32.mxu0 0.0
      %1465 = vmatmul.mubr.f32.gmra.mxu0 %v1025
      %v1466 = vpop.f32.mrf.mxu0
      %v1467 = vadd.f32 %v1233, %v1466
      %v1468 = vpop.f32.mrf.mxu0
      %1469 = vmatprep.mubr.f32.mxu0 0.0
      %1470 = vmatmul.mubr.f32.gmra.mxu0 %v1028
      %v1471 = vpop.f32.mrf.mxu0
      %v1472 = vadd.f32 %v1238, %v1471
      %v1473 = vpop.f32.mrf.mxu0
      %1474 = vmatprep.mubr.f32.mxu0 0.0
      %1475 = vmatmul.mubr.f32.gmra.mxu0 %v1031
      %v1476 = vpop.f32.mrf.mxu0
      %v1477 = vadd.f32 %v1243, %v1476
      %v1478 = vpop.f32.mrf.mxu0
      %1479 = vmatprep.mubr.f32.mxu0 0.0
      %1480 = vmatmul.mubr.f32.gmra.mxu0 %v1034
      %v1481 = vpop.f32.mrf.mxu0
      %v1482 = vadd.f32 %v1248, %v1481
      %v1483 = vpop.f32.mrf.mxu0
      %1484 = vmatprep.mubr.f32.mxu0 0.0
      %1485 = vmatmul.mubr.f32.gmra.mxu0 %v1037
      %v1486 = vpop.f32.mrf.mxu0
      %v1487 = vadd.f32 %v1253, %v1486
      %v1488 = vpop.f32.mrf.mxu0
      %1489 = vmatprep.mubr.f32.mxu0 0.0
      %1490 = vmatmul.mubr.f32.gmra.mxu0 %v1040
      %v1491 = vpop.f32.mrf.mxu0
      %v1492 = vadd.f32 %v1258, %v1491
      %v1493 = vpop.f32.mrf.mxu0
      %1494 = vmatprep.mubr.f32.mxu0 0.0
      %1495 = vmatmul.mubr.f32.gmra.mxu0 %v1043
      %v1496 = vpop.f32.mrf.mxu0
      %v1497 = vadd.f32 %v1263, %v1496
      %v1498 = vpop.f32.mrf.mxu0
      %1499 = vmatprep.mubr.f32.mxu0 0.0
      %1500 = vmatmul.mubr.f32.gmra.mxu0 %v1046
      %v1501 = vpop.f32.mrf.mxu0
      %v1502 = vadd.f32 %v1268, %v1501
      %v1503 = vpop.f32.mrf.mxu0
      %1504 = vmatprep.mubr.f32.mxu0 0.0
      %1505 = vmatmul.mubr.f32.gmra.mxu0 %v1049
      %v1506 = vpop.f32.mrf.mxu0
      %v1507 = vadd.f32 %v1273, %v1506
      %v1508 = vpop.f32.mrf.mxu0
      %1509 = vmatprep.mubr.f32.mxu0 0.0
      %1510 = vmatmul.mubr.f32.gmra.mxu0 %v1052
      %v1511 = vpop.f32.mrf.mxu0
      %v1512 = vadd.f32 %v1278, %v1511
      %v1513 = vpop.f32.mrf.mxu0
      %1514 = vmatprep.mubr.f32.mxu0 0.0
      %1515 = vmatmul.mubr.f32.gmra.mxu0 %v1055
      %v1516 = vpop.f32.mrf.mxu0
      %v1517 = vadd.f32 %v1283, %v1516
      %v1518 = vpop.f32.mrf.mxu0
      %1519 = vmatprep.mubr.f32.mxu0 0.0
      %1520 = vmatmul.mubr.f32.gmra.mxu0 %v1058
      %v1521 = vpop.f32.mrf.mxu0
      %v1522 = vadd.f32 %v1288, %v1521
      %v1523 = vpop.f32.mrf.mxu0
      %1524 = vmatprep.mubr.f32.mxu0 0.0
      %1525 = vmatmul.mubr.f32.gmra.mxu0 %v1061
      %v1526 = vpop.f32.mrf.mxu0
      %v1527 = vadd.f32 %v1293, %v1526
      %v1528 = vpop.f32.mrf.mxu0
      %1529 = vmatprep.mubr.f32.mxu0 0.0
      %1530 = vmatmul.mubr.f32.gmra.mxu0 %v1064
      %v1531 = vpop.f32.mrf.mxu0
      %v1532 = vadd.f32 %v1298, %v1531
      %v1533 = vpop.f32.mrf.mxu0
      %1534 = vdwg.mxu0
      %v1536 = vsel %vm975, %v967, 0
      %v1539 = vsel %vm975, %v968, 0
      %v1542 = vsel %vm1072, %v974, 0
      %1544 = vmatprep.subr.mxu0 0.0
      %1545 = vmatpush1.msra.mxu0 0.0
      %1546 = vmatprep.subr.mxu0 0.0
      %1547 = vmatpush1.msra.mxu0 0.0
      %1548 = vmatprep.subr.mxu0 0.0
      %1549 = vmatpush1.msra.mxu0 0.0
      %1550 = vmatprep.subr.mxu0 0.0
      %1551 = vmatpush1.msra.mxu0 0.0
      %1552 = vmatprep.subr.mxu0 0.0
      %1553 = vmatpush1.msra.mxu0 0.0
      %1554 = vmatprep.subr.mxu0 0.0
      %1555 = vmatpush1.msra.mxu0 0.0
      %1556 = vmatprep.subr.mxu0 0.0
      %1557 = vmatpush1.msra.mxu0 0.0
      %1558 = vmatprep.subr.mxu0 0.0
      %1559 = vmatpush1.msra.mxu0 0.0
      %1560 = vmatprep.subr.mxu0 0.0
      %1561 = vmatpush1.msra.mxu0 0.0
      %1562 = vmatprep.subr.mxu0 0.0
      %1563 = vmatpush1.msra.mxu0 0.0
      %1564 = vmatprep.subr.mxu0 0.0
      %1565 = vmatpush1.msra.mxu0 0.0
      %1566 = vmatprep.subr.mxu0 0.0
      %1567 = vmatpush1.msra.mxu0 0.0
      %1568 = vmatprep.subr.mxu0 0.0
      %1569 = vmatpush1.msra.mxu0 0.0
      %1570 = vmatprep.subr.mxu0 0.0
      %1571 = vmatpush1.msra.mxu0 0.0
      %1572 = vmatprep.subr.mxu0 0.0
      %1573 = vmatpush1.msra.mxu0 %v1542
      %1574 = vmatprep.subr.mxu0 0.0
      %1575 = vmatpush1.msra.mxu0 %v973
      %1576 = vmatprep.subr.mxu0 0.0
      %1577 = vmatpush2.msra.mxu0 0.0
      %1578 = vmatprep.subr.mxu0 0.0
      %1579 = vmatpush2.msra.mxu0 0.0
      %1580 = vmatprep.subr.mxu0 0.0
      %1581 = vmatpush2.msra.mxu0 0.0
      %1582 = vmatprep.subr.mxu0 0.0
      %1583 = vmatpush2.msra.mxu0 0.0
      %1584 = vmatprep.subr.mxu0 0.0
      %1585 = vmatpush2.msra.mxu0 0.0
      %1586 = vmatprep.subr.mxu0 0.0
      %1587 = vmatpush2.msra.mxu0 0.0
      %1588 = vmatprep.subr.mxu0 0.0
      %1589 = vmatpush2.msra.mxu0 0.0
      %1590 = vmatprep.subr.mxu0 0.0
      %1591 = vmatpush2.msra.mxu0 0.0
      %1592 = vmatprep.subr.mxu0 0.0
      %1593 = vmatpush2.msra.mxu0 0.0
      %1594 = vmatprep.subr.mxu0 0.0
      %1595 = vmatpush2.msra.mxu0 0.0
      %1596 = vmatprep.subr.mxu0 0.0
      %1597 = vmatpush2.msra.mxu0 0.0
      %1598 = vmatprep.subr.mxu0 0.0
      %1599 = vmatpush2.msra.mxu0 0.0
      %1600 = vmatprep.subr.mxu0 0.0
      %1601 = vmatpush2.msra.mxu0 0.0
      %1602 = vmatprep.subr.mxu0 0.0
      %1603 = vmatpush2.msra.mxu0 0.0
      %1604 = vmatprep.subr.mxu0 0.0
      %1605 = vmatpush2.msra.mxu0 0.0
      %1606 = vmatprep.subr.mxu0 0.0
      %1607 = vmatpush2.msra.mxu0 0.0
      %1608 = vmatprep.mubr.f32.mxu0 0.0
      %1609 = vmatmul.mubr.f32.gmra.mxu0 %v983
      %v1610 = vpop.f32.mrf.mxu0
      %v1611 = vadd.f32 0.0, %v1610
      %v1612 = vpop.f32.mrf.mxu0
      %1613 = vmatprep.mubr.f32.mxu0 0.0
      %1614 = vmatmul.mubr.f32.gmra.mxu0 %v986
      %v1615 = vpop.f32.mrf.mxu0
      %v1616 = vadd.f32 0.0, %v1615
      %v1617 = vpop.f32.mrf.mxu0
      %1618 = vmatprep.mubr.f32.mxu0 0.0
      %1619 = vmatmul.mubr.f32.gmra.mxu0 %v989
      %v1620 = vpop.f32.mrf.mxu0
      %v1621 = vadd.f32 0.0, %v1620
      %v1622 = vpop.f32.mrf.mxu0
      %1623 = vmatprep.mubr.f32.mxu0 0.0
      %1624 = vmatmul.mubr.f32.gmra.mxu0 %v992
      %v1625 = vpop.f32.mrf.mxu0
      %v1626 = vadd.f32 0.0, %v1625
      %v1627 = vpop.f32.mrf.mxu0
      %1628 = vmatprep.mubr.f32.mxu0 0.0
      %1629 = vmatmul.mubr.f32.gmra.mxu0 %v995
      %v1630 = vpop.f32.mrf.mxu0
      %v1631 = vadd.f32 0.0, %v1630
      %v1632 = vpop.f32.mrf.mxu0
      %1633 = vmatprep.mubr.f32.mxu0 0.0
      %1634 = vmatmul.mubr.f32.gmra.mxu0 %v998
      %v1635 = vpop.f32.mrf.mxu0
      %v1636 = vadd.f32 0.0, %v1635
      %v1637 = vpop.f32.mrf.mxu0
      %1638 = vmatprep.mubr.f32.mxu0 0.0
      %1639 = vmatmul.mubr.f32.gmra.mxu0 %v1001
      %v1640 = vpop.f32.mrf.mxu0
      %v1641 = vadd.f32 0.0, %v1640
      %v1642 = vpop.f32.mrf.mxu0
      %1643 = vmatprep.mubr.f32.mxu0 0.0
      %1644 = vmatmul.mubr.f32.gmra.mxu0 %v1004
      %v1645 = vpop.f32.mrf.mxu0
      %v1646 = vadd.f32 0.0, %v1645
      %v1647 = vpop.f32.mrf.mxu0
      %1648 = vmatprep.mubr.f32.mxu0 0.0
      %1649 = vmatmul.mubr.f32.gmra.mxu0 %v1007
      %v1650 = vpop.f32.mrf.mxu0
      %v1651 = vadd.f32 0.0, %v1650
      %v1652 = vpop.f32.mrf.mxu0
      %1653 = vmatprep.mubr.f32.mxu0 0.0
      %1654 = vmatmul.mubr.f32.gmra.mxu0 %v1010
      %v1655 = vpop.f32.mrf.mxu0
      %v1656 = vadd.f32 0.0, %v1655
      %v1657 = vpop.f32.mrf.mxu0
      %1658 = vmatprep.mubr.f32.mxu0 0.0
      %1659 = vmatmul.mubr.f32.gmra.mxu0 %v1013
      %v1660 = vpop.f32.mrf.mxu0
      %v1661 = vadd.f32 0.0, %v1660
      %v1662 = vpop.f32.mrf.mxu0
      %1663 = vmatprep.mubr.f32.mxu0 0.0
      %1664 = vmatmul.mubr.f32.gmra.mxu0 %v1016
      %v1665 = vpop.f32.mrf.mxu0
      %v1666 = vadd.f32 0.0, %v1665
      %v1667 = vpop.f32.mrf.mxu0
      %1668 = vmatprep.mubr.f32.mxu0 0.0
      %1669 = vmatmul.mubr.f32.gmra.mxu0 %v1019
      %v1670 = vpop.f32.mrf.mxu0
      %v1671 = vadd.f32 0.0, %v1670
      %v1672 = vpop.f32.mrf.mxu0
      %1673 = vmatprep.mubr.f32.mxu0 0.0
      %1674 = vmatmul.mubr.f32.gmra.mxu0 %v1022
      %v1675 = vpop.f32.mrf.mxu0
      %v1676 = vadd.f32 0.0, %v1675
      %v1677 = vpop.f32.mrf.mxu0
      %1678 = vmatprep.mubr.f32.mxu0 0.0
      %1679 = vmatmul.mubr.f32.gmra.mxu0 %v1025
      %v1680 = vpop.f32.mrf.mxu0
      %v1681 = vadd.f32 0.0, %v1680
      %v1682 = vpop.f32.mrf.mxu0
      %1683 = vmatprep.mubr.f32.mxu0 0.0
      %1684 = vmatmul.mubr.f32.gmra.mxu0 %v1028
      %v1685 = vpop.f32.mrf.mxu0
      %v1686 = vadd.f32 0.0, %v1685
      %v1687 = vpop.f32.mrf.mxu0
      %1688 = vmatprep.mubr.f32.mxu0 0.0
      %1689 = vmatmul.mubr.f32.gmra.mxu0 %v1031
      %v1690 = vpop.f32.mrf.mxu0
      %v1691 = vadd.f32 0.0, %v1690
      %v1692 = vpop.f32.mrf.mxu0
      %1693 = vmatprep.mubr.f32.mxu0 0.0
      %1694 = vmatmul.mubr.f32.gmra.mxu0 %v1034
      %v1695 = vpop.f32.mrf.mxu0
      %v1696 = vadd.f32 0.0, %v1695
      %v1697 = vpop.f32.mrf.mxu0
      %1698 = vmatprep.mubr.f32.mxu0 0.0
      %1699 = vmatmul.mubr.f32.gmra.mxu0 %v1037
      %v1700 = vpop.f32.mrf.mxu0
      %v1701 = vadd.f32 0.0, %v1700
      %v1702 = vpop.f32.mrf.mxu0
      %1703 = vmatprep.mubr.f32.mxu0 0.0
      %1704 = vmatmul.mubr.f32.gmra.mxu0 %v1040
      %v1705 = vpop.f32.mrf.mxu0
      %v1706 = vadd.f32 0.0, %v1705
      %v1707 = vpop.f32.mrf.mxu0
      %1708 = vmatprep.mubr.f32.mxu0 0.0
      %1709 = vmatmul.mubr.f32.gmra.mxu0 %v1043
      %v1710 = vpop.f32.mrf.mxu0
      %v1711 = vadd.f32 0.0, %v1710
      %v1712 = vpop.f32.mrf.mxu0
      %1713 = vmatprep.mubr.f32.mxu0 0.0
      %1714 = vmatmul.mubr.f32.gmra.mxu0 %v1046
      %v1715 = vpop.f32.mrf.mxu0
      %v1716 = vadd.f32 0.0, %v1715
      %v1717 = vpop.f32.mrf.mxu0
      %1718 = vmatprep.mubr.f32.mxu0 0.0
      %1719 = vmatmul.mubr.f32.gmra.mxu0 %v1049
      %v1720 = vpop.f32.mrf.mxu0
      %v1721 = vadd.f32 0.0, %v1720
      %v1722 = vpop.f32.mrf.mxu0
      %1723 = vmatprep.mubr.f32.mxu0 0.0
      %1724 = vmatmul.mubr.f32.gmra.mxu0 %v1052
      %v1725 = vpop.f32.mrf.mxu0
      %v1726 = vadd.f32 0.0, %v1725
      %v1727 = vpop.f32.mrf.mxu0
      %1728 = vmatprep.mubr.f32.mxu0 0.0
      %1729 = vmatmul.mubr.f32.gmra.mxu0 %v1055
      %v1730 = vpop.f32.mrf.mxu0
      %v1731 = vadd.f32 0.0, %v1730
      %v1732 = vpop.f32.mrf.mxu0
      %1733 = vmatprep.mubr.f32.mxu0 0.0
      %1734 = vmatmul.mubr.f32.gmra.mxu0 %v1058
      %v1735 = vpop.f32.mrf.mxu0
      %v1736 = vadd.f32 0.0, %v1735
      %v1737 = vpop.f32.mrf.mxu0
      %1738 = vmatprep.mubr.f32.mxu0 0.0
      %1739 = vmatmul.mubr.f32.gmra.mxu0 %v1061
      %v1740 = vpop.f32.mrf.mxu0
      %v1741 = vadd.f32 0.0, %v1740
      %v1742 = vpop.f32.mrf.mxu0
      %1743 = vmatprep.mubr.f32.mxu0 0.0
      %1744 = vmatmul.mubr.f32.gmra.mxu0 %v1064
      %v1745 = vpop.f32.mrf.mxu0
      %v1746 = vadd.f32 0.0, %v1745
      %v1747 = vpop.f32.mrf.mxu0
      %1748 = vmatprep.mubr.f32.mxu0 0.0
      %1749 = vmatmul.mubr.f32.gmra.mxu0 %v1067
      %v1750 = vpop.f32.mrf.mxu0
      %v1751 = vadd.f32 0.0, %v1750
      %v1752 = vpop.f32.mrf.mxu0
      %1753 = vmatprep.mubr.f32.mxu0 0.0
      %1754 = vmatmul.mubr.f32.gmra.mxu0 %v1070
      %v1755 = vpop.f32.mrf.mxu0
      %v1756 = vadd.f32 0.0, %v1755
      %v1757 = vpop.f32.mrf.mxu0
      %1758 = vmatprep.mubr.f32.mxu0 0.0
      %1759 = vmatmul.mubr.f32.gmra.mxu0 %v1536
      %v1760 = vpop.f32.mrf.mxu0
      %v1761 = vadd.f32 0.0, %v1760
      %v1762 = vpop.f32.mrf.mxu0
      %1763 = vmatprep.mubr.f32.mxu0 0.0
      %1764 = vmatmul.mubr.f32.gmra.mxu0 %v1539
      %v1765 = vpop.f32.mrf.mxu0
      %v1766 = vadd.f32 0.0, %v1765
      %v1767 = vpop.f32.mrf.mxu0
      %1768 = vdwg.mxu0
      %v1769 = vadd.f32 %v1377, %v1611
      %v1770 = vadd.f32 %v1382, %v1616
      %v1771 = vadd.f32 %v1387, %v1621
      %v1772 = vadd.f32 %v1392, %v1626
      %v1773 = vadd.f32 %v1397, %v1631
      %v1774 = vadd.f32 %v1402, %v1636
      %v1775 = vadd.f32 %v1407, %v1641
      %v1776 = vadd.f32 %v1412, %v1646
      %v1777 = vadd.f32 %v1417, %v1651
      %v1778 = vadd.f32 %v1422, %v1656
      %v1779 = vadd.f32 %v1427, %v1661
      %v1780 = vadd.f32 %v1432, %v1666
      %v1781 = vadd.f32 %v1437, %v1671
      %v1782 = vadd.f32 %v1442, %v1676
      %v1783 = vadd.f32 %v1447, %v1681
      %v1784 = vadd.f32 %v1452, %v1686
      %v1785 = vadd.f32 %v1457, %v1691
      %v1786 = vadd.f32 %v1462, %v1696
      %v1787 = vadd.f32 %v1467, %v1701
      %v1788 = vadd.f32 %v1472, %v1706
      %v1789 = vadd.f32 %v1477, %v1711
      %v1790 = vadd.f32 %v1482, %v1716
      %v1791 = vadd.f32 %v1487, %v1721
      %v1792 = vadd.f32 %v1492, %v1726
      %v1793 = vadd.f32 %v1497, %v1731
      %v1794 = vadd.f32 %v1502, %v1736
      %v1795 = vadd.f32 %v1507, %v1741
      %v1796 = vadd.f32 %v1512, %v1746
      %v1797 = vadd.f32 %v1517, %v1751
      %v1798 = vadd.f32 %v1522, %v1756
      %v1799 = vadd.f32 %v1527, %v1761
      %v1800 = vadd.f32 %v1532, %v1766
      %v1801 = vsel %vm279, %v1769, 0.0
      %v1802 = vsel %vm279, %v1770, 0.0
      %v1803 = vadd.f32 %v1801, %v1802
      %v1804 = vsel %vm279, %v1771, 0.0
      %v1805 = vadd.f32 %v1803, %v1804
      %v1806 = vsel %vm279, %v1772, 0.0
      %v1807 = vadd.f32 %v1805, %v1806
      %v1808 = vsel %vm279, %v1773, 0.0
      %v1809 = vadd.f32 %v1807, %v1808
      %v1810 = vsel %vm279, %v1774, 0.0
      %v1811 = vadd.f32 %v1809, %v1810
      %v1812 = vsel %vm279, %v1775, 0.0
      %v1813 = vadd.f32 %v1811, %v1812
      %v1814 = vsel %vm279, %v1776, 0.0
      %v1815 = vadd.f32 %v1813, %v1814
      %v1816 = vsel %vm279, %v1777, 0.0
      %v1817 = vadd.f32 %v1815, %v1816
      %v1818 = vsel %vm279, %v1778, 0.0
      %v1819 = vadd.f32 %v1817, %v1818
      %v1820 = vsel %vm279, %v1779, 0.0
      %v1821 = vadd.f32 %v1819, %v1820
      %v1822 = vsel %vm279, %v1780, 0.0
      %v1823 = vadd.f32 %v1821, %v1822
      %v1824 = vsel %vm279, %v1781, 0.0
      %v1825 = vadd.f32 %v1823, %v1824
      %v1826 = vsel %vm279, %v1782, 0.0
      %v1827 = vadd.f32 %v1825, %v1826
      %v1828 = vsel %vm279, %v1783, 0.0
      %v1829 = vadd.f32 %v1827, %v1828
      %v1830 = vsel %vm279, %v1784, 0.0
      %v1831 = vadd.f32 %v1829, %v1830
      %v1832 = vsel %vm279, %v1785, 0.0
      %v1833 = vadd.f32 %v1831, %v1832
      %v1834 = vsel %vm279, %v1786, 0.0
      %v1835 = vadd.f32 %v1833, %v1834
      %v1836 = vsel %vm279, %v1787, 0.0
      %v1837 = vadd.f32 %v1835, %v1836
      %v1838 = vsel %vm279, %v1788, 0.0
      %v1839 = vadd.f32 %v1837, %v1838
      %v1840 = vsel %vm279, %v1789, 0.0
      %v1841 = vadd.f32 %v1839, %v1840
      %v1842 = vsel %vm279, %v1790, 0.0
      %v1843 = vadd.f32 %v1841, %v1842
      %v1844 = vsel %vm279, %v1791, 0.0
      %v1845 = vadd.f32 %v1843, %v1844
      %v1846 = vsel %vm279, %v1792, 0.0
      %v1847 = vadd.f32 %v1845, %v1846
      %v1848 = vsel %vm279, %v1793, 0.0
      %v1849 = vadd.f32 %v1847, %v1848
      %v1850 = vsel %vm279, %v1794, 0.0
      %v1851 = vadd.f32 %v1849, %v1850
      %v1852 = vsel %vm279, %v1795, 0.0
      %v1853 = vadd.f32 %v1851, %v1852
      %v1854 = vsel %vm279, %v1796, 0.0
      %v1855 = vadd.f32 %v1853, %v1854
      %v1856 = vsel %vm279, %v1797, 0.0
      %v1857 = vadd.f32 %v1855, %v1856
      %v1858 = vsel %vm279, %v1798, 0.0
      %v1859 = vadd.f32 %v1857, %v1858
      %v1860 = vsel %vm279, %v1799, 0.0
      %v1861 = vadd.f32 %v1859, %v1860
      %v1862 = vsel %vm279, %v1800, 0.0
      %v1863 = vadd.f32 %v1861, %v1862
      %v1864 = vrot.slane %v1863, 4
      %v1865 = vadd.f32 %v1863, %v1864
      %v1866 = vrot.slane %v1865, 2
      %v1867 = vadd.f32 %v1865, %v1866
      %v1868 = vrot.slane %v1867, 1
      %v1869 = vadd.f32 %v1867, %v1868
      %v1870 = vmul.f32 %v1769, %v1769
      %v1871 = vmul.f32 %v1770, %v1770
      %v1872 = vmul.f32 %v1771, %v1771
      %v1873 = vmul.f32 %v1772, %v1772
      %v1874 = vmul.f32 %v1773, %v1773
      %v1875 = vmul.f32 %v1774, %v1774
      %v1876 = vmul.f32 %v1775, %v1775
      %v1877 = vmul.f32 %v1776, %v1776
      %v1878 = vmul.f32 %v1777, %v1777
      %v1879 = vmul.f32 %v1778, %v1778
      %v1880 = vmul.f32 %v1779, %v1779
      %v1881 = vmul.f32 %v1780, %v1780
      %v1882 = vmul.f32 %v1781, %v1781
      %v1883 = vmul.f32 %v1782, %v1782
      %v1884 = vmul.f32 %v1783, %v1783
      %v1885 = vmul.f32 %v1784, %v1784
      %v1886 = vmul.f32 %v1785, %v1785
      %v1887 = vmul.f32 %v1786, %v1786
      %v1888 = vmul.f32 %v1787, %v1787
      %v1889 = vmul.f32 %v1788, %v1788
      %v1890 = vmul.f32 %v1789, %v1789
      %v1891 = vmul.f32 %v1790, %v1790
      %v1892 = vmul.f32 %v1791, %v1791
      %v1893 = vmul.f32 %v1792, %v1792
      %v1894 = vmul.f32 %v1793, %v1793
      %v1895 = vmul.f32 %v1794, %v1794
      %v1896 = vmul.f32 %v1795, %v1795
      %v1897 = vmul.f32 %v1796, %v1796
      %v1898 = vmul.f32 %v1797, %v1797
      %v1899 = vmul.f32 %v1798, %v1798
      %v1900 = vmul.f32 %v1799, %v1799
      %v1901 = vmul.f32 %v1800, %v1800
      %v1902 = vsel %vm279, %v1870, 0.0
      %v1903 = vsel %vm279, %v1871, 0.0
      %v1904 = vadd.f32 %v1902, %v1903
      %v1905 = vsel %vm279, %v1872, 0.0
      %v1906 = vadd.f32 %v1904, %v1905
      %v1907 = vsel %vm279, %v1873, 0.0
      %v1908 = vadd.f32 %v1906, %v1907
      %v1909 = vsel %vm279, %v1874, 0.0
      %v1910 = vadd.f32 %v1908, %v1909
      %v1911 = vsel %vm279, %v1875, 0.0
      %v1912 = vadd.f32 %v1910, %v1911
      %v1913 = vsel %vm279, %v1876, 0.0
      %v1914 = vadd.f32 %v1912, %v1913
      %v1915 = vsel %vm279, %v1877, 0.0
      %v1916 = vadd.f32 %v1914, %v1915
      %v1917 = vsel %vm279, %v1878, 0.0
      %v1918 = vadd.f32 %v1916, %v1917
      %v1919 = vsel %vm279, %v1879, 0.0
      %v1920 = vadd.f32 %v1918, %v1919
      %v1921 = vsel %vm279, %v1880, 0.0
      %v1922 = vadd.f32 %v1920, %v1921
      %v1923 = vsel %vm279, %v1881, 0.0
      %v1924 = vadd.f32 %v1922, %v1923
      %v1925 = vsel %vm279, %v1882, 0.0
      %v1926 = vadd.f32 %v1924, %v1925
      %v1927 = vsel %vm279, %v1883, 0.0
      %v1928 = vadd.f32 %v1926, %v1927
      %v1929 = vsel %vm279, %v1884, 0.0
      %v1930 = vadd.f32 %v1928, %v1929
      %v1931 = vsel %vm279, %v1885, 0.0
      %v1932 = vadd.f32 %v1930, %v1931
      %v1933 = vsel %vm279, %v1886, 0.0
      %v1934 = vadd.f32 %v1932, %v1933
      %v1935 = vsel %vm279, %v1887, 0.0
      %v1936 = vadd.f32 %v1934, %v1935
      %v1937 = vsel %vm279, %v1888, 0.0
      %v1938 = vadd.f32 %v1936, %v1937
      %v1939 = vsel %vm279, %v1889, 0.0
      %v1940 = vadd.f32 %v1938, %v1939
      %v1941 = vsel %vm279, %v1890, 0.0
      %v1942 = vadd.f32 %v1940, %v1941
      %v1943 = vsel %vm279, %v1891, 0.0
      %v1944 = vadd.f32 %v1942, %v1943
      %v1945 = vsel %vm279, %v1892, 0.0
      %v1946 = vadd.f32 %v1944, %v1945
      %v1947 = vsel %vm279, %v1893, 0.0
      %v1948 = vadd.f32 %v1946, %v1947
      %v1949 = vsel %vm279, %v1894, 0.0
      %v1950 = vadd.f32 %v1948, %v1949
      %v1951 = vsel %vm279, %v1895, 0.0
      %v1952 = vadd.f32 %v1950, %v1951
      %v1953 = vsel %vm279, %v1896, 0.0
      %v1954 = vadd.f32 %v1952, %v1953
      %v1955 = vsel %vm279, %v1897, 0.0
      %v1956 = vadd.f32 %v1954, %v1955
      %v1957 = vsel %vm279, %v1898, 0.0
      %v1958 = vadd.f32 %v1956, %v1957
      %v1959 = vsel %vm279, %v1899, 0.0
      %v1960 = vadd.f32 %v1958, %v1959
      %v1961 = vsel %vm279, %v1900, 0.0
      %v1962 = vadd.f32 %v1960, %v1961
      %v1963 = vsel %vm279, %v1901, 0.0
      %v1964 = vadd.f32 %v1962, %v1963
      %v1965 = vrot.slane %v1964, 4
      %v1966 = vadd.f32 %v1964, %v1965
      %v1967 = vrot.slane %v1966, 2
      %v1968 = vadd.f32 %v1966, %v1967
      %v1969 = vrot.slane %v1968, 1
      %v1970 = vadd.f32 %v1968, %v1969
      %v1971 = vmul.f32 %v1869, 0.00390625
      %v1972 = vmul.f32 %v1970, 0.00390625
      %v1973 = vmul.f32 %v1971, %v1971
      %v1974 = vsub.f32 %v1972, %v1973
      %v1975 = vmax.f32 %v1974, 0.0
      %v1976 = vadd.f32 %v1975, 1e-05
      %v1977 = vrsqrt.pop %v1976
      %v1978 = vld [vmem:[%s2] sm:$0x1]
      %v1979 = vmul.f32 %v1977, %v1978
      %v1980 = vsub.f32 %v1769, %v1971
      %v1981 = vsub.f32 %v1770, %v1971
      %v1982 = vsub.f32 %v1771, %v1971
      %v1983 = vsub.f32 %v1772, %v1971
      %v1984 = vsub.f32 %v1773, %v1971
      %v1985 = vsub.f32 %v1774, %v1971
      %v1986 = vsub.f32 %v1775, %v1971
      %v1987 = vsub.f32 %v1776, %v1971
      %v1988 = vsub.f32 %v1777, %v1971
      %v1989 = vsub.f32 %v1778, %v1971
      %v1990 = vsub.f32 %v1779, %v1971
      %v1991 = vsub.f32 %v1780, %v1971
      %v1992 = vsub.f32 %v1781, %v1971
      %v1993 = vsub.f32 %v1782, %v1971
      %v1994 = vsub.f32 %v1783, %v1971
      %v1995 = vsub.f32 %v1784, %v1971
      %v1996 = vsub.f32 %v1785, %v1971
      %v1997 = vsub.f32 %v1786, %v1971
      %v1998 = vsub.f32 %v1787, %v1971
      %v1999 = vsub.f32 %v1788, %v1971
      %v2000 = vsub.f32 %v1789, %v1971
      %v2001 = vsub.f32 %v1790, %v1971
      %v2002 = vsub.f32 %v1791, %v1971
      %v2003 = vsub.f32 %v1792, %v1971
      %v2004 = vsub.f32 %v1793, %v1971
      %v2005 = vsub.f32 %v1794, %v1971
      %v2006 = vsub.f32 %v1795, %v1971
      %v2007 = vsub.f32 %v1796, %v1971
      %v2008 = vsub.f32 %v1797, %v1971
      %v2009 = vsub.f32 %v1798, %v1971
      %v2010 = vsub.f32 %v1799, %v1971
      %v2011 = vsub.f32 %v1800, %v1971
      %v2012 = vlaneseq
      %v2013 = vshrl.u32 %v2012, 7
      %v2014 = vsub.s32 0, %v2013
      %v2015 = vrot.slane %v1979, %v2014
      %v2016 = vmul.f32 %v1980, %v2015
      %v2017 = vmul.f32 %v1981, %v2015
      %v2018 = vmul.f32 %v1982, %v2015
      %v2019 = vmul.f32 %v1983, %v2015
      %v2020 = vmul.f32 %v1984, %v2015
      %v2021 = vmul.f32 %v1985, %v2015
      %v2022 = vmul.f32 %v1986, %v2015
      %v2023 = vmul.f32 %v1987, %v2015
      %v2024 = vmul.f32 %v1988, %v2015
      %v2025 = vmul.f32 %v1989, %v2015
      %v2026 = vmul.f32 %v1990, %v2015
      %v2027 = vmul.f32 %v1991, %v2015
      %v2028 = vmul.f32 %v1992, %v2015
      %v2029 = vmul.f32 %v1993, %v2015
      %v2030 = vmul.f32 %v1994, %v2015
      %v2031 = vmul.f32 %v1995, %v2015
      %v2032 = vmul.f32 %v1996, %v2015
      %v2033 = vmul.f32 %v1997, %v2015
      %v2034 = vmul.f32 %v1998, %v2015
      %v2035 = vmul.f32 %v1999, %v2015
      %v2036 = vmul.f32 %v2000, %v2015
      %v2037 = vmul.f32 %v2001, %v2015
      %v2038 = vmul.f32 %v2002, %v2015
      %v2039 = vmul.f32 %v2003, %v2015
      %v2040 = vmul.f32 %v2004, %v2015
      %v2041 = vmul.f32 %v2005, %v2015
      %v2042 = vmul.f32 %v2006, %v2015
      %v2043 = vmul.f32 %v2007, %v2015
      %v2044 = vmul.f32 %v2008, %v2015
      %v2045 = vmul.f32 %v2009, %v2015
      %v2046 = vmul.f32 %v2010, %v2015
      %v2047 = vmul.f32 %v2011, %v2015
      %v2048 = vld [vmem:[%s3] sm:$0x1]
      %v2050 = vlaneseq
      %v2051 = vshrl.u32 %v2050, 7
      %v2052 = vsub.s32 0, %v2051
      %v2053 = vrot.slane %v2048, %v2052
      %v2055 = vadd.f32 %v2016, %v2053
      %v2056 = vadd.f32 %v2017, %v2053
      %v2057 = vadd.f32 %v2018, %v2053
      %v2058 = vadd.f32 %v2019, %v2053
      %v2059 = vadd.f32 %v2020, %v2053
      %v2060 = vadd.f32 %v2021, %v2053
      %v2061 = vadd.f32 %v2022, %v2053
      %v2062 = vadd.f32 %v2023, %v2053
      %v2063 = vadd.f32 %v2024, %v2053
      %v2064 = vadd.f32 %v2025, %v2053
      %v2065 = vadd.f32 %v2026, %v2053
      %v2066 = vadd.f32 %v2027, %v2053
      %v2067 = vadd.f32 %v2028, %v2053
      %v2068 = vadd.f32 %v2029, %v2053
      %v2069 = vadd.f32 %v2030, %v2053
      %v2070 = vadd.f32 %v2031, %v2053
      %v2071 = vadd.f32 %v2032, %v2053
      %v2072 = vadd.f32 %v2033, %v2053
      %v2073 = vadd.f32 %v2034, %v2053
      %v2074 = vadd.f32 %v2035, %v2053
      %v2075 = vadd.f32 %v2036, %v2053
      %v2076 = vadd.f32 %v2037, %v2053
      %v2077 = vadd.f32 %v2038, %v2053
      %v2078 = vadd.f32 %v2039, %v2053
      %v2079 = vadd.f32 %v2040, %v2053
      %v2080 = vadd.f32 %v2041, %v2053
      %v2081 = vadd.f32 %v2042, %v2053
      %v2082 = vadd.f32 %v2043, %v2053
      %v2083 = vadd.f32 %v2044, %v2053
      %v2084 = vadd.f32 %v2045, %v2053
      %v2085 = vadd.f32 %v2046, %v2053
      %v2086 = vadd.f32 %v2047, %v2053
      %v2087 = vmax.f32 %v2055, 0.0
      %v2088 = vmax.f32 %v2056, 0.0
      %v2089 = vmax.f32 %v2057, 0.0
      %v2090 = vmax.f32 %v2058, 0.0
      %v2091 = vmax.f32 %v2059, 0.0
      %v2092 = vmax.f32 %v2060, 0.0
      %v2093 = vmax.f32 %v2061, 0.0
      %v2094 = vmax.f32 %v2062, 0.0
      %v2095 = vmax.f32 %v2063, 0.0
      %v2096 = vmax.f32 %v2064, 0.0
      %v2097 = vmax.f32 %v2065, 0.0
      %v2098 = vmax.f32 %v2066, 0.0
      %v2099 = vmax.f32 %v2067, 0.0
      %v2100 = vmax.f32 %v2068, 0.0
      %v2101 = vmax.f32 %v2069, 0.0
      %v2102 = vmax.f32 %v2070, 0.0
      %v2103 = vmax.f32 %v2071, 0.0
      %v2104 = vmax.f32 %v2072, 0.0
      %v2105 = vmax.f32 %v2073, 0.0
      %v2106 = vmax.f32 %v2074, 0.0
      %v2107 = vmax.f32 %v2075, 0.0
      %v2108 = vmax.f32 %v2076, 0.0
      %v2109 = vmax.f32 %v2077, 0.0
      %v2110 = vmax.f32 %v2078, 0.0
      %v2111 = vmax.f32 %v2079, 0.0
      %v2112 = vmax.f32 %v2080, 0.0
      %v2113 = vmax.f32 %v2081, 0.0
      %v2114 = vmax.f32 %v2082, 0.0
      %v2115 = vmax.f32 %v2083, 0.0
      %v2116 = vmax.f32 %v2084, 0.0
      %v2117 = vmax.f32 %v2085, 0.0
      %v2118 = vmax.f32 %v2086, 0.0
      %2119 = vst.msk [vmem:[%s357 + $0x1] sm:$0xff] %vm279, %v2087
      %2120 = vst.msk [vmem:[%s357 + $0x9] sm:$0xff] %vm279, %v2088
      %2121 = vst.msk [vmem:[%s357 + $0x19] sm:$0xff] %vm279, %v2089
      %2122 = vst.msk [vmem:[%s357 + $0x21] sm:$0xff] %vm279, %v2090
      %2123 = vst.msk [vmem:[%s357 + $0x31] sm:$0xff] %vm279, %v2091
      %2124 = vst.msk [vmem:[%s357 + $0x39] sm:$0xff] %vm279, %v2092
      %2125 = vst.msk [vmem:[%s357 + $0x49] sm:$0xff] %vm279, %v2093
      %2126 = vst.msk [vmem:[%s357 + $0x51] sm:$0xff] %vm279, %v2094
      %2127 = vst.msk [vmem:[%s357 + $0x61] sm:$0xff] %vm279, %v2095
      %2128 = vst.msk [vmem:[%s357 + $0x69] sm:$0xff] %vm279, %v2096
      %2129 = vst.msk [vmem:[%s357 + $0x79] sm:$0xff] %vm279, %v2097
      %2130 = vst.msk [vmem:[%s357 + $0x81] sm:$0xff] %vm279, %v2098
      %2131 = vst.msk [vmem:[%s357 + $0x91] sm:$0xff] %vm279, %v2099
      %2132 = vst.msk [vmem:[%s357 + $0x99] sm:$0xff] %vm279, %v2100
      %2133 = vst.msk [vmem:[%s357 + $0xa9] sm:$0xff] %vm279, %v2101
      %2134 = vst.msk [vmem:[%s357 + $0xb1] sm:$0xff] %vm279, %v2102
      %2135 = vst.msk [vmem:[%s357 + $0xc1] sm:$0xff] %vm279, %v2103
      %2136 = vst.msk [vmem:[%s357 + $0xc9] sm:$0xff] %vm279, %v2104
      %2137 = vst.msk [vmem:[%s357 + $0xd9] sm:$0xff] %vm279, %v2105
      %2138 = vst.msk [vmem:[%s357 + $0xe1] sm:$0xff] %vm279, %v2106
      %2139 = vst.msk [vmem:[%s357 + $0xf1] sm:$0xff] %vm279, %v2107
      %2140 = vst.msk [vmem:[%s357 + $0xf9] sm:$0xff] %vm279, %v2108
      %2141 = vst.msk [vmem:[%s357 + $0x109] sm:$0xff] %vm279, %v2109
      %2142 = vst.msk [vmem:[%s357 + $0x111] sm:$0xff] %vm279, %v2110
      %2143 = vst.msk [vmem:[%s357 + $0x121] sm:$0xff] %vm279, %v2111
      %2144 = vst.msk [vmem:[%s357 + $0x129] sm:$0xff] %vm279, %v2112
      %2145 = vst.msk [vmem:[%s357 + $0x139] sm:$0xff] %vm279, %v2113
      %2146 = vst.msk [vmem:[%s357 + $0x141] sm:$0xff] %vm279, %v2114
      %2147 = vst.msk [vmem:[%s357 + $0x151] sm:$0xff] %vm279, %v2115
      %2148 = vst.msk [vmem:[%s357 + $0x159] sm:$0xff] %vm279, %v2116
      %2149 = vst.msk [vmem:[%s357 + $0x169] sm:$0xff] %vm279, %v2117
      %2150 = vst.msk [vmem:[%s357 + $0x171] sm:$0xff] %vm279, %v2118
      %v2151 = vld [vmem:[#allocation2] sm:$0xff]
      %v2152 = vld [vmem:[#allocation2 + $0x8] sm:$0xff]
      %v2153 = vld [vmem:[#allocation2 + $0x10] sm:$0x3]
      %v2154 = vld [vmem:[#allocation2 + $0x18] sm:$0xff]
      %v2155 = vld [vmem:[#allocation2 + $0x20] sm:$0xff]
      %v2156 = vld [vmem:[#allocation2 + $0x28] sm:$0x3]
      %v2157 = vld [vmem:[#allocation2 + $0x30] sm:$0xff]
      %v2158 = vld [vmem:[#allocation2 + $0x38] sm:$0xff]
      %v2159 = vld [vmem:[#allocation2 + $0x40] sm:$0x3]
      %v2160 = vld [vmem:[#allocation2 + $0x48] sm:$0xff]
      %v2161 = vld [vmem:[#allocation2 + $0x50] sm:$0xff]
      %v2162 = vld [vmem:[#allocation2 + $0x58] sm:$0x3]
      %v2163 = vld [vmem:[#allocation2 + $0x60] sm:$0xff]
      %v2164 = vld [vmem:[#allocation2 + $0x68] sm:$0xff]
      %v2165 = vld [vmem:[#allocation2 + $0x70] sm:$0x3]
      %v2166 = vld [vmem:[#allocation2 + $0x78] sm:$0xff]
      %v2167 = vld [vmem:[#allocation2 + $0x80] sm:$0xff]
      %v2168 = vld [vmem:[#allocation2 + $0x88] sm:$0x3]
      %v2169 = vld [vmem:[#allocation2 + $0x90] sm:$0xff]
      %v2170 = vld [vmem:[#allocation2 + $0x98] sm:$0xff]
      %v2171 = vld [vmem:[#allocation2 + $0xa0] sm:$0x3]
      %v2172 = vld [vmem:[#allocation2 + $0xa8] sm:$0xff]
      %v2173 = vld [vmem:[#allocation2 + $0xb0] sm:$0xff]
      %v2174 = vld [vmem:[#allocation2 + $0xb8] sm:$0x3]
      %v2175 = vld [vmem:[#allocation2 + $0xc0] sm:$0xff]
      %v2176 = vld [vmem:[#allocation2 + $0xc8] sm:$0xff]
      %v2177 = vld [vmem:[#allocation2 + $0xd0] sm:$0x3]
      %v2178 = vld [vmem:[#allocation2 + $0xd8] sm:$0xff]
      %v2179 = vld [vmem:[#allocation2 + $0xe0] sm:$0xff]
      %v2180 = vld [vmem:[#allocation2 + $0xe8] sm:$0x3]
      %v2181 = vld [vmem:[#allocation2 + $0xf0] sm:$0xff]
      %v2182 = vld [vmem:[#allocation2 + $0xf8] sm:$0xff]
      %v2183 = vld [vmem:[#allocation2 + $0x100] sm:$0x3]
      %v2184 = vld [vmem:[#allocation2 + $0x108] sm:$0xff]
      %v2185 = vld [vmem:[#allocation2 + $0x110] sm:$0xff]
      %v2186 = vld [vmem:[#allocation2 + $0x118] sm:$0x3]
      %v2187 = vld [vmem:[#allocation2 + $0x120] sm:$0xff]
      %v2188 = vld [vmem:[#allocation2 + $0x128] sm:$0xff]
      %v2189 = vld [vmem:[#allocation2 + $0x130] sm:$0x3]
      %v2190 = vld [vmem:[#allocation2 + $0x138] sm:$0xff]
      %v2191 = vld [vmem:[#allocation2 + $0x140] sm:$0xff]
      %v2192 = vld [vmem:[#allocation2 + $0x148] sm:$0x3]
      %v2193 = vld [vmem:[#allocation2 + $0x150] sm:$0xff]
      %v2194 = vld [vmem:[#allocation2 + $0x158] sm:$0xff]
      %v2195 = vld [vmem:[#allocation2 + $0x160] sm:$0x3]
      %v2196 = vld [vmem:[#allocation2 + $0x168] sm:$0xff]
      %v2197 = vld [vmem:[#allocation2 + $0x170] sm:$0xff]
      %v2198 = vld [vmem:[#allocation2 + $0x178] sm:$0x3]
      %v2199 = vld [vmem:[#allocation2 + $0x180] sm:$0xff]
      %v2200 = vld [vmem:[#allocation2 + $0x188] sm:$0xff]
      %v2201 = vld [vmem:[#allocation2 + $0x190] sm:$0x3]
      %v2202 = vld [vmem:[#allocation2 + $0x198] sm:$0xff]
      %v2203 = vld [vmem:[#allocation2 + $0x1a0] sm:$0xff]
      %v2204 = vld [vmem:[#allocation2 + $0x1a8] sm:$0x3]
      %v2259 = vrot.slane %v2151, 1
      %v2260 = vrot.slane %v2152, 1
      %v2261 = vsel %vm498, %v2259, %v2260
      %v2262 = vrot.slane %v2153, 1
      %v2263 = vsel %vm498, %v2260, %v2262
      %v2264 = vrot.slane %v2154, 1
      %v2265 = vrot.slane %v2155, 1
      %v2266 = vsel %vm498, %v2264, %v2265
      %v2267 = vrot.slane %v2156, 1
      %v2268 = vsel %vm498, %v2265, %v2267
      %v2269 = vrot.slane %v2157, 1
      %v2270 = vrot.slane %v2158, 1
      %v2271 = vsel %vm498, %v2269, %v2270
      %v2272 = vrot.slane %v2159, 1
      %v2273 = vsel %vm498, %v2270, %v2272
      %v2274 = vrot.slane %v2160, 1
      %v2275 = vrot.slane %v2161, 1
      %v2276 = vsel %vm498, %v2274, %v2275
      %v2277 = vrot.slane %v2162, 1
      %v2278 = vsel %vm498, %v2275, %v2277
      %v2279 = vrot.slane %v2163, 1
      %v2280 = vrot.slane %v2164, 1
      %v2281 = vsel %vm498, %v2279, %v2280
      %v2282 = vrot.slane %v2165, 1
      %v2283 = vsel %vm498, %v2280, %v2282
      %v2284 = vrot.slane %v2166, 1
      %v2285 = vrot.slane %v2167, 1
      %v2286 = vsel %vm498, %v2284, %v2285
      %v2287 = vrot.slane %v2168, 1
      %v2288 = vsel %vm498, %v2285, %v2287
      %v2289 = vrot.slane %v2169, 1
      %v2290 = vrot.slane %v2170, 1
      %v2291 = vsel %vm498, %v2289, %v2290
      %v2292 = vrot.slane %v2171, 1
      %v2293 = vsel %vm498, %v2290, %v2292
      %v2294 = vrot.slane %v2172, 1
      %v2295 = vrot.slane %v2173, 1
      %v2296 = vsel %vm498, %v2294, %v2295
      %v2297 = vrot.slane %v2174, 1
      %v2298 = vsel %vm498, %v2295, %v2297
      %v2299 = vrot.slane %v2175, 1
      %v2300 = vrot.slane %v2176, 1
      %v2301 = vsel %vm498, %v2299, %v2300
      %v2302 = vrot.slane %v2177, 1
      %v2303 = vsel %vm498, %v2300, %v2302
      %v2304 = vrot.slane %v2178, 1
      %v2305 = vrot.slane %v2179, 1
      %v2306 = vsel %vm498, %v2304, %v2305
      %v2307 = vrot.slane %v2180, 1
      %v2308 = vsel %vm498, %v2305, %v2307
      %v2309 = vrot.slane %v2181, 1
      %v2310 = vrot.slane %v2182, 1
      %v2311 = vsel %vm498, %v2309, %v2310
      %v2312 = vrot.slane %v2183, 1
      %v2313 = vsel %vm498, %v2310, %v2312
      %v2314 = vrot.slane %v2184, 1
      %v2315 = vrot.slane %v2185, 1
      %v2316 = vsel %vm498, %v2314, %v2315
      %v2317 = vrot.slane %v2186, 1
      %v2318 = vsel %vm498, %v2315, %v2317
      %v2319 = vrot.slane %v2187, 1
      %v2320 = vrot.slane %v2188, 1
      %v2321 = vsel %vm498, %v2319, %v2320
      %v2322 = vrot.slane %v2189, 1
      %v2323 = vsel %vm498, %v2320, %v2322
      %v2324 = vrot.slane %v2190, 1
      %v2325 = vrot.slane %v2191, 1
      %v2326 = vsel %vm498, %v2324, %v2325
      %v2327 = vrot.slane %v2192, 1
      %v2328 = vsel %vm498, %v2325, %v2327
      %v2329 = vrot.slane %v2193, 1
      %v2330 = vrot.slane %v2194, 1
      %v2331 = vsel %vm498, %v2329, %v2330
      %v2332 = vrot.slane %v2195, 1
      %v2333 = vsel %vm498, %v2330, %v2332
      %v2334 = vrot.slane %v2196, 1
      %v2335 = vrot.slane %v2197, 1
      %v2336 = vsel %vm498, %v2334, %v2335
      %v2337 = vrot.slane %v2198, 1
      %v2338 = vsel %vm498, %v2335, %v2337
      %v2339 = vrot.slane %v2199, 1
      %v2340 = vrot.slane %v2200, 1
      %v2341 = vsel %vm498, %v2339, %v2340
      %v2342 = vrot.slane %v2201, 1
      %v2343 = vsel %vm498, %v2340, %v2342
      %v2344 = vrot.slane %v2202, 1
      %v2345 = vrot.slane %v2203, 1
      %v2346 = vsel %vm498, %v2344, %v2345
      %v2347 = vrot.slane %v2204, 1
      %v2348 = vsel %vm498, %v2345, %v2347
      %2349 = vrot.lane.b32.xlu0 %v2261, 4
      %v2350 = vpop.permute.xlu0 %2349
      %2351 = vrot.lane.b32.xlu0 %v2263, 4
      %v2352 = vpop.permute.xlu0 %2351
      %2353 = vrot.lane.b32.xlu0 %v2266, 4
      %v2354 = vpop.permute.xlu0 %2353
      %2355 = vrot.lane.b32.xlu0 %v2268, 4
      %v2356 = vpop.permute.xlu0 %2355
      %2357 = vrot.lane.b32.xlu0 %v2271, 4
      %v2358 = vpop.permute.xlu0 %2357
      %2359 = vrot.lane.b32.xlu0 %v2273, 4
      %v2360 = vpop.permute.xlu0 %2359
      %2361 = vrot.lane.b32.xlu0 %v2276, 4
      %v2362 = vpop.permute.xlu0 %2361
      %2363 = vrot.lane.b32.xlu0 %v2278, 4
      %v2364 = vpop.permute.xlu0 %2363
      %2365 = vrot.lane.b32.xlu0 %v2281, 4
      %v2366 = vpop.permute.xlu0 %2365
      %2367 = vrot.lane.b32.xlu0 %v2283, 4
      %v2368 = vpop.permute.xlu0 %2367
      %2369 = vrot.lane.b32.xlu0 %v2286, 4
      %v2370 = vpop.permute.xlu0 %2369
      %2371 = vrot.lane.b32.xlu0 %v2288, 4
      %v2372 = vpop.permute.xlu0 %2371
      %2373 = vrot.lane.b32.xlu0 %v2291, 4
      %v2374 = vpop.permute.xlu0 %2373
      %2375 = vrot.lane.b32.xlu0 %v2293, 4
      %v2376 = vpop.permute.xlu0 %2375
      %2377 = vrot.lane.b32.xlu0 %v2296, 4
      %v2378 = vpop.permute.xlu0 %2377
      %2379 = vrot.lane.b32.xlu0 %v2298, 4
      %v2380 = vpop.permute.xlu0 %2379
      %2381 = vrot.lane.b32.xlu0 %v2301, 4
      %v2382 = vpop.permute.xlu0 %2381
      %2383 = vrot.lane.b32.xlu0 %v2303, 4
      %v2384 = vpop.permute.xlu0 %2383
      %2385 = vrot.lane.b32.xlu0 %v2306, 4
      %v2386 = vpop.permute.xlu0 %2385
      %2387 = vrot.lane.b32.xlu0 %v2308, 4
      %v2388 = vpop.permute.xlu0 %2387
      %2389 = vrot.lane.b32.xlu0 %v2311, 4
      %v2390 = vpop.permute.xlu0 %2389
      %2391 = vrot.lane.b32.xlu0 %v2313, 4
      %v2392 = vpop.permute.xlu0 %2391
      %2393 = vrot.lane.b32.xlu0 %v2316, 4
      %v2394 = vpop.permute.xlu0 %2393
      %2395 = vrot.lane.b32.xlu0 %v2318, 4
      %v2396 = vpop.permute.xlu0 %2395
      %2397 = vrot.lane.b32.xlu0 %v2321, 4
      %v2398 = vpop.permute.xlu0 %2397
      %2399 = vrot.lane.b32.xlu0 %v2323, 4
      %v2400 = vpop.permute.xlu0 %2399
      %2401 = vrot.lane.b32.xlu0 %v2326, 4
      %v2402 = vpop.permute.xlu0 %2401
      %2403 = vrot.lane.b32.xlu0 %v2328, 4
      %v2404 = vpop.permute.xlu0 %2403
      %2405 = vrot.lane.b32.xlu0 %v2331, 4
      %v2406 = vpop.permute.xlu0 %2405
      %2407 = vrot.lane.b32.xlu0 %v2333, 4
      %v2408 = vpop.permute.xlu0 %2407
      %2409 = vrot.lane.b32.xlu0 %v2336, 4
      %v2410 = vpop.permute.xlu0 %2409
      %2411 = vrot.lane.b32.xlu0 %v2338, 4
      %v2412 = vpop.permute.xlu0 %2411
      %2413 = vrot.lane.b32.xlu0 %v2341, 4
      %v2414 = vpop.permute.xlu0 %2413
      %2415 = vrot.lane.b32.xlu0 %v2343, 4
      %v2416 = vpop.permute.xlu0 %2415
      %2417 = vrot.lane.b32.xlu0 %v2346, 4
      %v2418 = vpop.permute.xlu0 %2417
      %2419 = vrot.lane.b32.xlu0 %v2348, 4
      %v2420 = vpop.permute.xlu0 %2419
      %v2457 = vrot.slane %v2151, 2
      %v2458 = vrot.slane %v2152, 2
      %v2459 = vsel %vm697, %v2457, %v2458
      %v2460 = vrot.slane %v2153, 2
      %v2461 = vsel %vm697, %v2458, %v2460
      %v2462 = vrot.slane %v2154, 2
      %v2463 = vrot.slane %v2155, 2
      %v2464 = vsel %vm697, %v2462, %v2463
      %v2465 = vrot.slane %v2156, 2
      %v2466 = vsel %vm697, %v2463, %v2465
      %v2467 = vrot.slane %v2157, 2
      %v2468 = vrot.slane %v2158, 2
      %v2469 = vsel %vm697, %v2467, %v2468
      %v2470 = vrot.slane %v2159, 2
      %v2471 = vsel %vm697, %v2468, %v2470
      %v2472 = vrot.slane %v2160, 2
      %v2473 = vrot.slane %v2161, 2
      %v2474 = vsel %vm697, %v2472, %v2473
      %v2475 = vrot.slane %v2162, 2
      %v2476 = vsel %vm697, %v2473, %v2475
      %v2477 = vrot.slane %v2163, 2
      %v2478 = vrot.slane %v2164, 2
      %v2479 = vsel %vm697, %v2477, %v2478
      %v2480 = vrot.slane %v2165, 2
      %v2481 = vsel %vm697, %v2478, %v2480
      %v2482 = vrot.slane %v2166, 2
      %v2483 = vrot.slane %v2167, 2
      %v2484 = vsel %vm697, %v2482, %v2483
      %v2485 = vrot.slane %v2168, 2
      %v2486 = vsel %vm697, %v2483, %v2485
      %v2487 = vrot.slane %v2169, 2
      %v2488 = vrot.slane %v2170, 2
      %v2489 = vsel %vm697, %v2487, %v2488
      %v2490 = vrot.slane %v2171, 2
      %v2491 = vsel %vm697, %v2488, %v2490
      %v2492 = vrot.slane %v2172, 2
      %v2493 = vrot.slane %v2173, 2
      %v2494 = vsel %vm697, %v2492, %v2493
      %v2495 = vrot.slane %v2174, 2
      %v2496 = vsel %vm697, %v2493, %v2495
      %v2497 = vrot.slane %v2175, 2
      %v2498 = vrot.slane %v2176, 2
      %v2499 = vsel %vm697, %v2497, %v2498
      %v2500 = vrot.slane %v2177, 2
      %v2501 = vsel %vm697, %v2498, %v2500
      %v2502 = vrot.slane %v2178, 2
      %v2503 = vrot.slane %v2179, 2
      %v2504 = vsel %vm697, %v2502, %v2503
      %v2505 = vrot.slane %v2180, 2
      %v2506 = vsel %vm697, %v2503, %v2505
      %v2507 = vrot.slane %v2181, 2
      %v2508 = vrot.slane %v2182, 2
      %v2509 = vsel %vm697, %v2507, %v2508
      %v2510 = vrot.slane %v2183, 2
      %v2511 = vsel %vm697, %v2508, %v2510
      %v2512 = vrot.slane %v2184, 2
      %v2513 = vrot.slane %v2185, 2
      %v2514 = vsel %vm697, %v2512, %v2513
      %v2515 = vrot.slane %v2186, 2
      %v2516 = vsel %vm697, %v2513, %v2515
      %v2517 = vrot.slane %v2187, 2
      %v2518 = vrot.slane %v2188, 2
      %v2519 = vsel %vm697, %v2517, %v2518
      %v2520 = vrot.slane %v2189, 2
      %v2521 = vsel %vm697, %v2518, %v2520
      %v2522 = vrot.slane %v2190, 2
      %v2523 = vrot.slane %v2191, 2
      %v2524 = vsel %vm697, %v2522, %v2523
      %v2525 = vrot.slane %v2192, 2
      %v2526 = vsel %vm697, %v2523, %v2525
      %v2527 = vrot.slane %v2193, 2
      %v2528 = vrot.slane %v2194, 2
      %v2529 = vsel %vm697, %v2527, %v2528
      %v2530 = vrot.slane %v2195, 2
      %v2531 = vsel %vm697, %v2528, %v2530
      %v2532 = vrot.slane %v2196, 2
      %v2533 = vrot.slane %v2197, 2
      %v2534 = vsel %vm697, %v2532, %v2533
      %v2535 = vrot.slane %v2198, 2
      %v2536 = vsel %vm697, %v2533, %v2535
      %v2537 = vrot.slane %v2199, 2
      %v2538 = vrot.slane %v2200, 2
      %v2539 = vsel %vm697, %v2537, %v2538
      %v2540 = vrot.slane %v2201, 2
      %v2541 = vsel %vm697, %v2538, %v2540
      %v2542 = vrot.slane %v2202, 2
      %v2543 = vrot.slane %v2203, 2
      %v2544 = vsel %vm697, %v2542, %v2543
      %v2545 = vrot.slane %v2204, 2
      %v2546 = vsel %vm697, %v2543, %v2545
      %2547 = vrot.lane.b32.xlu0 %v2459, 8
      %v2548 = vpop.permute.xlu0 %2547
      %2549 = vrot.lane.b32.xlu0 %v2461, 8
      %v2550 = vpop.permute.xlu0 %2549
      %2551 = vrot.lane.b32.xlu0 %v2464, 8
      %v2552 = vpop.permute.xlu0 %2551
      %2553 = vrot.lane.b32.xlu0 %v2466, 8
      %v2554 = vpop.permute.xlu0 %2553
      %2555 = vrot.lane.b32.xlu0 %v2469, 8
      %v2556 = vpop.permute.xlu0 %2555
      %2557 = vrot.lane.b32.xlu0 %v2471, 8
      %v2558 = vpop.permute.xlu0 %2557
      %2559 = vrot.lane.b32.xlu0 %v2474, 8
      %v2560 = vpop.permute.xlu0 %2559
      %2561 = vrot.lane.b32.xlu0 %v2476, 8
      %v2562 = vpop.permute.xlu0 %2561
      %2563 = vrot.lane.b32.xlu0 %v2479, 8
      %v2564 = vpop.permute.xlu0 %2563
      %2565 = vrot.lane.b32.xlu0 %v2481, 8
      %v2566 = vpop.permute.xlu0 %2565
      %2567 = vrot.lane.b32.xlu0 %v2484, 8
      %v2568 = vpop.permute.xlu0 %2567
      %2569 = vrot.lane.b32.xlu0 %v2486, 8
      %v2570 = vpop.permute.xlu0 %2569
      %2571 = vrot.lane.b32.xlu0 %v2489, 8
      %v2572 = vpop.permute.xlu0 %2571
      %2573 = vrot.lane.b32.xlu0 %v2491, 8
      %v2574 = vpop.permute.xlu0 %2573
      %2575 = vrot.lane.b32.xlu0 %v2494, 8
      %v2576 = vpop.permute.xlu0 %2575
      %2577 = vrot.lane.b32.xlu0 %v2496, 8
      %v2578 = vpop.permute.xlu0 %2577
      %2579 = vrot.lane.b32.xlu0 %v2499, 8
      %v2580 = vpop.permute.xlu0 %2579
      %2581 = vrot.lane.b32.xlu0 %v2501, 8
      %v2582 = vpop.permute.xlu0 %2581
      %2583 = vrot.lane.b32.xlu0 %v2504, 8
      %v2584 = vpop.permute.xlu0 %2583
      %2585 = vrot.lane.b32.xlu0 %v2506, 8
      %v2586 = vpop.permute.xlu0 %2585
      %2587 = vrot.lane.b32.xlu0 %v2509, 8
      %v2588 = vpop.permute.xlu0 %2587
      %2589 = vrot.lane.b32.xlu0 %v2511, 8
      %v2590 = vpop.permute.xlu0 %2589
      %2591 = vrot.lane.b32.xlu0 %v2514, 8
      %v2592 = vpop.permute.xlu0 %2591
      %2593 = vrot.lane.b32.xlu0 %v2516, 8
      %v2594 = vpop.permute.xlu0 %2593
      %2595 = vrot.lane.b32.xlu0 %v2519, 8
      %v2596 = vpop.permute.xlu0 %2595
      %2597 = vrot.lane.b32.xlu0 %v2521, 8
      %v2598 = vpop.permute.xlu0 %2597
      %2599 = vrot.lane.b32.xlu0 %v2524, 8
      %v2600 = vpop.permute.xlu0 %2599
      %2601 = vrot.lane.b32.xlu0 %v2526, 8
      %v2602 = vpop.permute.xlu0 %2601
      %2603 = vrot.lane.b32.xlu0 %v2529, 8
      %v2604 = vpop.permute.xlu0 %2603
      %2605 = vrot.lane.b32.xlu0 %v2531, 8
      %v2606 = vpop.permute.xlu0 %2605
      %2607 = vrot.lane.b32.xlu0 %v2534, 8
      %v2608 = vpop.permute.xlu0 %2607
      %2609 = vrot.lane.b32.xlu0 %v2536, 8
      %v2610 = vpop.permute.xlu0 %2609
      %2611 = vrot.lane.b32.xlu0 %v2539, 8
      %v2612 = vpop.permute.xlu0 %2611
      %2613 = vrot.lane.b32.xlu0 %v2541, 8
      %v2614 = vpop.permute.xlu0 %2613
      %2615 = vrot.lane.b32.xlu0 %v2544, 8
      %v2616 = vpop.permute.xlu0 %2615
      %2617 = vrot.lane.b32.xlu0 %v2546, 8
      %v2618 = vpop.permute.xlu0 %2617
      %v2655 = vsel %vm279, %v2151, %v2350
      %v2656 = vsel %vm279, %v2152, %v2352
      %v2657 = vsel %vm279, %v2154, %v2354
      %v2658 = vsel %vm279, %v2155, %v2356
      %v2659 = vsel %vm279, %v2157, %v2358
      %v2660 = vsel %vm279, %v2158, %v2360
      %v2661 = vsel %vm279, %v2160, %v2362
      %v2662 = vsel %vm279, %v2161, %v2364
      %v2663 = vsel %vm279, %v2163, %v2366
      %v2664 = vsel %vm279, %v2164, %v2368
      %v2665 = vsel %vm279, %v2166, %v2370
      %v2666 = vsel %vm279, %v2167, %v2372
      %v2667 = vsel %vm279, %v2169, %v2374
      %v2668 = vsel %vm279, %v2170, %v2376
      %v2669 = vsel %vm279, %v2172, %v2378
      %v2670 = vsel %vm279, %v2173, %v2380
      %v2671 = vsel %vm279, %v2175, %v2382
      %v2672 = vsel %vm279, %v2176, %v2384
      %v2673 = vsel %vm279, %v2178, %v2386
      %v2674 = vsel %vm279, %v2179, %v2388
      %v2675 = vsel %vm279, %v2181, %v2390
      %v2676 = vsel %vm279, %v2182, %v2392
      %v2677 = vsel %vm279, %v2184, %v2394
      %v2678 = vsel %vm279, %v2185, %v2396
      %v2679 = vsel %vm279, %v2187, %v2398
      %v2680 = vsel %vm279, %v2188, %v2400
      %v2681 = vsel %vm279, %v2190, %v2402
      %v2682 = vsel %vm279, %v2191, %v2404
      %v2683 = vsel %vm279, %v2193, %v2406
      %v2684 = vsel %vm279, %v2194, %v2408
      %v2685 = vsel %vm279, %v2196, %v2410
      %v2686 = vsel %vm279, %v2197, %v2412
      %v2687 = vsel %vm279, %v2199, %v2414
      %v2688 = vsel %vm279, %v2200, %v2416
      %v2689 = vsel %vm279, %v2202, %v2418
      %v2690 = vsel %vm279, %v2203, %v2420
      %v2691 = vsel %vm932, %v2655, %v2548
      %v2692 = vsel %vm932, %v2656, %v2550
      %v2693 = vsel %vm932, %v2657, %v2552
      %v2694 = vsel %vm932, %v2658, %v2554
      %v2695 = vsel %vm932, %v2659, %v2556
      %v2696 = vsel %vm932, %v2660, %v2558
      %v2697 = vsel %vm932, %v2661, %v2560
      %v2698 = vsel %vm932, %v2662, %v2562
      %v2699 = vsel %vm932, %v2663, %v2564
      %v2700 = vsel %vm932, %v2664, %v2566
      %v2701 = vsel %vm932, %v2665, %v2568
      %v2702 = vsel %vm932, %v2666, %v2570
      %v2703 = vsel %vm932, %v2667, %v2572
      %v2704 = vsel %vm932, %v2668, %v2574
      %v2705 = vsel %vm932, %v2669, %v2576
      %v2706 = vsel %vm932, %v2670, %v2578
      %v2707 = vsel %vm932, %v2671, %v2580
      %v2708 = vsel %vm932, %v2672, %v2582
      %v2709 = vsel %vm932, %v2673, %v2584
      %v2710 = vsel %vm932, %v2674, %v2586
      %v2711 = vsel %vm932, %v2675, %v2588
      %v2712 = vsel %vm932, %v2676, %v2590
      %v2713 = vsel %vm932, %v2677, %v2592
      %v2714 = vsel %vm932, %v2678, %v2594
      %v2715 = vsel %vm932, %v2679, %v2596
      %v2716 = vsel %vm932, %v2680, %v2598
      %v2717 = vsel %vm932, %v2681, %v2600
      %v2718 = vsel %vm932, %v2682, %v2602
      %v2719 = vsel %vm932, %v2683, %v2604
      %v2720 = vsel %vm932, %v2684, %v2606
      %v2721 = vsel %vm932, %v2685, %v2608
      %v2722 = vsel %vm932, %v2686, %v2610
      %v2723 = vsel %vm932, %v2687, %v2612
      %v2724 = vsel %vm932, %v2688, %v2614
      %v2725 = vsel %vm932, %v2689, %v2616
      %v2726 = vsel %vm932, %v2690, %v2618
      %v2727 = vld [vmem:[%s4] sm:$0xff]
      %v2728 = vld [vmem:[%s4 + $0x8] sm:$0xf]
      %v2729 = vld [vmem:[%s4 + $0x10] sm:$0xff]
      %v2730 = vld [vmem:[%s4 + $0x18] sm:$0xf]
      %v2731 = vld [vmem:[%s4 + $0x20] sm:$0xff]
      %v2732 = vld [vmem:[%s4 + $0x28] sm:$0xf]
      %v2734 = vsel %vm975, %v2693, 0
      %v2737 = vsel %vm975, %v2694, 0
      %v2740 = vsel %vm975, %v2695, 0
      %v2743 = vsel %vm975, %v2696, 0
      %v2746 = vsel %vm975, %v2697, 0
      %v2749 = vsel %vm975, %v2698, 0
      %v2752 = vsel %vm975, %v2699, 0
      %v2755 = vsel %vm975, %v2700, 0
      %v2758 = vsel %vm975, %v2701, 0
      %v2761 = vsel %vm975, %v2702, 0
      %v2764 = vsel %vm975, %v2703, 0
      %v2767 = vsel %vm975, %v2704, 0
      %v2770 = vsel %vm975, %v2705, 0
      %v2773 = vsel %vm975, %v2706, 0
      %v2776 = vsel %vm975, %v2707, 0
      %v2779 = vsel %vm975, %v2708, 0
      %v2782 = vsel %vm975, %v2709, 0
      %v2785 = vsel %vm975, %v2710, 0
      %v2788 = vsel %vm975, %v2711, 0
      %v2791 = vsel %vm975, %v2712, 0
      %v2794 = vsel %vm975, %v2713, 0
      %v2797 = vsel %vm975, %v2714, 0
      %v2800 = vsel %vm975, %v2715, 0
      %v2803 = vsel %vm975, %v2716, 0
      %v2806 = vsel %vm975, %v2717, 0
      %v2809 = vsel %vm975, %v2718, 0
      %v2812 = vsel %vm975, %v2719, 0
      %v2815 = vsel %vm975, %v2720, 0
      %v2818 = vsel %vm975, %v2721, 0
      %v2821 = vsel %vm975, %v2722, 0
      %v2824 = vsel %vm975, %v2723, 0
      %v2827 = vsel %vm975, %v2724, 0
      %v2830 = vsel %vm1072, %v2730, 0
      %2832 = vmatprep.subr.mxu0 0.0
      %2833 = vmatpush1.msra.mxu0 0.0
      %2834 = vmatprep.subr.mxu0 0.0
      %2835 = vmatpush1.msra.mxu0 0.0
      %2836 = vmatprep.subr.mxu0 0.0
      %2837 = vmatpush1.msra.mxu0 0.0
      %2838 = vmatprep.subr.mxu0 0.0
      %2839 = vmatpush1.msra.mxu0 0.0
      %2840 = vmatprep.subr.mxu0 0.0
      %2841 = vmatpush1.msra.mxu0 0.0
      %2842 = vmatprep.subr.mxu0 0.0
      %2843 = vmatpush1.msra.mxu0 0.0
      %2844 = vmatprep.subr.mxu0 0.0
      %2845 = vmatpush1.msra.mxu0 0.0
      %2846 = vmatprep.subr.mxu0 0.0
      %2847 = vmatpush1.msra.mxu0 0.0
      %2848 = vmatprep.subr.mxu0 0.0
      %2849 = vmatpush1.msra.mxu0 0.0
      %2850 = vmatprep.subr.mxu0 0.0
      %2851 = vmatpush1.msra.mxu0 0.0
      %2852 = vmatprep.subr.mxu0 0.0
      %2853 = vmatpush1.msra.mxu0 0.0
      %2854 = vmatprep.subr.mxu0 0.0
      %2855 = vmatpush1.msra.mxu0 0.0
      %2856 = vmatprep.subr.mxu0 0.0
      %2857 = vmatpush1.msra.mxu0 0.0
      %2858 = vmatprep.subr.mxu0 0.0
      %2859 = vmatpush1.msra.mxu0 0.0
      %2860 = vmatprep.subr.mxu0 0.0
      %2861 = vmatpush1.msra.mxu0 %v2830
      %2862 = vmatprep.subr.mxu0 0.0
      %2863 = vmatpush1.msra.mxu0 %v2729
      %2864 = vmatprep.subr.mxu0 0.0
      %2865 = vmatpush2.msra.mxu0 0.0
      %2866 = vmatprep.subr.mxu0 0.0
      %2867 = vmatpush2.msra.mxu0 0.0
      %2868 = vmatprep.subr.mxu0 0.0
      %2869 = vmatpush2.msra.mxu0 0.0
      %2870 = vmatprep.subr.mxu0 0.0
      %2871 = vmatpush2.msra.mxu0 0.0
      %2872 = vmatprep.subr.mxu0 0.0
      %2873 = vmatpush2.msra.mxu0 0.0
      %2874 = vmatprep.subr.mxu0 0.0
      %2875 = vmatpush2.msra.mxu0 0.0
      %2876 = vmatprep.subr.mxu0 0.0
      %2877 = vmatpush2.msra.mxu0 0.0
      %2878 = vmatprep.subr.mxu0 0.0
      %2879 = vmatpush2.msra.mxu0 0.0
      %2880 = vmatprep.subr.mxu0 0.0
      %2881 = vmatpush2.msra.mxu0 0.0
      %2882 = vmatprep.subr.mxu0 0.0
      %2883 = vmatpush2.msra.mxu0 0.0
      %2884 = vmatprep.subr.mxu0 0.0
      %2885 = vmatpush2.msra.mxu0 0.0
      %2886 = vmatprep.subr.mxu0 0.0
      %2887 = vmatpush2.msra.mxu0 0.0
      %2888 = vmatprep.subr.mxu0 0.0
      %2889 = vmatpush2.msra.mxu0 0.0
      %2890 = vmatprep.subr.mxu0 0.0
      %2891 = vmatpush2.msra.mxu0 0.0
      %2892 = vmatprep.subr.mxu0 0.0
      %2893 = vmatpush2.msra.mxu0 0.0
      %2894 = vmatprep.subr.mxu0 0.0
      %2895 = vmatpush2.msra.mxu0 0.0
      %2896 = vmatprep.mubr.f32.mxu0 0.0
      %2897 = vmatmul.mubr.f32.gmra.mxu0 %v2734
      %v2898 = vpop.f32.mrf.mxu0
      %v2899 = vadd.f32 0.0, %v2898
      %v2900 = vpop.f32.mrf.mxu0
      %2901 = vmatprep.mubr.f32.mxu0 0.0
      %2902 = vmatmul.mubr.f32.gmra.mxu0 %v2737
      %v2903 = vpop.f32.mrf.mxu0
      %v2904 = vadd.f32 0.0, %v2903
      %v2905 = vpop.f32.mrf.mxu0
      %2906 = vmatprep.mubr.f32.mxu0 0.0
      %2907 = vmatmul.mubr.f32.gmra.mxu0 %v2740
      %v2908 = vpop.f32.mrf.mxu0
      %v2909 = vadd.f32 0.0, %v2908
      %v2910 = vpop.f32.mrf.mxu0
      %2911 = vmatprep.mubr.f32.mxu0 0.0
      %2912 = vmatmul.mubr.f32.gmra.mxu0 %v2743
      %v2913 = vpop.f32.mrf.mxu0
      %v2914 = vadd.f32 0.0, %v2913
      %v2915 = vpop.f32.mrf.mxu0
      %2916 = vmatprep.mubr.f32.mxu0 0.0
      %2917 = vmatmul.mubr.f32.gmra.mxu0 %v2746
      %v2918 = vpop.f32.mrf.mxu0
      %v2919 = vadd.f32 0.0, %v2918
      %v2920 = vpop.f32.mrf.mxu0
      %2921 = vmatprep.mubr.f32.mxu0 0.0
      %2922 = vmatmul.mubr.f32.gmra.mxu0 %v2749
      %v2923 = vpop.f32.mrf.mxu0
      %v2924 = vadd.f32 0.0, %v2923
      %v2925 = vpop.f32.mrf.mxu0
      %2926 = vmatprep.mubr.f32.mxu0 0.0
      %2927 = vmatmul.mubr.f32.gmra.mxu0 %v2752
      %v2928 = vpop.f32.mrf.mxu0
      %v2929 = vadd.f32 0.0, %v2928
      %v2930 = vpop.f32.mrf.mxu0
      %2931 = vmatprep.mubr.f32.mxu0 0.0
      %2932 = vmatmul.mubr.f32.gmra.mxu0 %v2755
      %v2933 = vpop.f32.mrf.mxu0
      %v2934 = vadd.f32 0.0, %v2933
      %v2935 = vpop.f32.mrf.mxu0
      %2936 = vmatprep.mubr.f32.mxu0 0.0
      %2937 = vmatmul.mubr.f32.gmra.mxu0 %v2758
      %v2938 = vpop.f32.mrf.mxu0
      %v2939 = vadd.f32 0.0, %v2938
      %v2940 = vpop.f32.mrf.mxu0
      %2941 = vmatprep.mubr.f32.mxu0 0.0
      %2942 = vmatmul.mubr.f32.gmra.mxu0 %v2761
      %v2943 = vpop.f32.mrf.mxu0
      %v2944 = vadd.f32 0.0, %v2943
      %v2945 = vpop.f32.mrf.mxu0
      %2946 = vmatprep.mubr.f32.mxu0 0.0
      %2947 = vmatmul.mubr.f32.gmra.mxu0 %v2764
      %v2948 = vpop.f32.mrf.mxu0
      %v2949 = vadd.f32 0.0, %v2948
      %v2950 = vpop.f32.mrf.mxu0
      %2951 = vmatprep.mubr.f32.mxu0 0.0
      %2952 = vmatmul.mubr.f32.gmra.mxu0 %v2767
      %v2953 = vpop.f32.mrf.mxu0
      %v2954 = vadd.f32 0.0, %v2953
      %v2955 = vpop.f32.mrf.mxu0
      %2956 = vmatprep.mubr.f32.mxu0 0.0
      %2957 = vmatmul.mubr.f32.gmra.mxu0 %v2770
      %v2958 = vpop.f32.mrf.mxu0
      %v2959 = vadd.f32 0.0, %v2958
      %v2960 = vpop.f32.mrf.mxu0
      %2961 = vmatprep.mubr.f32.mxu0 0.0
      %2962 = vmatmul.mubr.f32.gmra.mxu0 %v2773
      %v2963 = vpop.f32.mrf.mxu0
      %v2964 = vadd.f32 0.0, %v2963
      %v2965 = vpop.f32.mrf.mxu0
      %2966 = vmatprep.mubr.f32.mxu0 0.0
      %2967 = vmatmul.mubr.f32.gmra.mxu0 %v2776
      %v2968 = vpop.f32.mrf.mxu0
      %v2969 = vadd.f32 0.0, %v2968
      %v2970 = vpop.f32.mrf.mxu0
      %2971 = vmatprep.mubr.f32.mxu0 0.0
      %2972 = vmatmul.mubr.f32.gmra.mxu0 %v2779
      %v2973 = vpop.f32.mrf.mxu0
      %v2974 = vadd.f32 0.0, %v2973
      %v2975 = vpop.f32.mrf.mxu0
      %2976 = vmatprep.mubr.f32.mxu0 0.0
      %2977 = vmatmul.mubr.f32.gmra.mxu0 %v2782
      %v2978 = vpop.f32.mrf.mxu0
      %v2979 = vadd.f32 0.0, %v2978
      %v2980 = vpop.f32.mrf.mxu0
      %2981 = vmatprep.mubr.f32.mxu0 0.0
      %2982 = vmatmul.mubr.f32.gmra.mxu0 %v2785
      %v2983 = vpop.f32.mrf.mxu0
      %v2984 = vadd.f32 0.0, %v2983
      %v2985 = vpop.f32.mrf.mxu0
      %2986 = vmatprep.mubr.f32.mxu0 0.0
      %2987 = vmatmul.mubr.f32.gmra.mxu0 %v2788
      %v2988 = vpop.f32.mrf.mxu0
      %v2989 = vadd.f32 0.0, %v2988
      %v2990 = vpop.f32.mrf.mxu0
      %2991 = vmatprep.mubr.f32.mxu0 0.0
      %2992 = vmatmul.mubr.f32.gmra.mxu0 %v2791
      %v2993 = vpop.f32.mrf.mxu0
      %v2994 = vadd.f32 0.0, %v2993
      %v2995 = vpop.f32.mrf.mxu0
      %2996 = vmatprep.mubr.f32.mxu0 0.0
      %2997 = vmatmul.mubr.f32.gmra.mxu0 %v2794
      %v2998 = vpop.f32.mrf.mxu0
      %v2999 = vadd.f32 0.0, %v2998
      %v3000 = vpop.f32.mrf.mxu0
      %3001 = vmatprep.mubr.f32.mxu0 0.0
      %3002 = vmatmul.mubr.f32.gmra.mxu0 %v2797
      %v3003 = vpop.f32.mrf.mxu0
      %v3004 = vadd.f32 0.0, %v3003
      %v3005 = vpop.f32.mrf.mxu0
      %3006 = vmatprep.mubr.f32.mxu0 0.0
      %3007 = vmatmul.mubr.f32.gmra.mxu0 %v2800
      %v3008 = vpop.f32.mrf.mxu0
      %v3009 = vadd.f32 0.0, %v3008
      %v3010 = vpop.f32.mrf.mxu0
      %3011 = vmatprep.mubr.f32.mxu0 0.0
      %3012 = vmatmul.mubr.f32.gmra.mxu0 %v2803
      %v3013 = vpop.f32.mrf.mxu0
      %v3014 = vadd.f32 0.0, %v3013
      %v3015 = vpop.f32.mrf.mxu0
      %3016 = vmatprep.mubr.f32.mxu0 0.0
      %3017 = vmatmul.mubr.f32.gmra.mxu0 %v2806
      %v3018 = vpop.f32.mrf.mxu0
      %v3019 = vadd.f32 0.0, %v3018
      %v3020 = vpop.f32.mrf.mxu0
      %3021 = vmatprep.mubr.f32.mxu0 0.0
      %3022 = vmatmul.mubr.f32.gmra.mxu0 %v2809
      %v3023 = vpop.f32.mrf.mxu0
      %v3024 = vadd.f32 0.0, %v3023
      %v3025 = vpop.f32.mrf.mxu0
      %3026 = vmatprep.mubr.f32.mxu0 0.0
      %3027 = vmatmul.mubr.f32.gmra.mxu0 %v2812
      %v3028 = vpop.f32.mrf.mxu0
      %v3029 = vadd.f32 0.0, %v3028
      %v3030 = vpop.f32.mrf.mxu0
      %3031 = vmatprep.mubr.f32.mxu0 0.0
      %3032 = vmatmul.mubr.f32.gmra.mxu0 %v2815
      %v3033 = vpop.f32.mrf.mxu0
      %v3034 = vadd.f32 0.0, %v3033
      %v3035 = vpop.f32.mrf.mxu0
      %3036 = vmatprep.mubr.f32.mxu0 0.0
      %3037 = vmatmul.mubr.f32.gmra.mxu0 %v2818
      %v3038 = vpop.f32.mrf.mxu0
      %v3039 = vadd.f32 0.0, %v3038
      %v3040 = vpop.f32.mrf.mxu0
      %3041 = vmatprep.mubr.f32.mxu0 0.0
      %3042 = vmatmul.mubr.f32.gmra.mxu0 %v2821
      %v3043 = vpop.f32.mrf.mxu0
      %v3044 = vadd.f32 0.0, %v3043
      %v3045 = vpop.f32.mrf.mxu0
      %3046 = vmatprep.mubr.f32.mxu0 0.0
      %3047 = vmatmul.mubr.f32.gmra.mxu0 %v2824
      %v3048 = vpop.f32.mrf.mxu0
      %v3049 = vadd.f32 0.0, %v3048
      %v3050 = vpop.f32.mrf.mxu0
      %3051 = vmatprep.mubr.f32.mxu0 0.0
      %3052 = vmatmul.mubr.f32.gmra.mxu0 %v2827
      %v3053 = vpop.f32.mrf.mxu0
      %v3054 = vadd.f32 0.0, %v3053
      %v3055 = vpop.f32.mrf.mxu0
      %3056 = vdwg.mxu0
      %v3058 = vsel %vm975, %v2691, 0
      %v3061 = vsel %vm975, %v2692, 0
      %v3064 = vsel %vm1072, %v2728, 0
      %3066 = vmatprep.subr.mxu0 0.0
      %3067 = vmatpush1.msra.mxu0 0.0
      %3068 = vmatprep.subr.mxu0 0.0
      %3069 = vmatpush1.msra.mxu0 0.0
      %3070 = vmatprep.subr.mxu0 0.0
      %3071 = vmatpush1.msra.mxu0 0.0
      %3072 = vmatprep.subr.mxu0 0.0
      %3073 = vmatpush1.msra.mxu0 0.0
      %3074 = vmatprep.subr.mxu0 0.0
      %3075 = vmatpush1.msra.mxu0 0.0
      %3076 = vmatprep.subr.mxu0 0.0
      %3077 = vmatpush1.msra.mxu0 0.0
      %3078 = vmatprep.subr.mxu0 0.0
      %3079 = vmatpush1.msra.mxu0 0.0
      %3080 = vmatprep.subr.mxu0 0.0
      %3081 = vmatpush1.msra.mxu0 0.0
      %3082 = vmatprep.subr.mxu0 0.0
      %3083 = vmatpush1.msra.mxu0 0.0
      %3084 = vmatprep.subr.mxu0 0.0
      %3085 = vmatpush1.msra.mxu0 0.0
      %3086 = vmatprep.subr.mxu0 0.0
      %3087 = vmatpush1.msra.mxu0 0.0
      %3088 = vmatprep.subr.mxu0 0.0
      %3089 = vmatpush1.msra.mxu0 0.0
      %3090 = vmatprep.subr.mxu0 0.0
      %3091 = vmatpush1.msra.mxu0 0.0
      %3092 = vmatprep.subr.mxu0 0.0
      %3093 = vmatpush1.msra.mxu0 0.0
      %3094 = vmatprep.subr.mxu0 0.0
      %3095 = vmatpush1.msra.mxu0 %v3064
      %3096 = vmatprep.subr.mxu0 0.0
      %3097 = vmatpush1.msra.mxu0 %v2727
      %3098 = vmatprep.subr.mxu0 0.0
      %3099 = vmatpush2.msra.mxu0 0.0
      %3100 = vmatprep.subr.mxu0 0.0
      %3101 = vmatpush2.msra.mxu0 0.0
      %3102 = vmatprep.subr.mxu0 0.0
      %3103 = vmatpush2.msra.mxu0 0.0
      %3104 = vmatprep.subr.mxu0 0.0
      %3105 = vmatpush2.msra.mxu0 0.0
      %3106 = vmatprep.subr.mxu0 0.0
      %3107 = vmatpush2.msra.mxu0 0.0
      %3108 = vmatprep.subr.mxu0 0.0
      %3109 = vmatpush2.msra.mxu0 0.0
      %3110 = vmatprep.subr.mxu0 0.0
      %3111 = vmatpush2.msra.mxu0 0.0
      %3112 = vmatprep.subr.mxu0 0.0
      %3113 = vmatpush2.msra.mxu0 0.0
      %3114 = vmatprep.subr.mxu0 0.0
      %3115 = vmatpush2.msra.mxu0 0.0
      %3116 = vmatprep.subr.mxu0 0.0
      %3117 = vmatpush2.msra.mxu0 0.0
      %3118 = vmatprep.subr.mxu0 0.0
      %3119 = vmatpush2.msra.mxu0 0.0
      %3120 = vmatprep.subr.mxu0 0.0
      %3121 = vmatpush2.msra.mxu0 0.0
      %3122 = vmatprep.subr.mxu0 0.0
      %3123 = vmatpush2.msra.mxu0 0.0
      %3124 = vmatprep.subr.mxu0 0.0
      %3125 = vmatpush2.msra.mxu0 0.0
      %3126 = vmatprep.subr.mxu0 0.0
      %3127 = vmatpush2.msra.mxu0 0.0
      %3128 = vmatprep.subr.mxu0 0.0
      %3129 = vmatpush2.msra.mxu0 0.0
      %3130 = vmatprep.mubr.f32.mxu0 0.0
      %3131 = vmatmul.mubr.f32.gmra.mxu0 %v3058
      %v3132 = vpop.f32.mrf.mxu0
      %v3133 = vadd.f32 %v2899, %v3132
      %v3134 = vpop.f32.mrf.mxu0
      %3135 = vmatprep.mubr.f32.mxu0 0.0
      %3136 = vmatmul.mubr.f32.gmra.mxu0 %v3061
      %v3137 = vpop.f32.mrf.mxu0
      %v3138 = vadd.f32 %v2904, %v3137
      %v3139 = vpop.f32.mrf.mxu0
      %3140 = vmatprep.mubr.f32.mxu0 0.0
      %3141 = vmatmul.mubr.f32.gmra.mxu0 %v2734
      %v3142 = vpop.f32.mrf.mxu0
      %v3143 = vadd.f32 %v2909, %v3142
      %v3144 = vpop.f32.mrf.mxu0
      %3145 = vmatprep.mubr.f32.mxu0 0.0
      %3146 = vmatmul.mubr.f32.gmra.mxu0 %v2737
      %v3147 = vpop.f32.mrf.mxu0
      %v3148 = vadd.f32 %v2914, %v3147
      %v3149 = vpop.f32.mrf.mxu0
      %3150 = vmatprep.mubr.f32.mxu0 0.0
      %3151 = vmatmul.mubr.f32.gmra.mxu0 %v2740
      %v3152 = vpop.f32.mrf.mxu0
      %v3153 = vadd.f32 %v2919, %v3152
      %v3154 = vpop.f32.mrf.mxu0
      %3155 = vmatprep.mubr.f32.mxu0 0.0
      %3156 = vmatmul.mubr.f32.gmra.mxu0 %v2743
      %v3157 = vpop.f32.mrf.mxu0
      %v3158 = vadd.f32 %v2924, %v3157
      %v3159 = vpop.f32.mrf.mxu0
      %3160 = vmatprep.mubr.f32.mxu0 0.0
      %3161 = vmatmul.mubr.f32.gmra.mxu0 %v2746
      %v3162 = vpop.f32.mrf.mxu0
      %v3163 = vadd.f32 %v2929, %v3162
      %v3164 = vpop.f32.mrf.mxu0
      %3165 = vmatprep.mubr.f32.mxu0 0.0
      %3166 = vmatmul.mubr.f32.gmra.mxu0 %v2749
      %v3167 = vpop.f32.mrf.mxu0
      %v3168 = vadd.f32 %v2934, %v3167
      %v3169 = vpop.f32.mrf.mxu0
      %3170 = vmatprep.mubr.f32.mxu0 0.0
      %3171 = vmatmul.mubr.f32.gmra.mxu0 %v2752
      %v3172 = vpop.f32.mrf.mxu0
      %v3173 = vadd.f32 %v2939, %v3172
      %v3174 = vpop.f32.mrf.mxu0
      %3175 = vmatprep.mubr.f32.mxu0 0.0
      %3176 = vmatmul.mubr.f32.gmra.mxu0 %v2755
      %v3177 = vpop.f32.mrf.mxu0
      %v3178 = vadd.f32 %v2944, %v3177
      %v3179 = vpop.f32.mrf.mxu0
      %3180 = vmatprep.mubr.f32.mxu0 0.0
      %3181 = vmatmul.mubr.f32.gmra.mxu0 %v2758
      %v3182 = vpop.f32.mrf.mxu0
      %v3183 = vadd.f32 %v2949, %v3182
      %v3184 = vpop.f32.mrf.mxu0
      %3185 = vmatprep.mubr.f32.mxu0 0.0
      %3186 = vmatmul.mubr.f32.gmra.mxu0 %v2761
      %v3187 = vpop.f32.mrf.mxu0
      %v3188 = vadd.f32 %v2954, %v3187
      %v3189 = vpop.f32.mrf.mxu0
      %3190 = vmatprep.mubr.f32.mxu0 0.0
      %3191 = vmatmul.mubr.f32.gmra.mxu0 %v2764
      %v3192 = vpop.f32.mrf.mxu0
      %v3193 = vadd.f32 %v2959, %v3192
      %v3194 = vpop.f32.mrf.mxu0
      %3195 = vmatprep.mubr.f32.mxu0 0.0
      %3196 = vmatmul.mubr.f32.gmra.mxu0 %v2767
      %v3197 = vpop.f32.mrf.mxu0
      %v3198 = vadd.f32 %v2964, %v3197
      %v3199 = vpop.f32.mrf.mxu0
      %3200 = vmatprep.mubr.f32.mxu0 0.0
      %3201 = vmatmul.mubr.f32.gmra.mxu0 %v2770
      %v3202 = vpop.f32.mrf.mxu0
      %v3203 = vadd.f32 %v2969, %v3202
      %v3204 = vpop.f32.mrf.mxu0
      %3205 = vmatprep.mubr.f32.mxu0 0.0
      %3206 = vmatmul.mubr.f32.gmra.mxu0 %v2773
      %v3207 = vpop.f32.mrf.mxu0
      %v3208 = vadd.f32 %v2974, %v3207
      %v3209 = vpop.f32.mrf.mxu0
      %3210 = vmatprep.mubr.f32.mxu0 0.0
      %3211 = vmatmul.mubr.f32.gmra.mxu0 %v2776
      %v3212 = vpop.f32.mrf.mxu0
      %v3213 = vadd.f32 %v2979, %v3212
      %v3214 = vpop.f32.mrf.mxu0
      %3215 = vmatprep.mubr.f32.mxu0 0.0
      %3216 = vmatmul.mubr.f32.gmra.mxu0 %v2779
      %v3217 = vpop.f32.mrf.mxu0
      %v3218 = vadd.f32 %v2984, %v3217
      %v3219 = vpop.f32.mrf.mxu0
      %3220 = vmatprep.mubr.f32.mxu0 0.0
      %3221 = vmatmul.mubr.f32.gmra.mxu0 %v2782
      %v3222 = vpop.f32.mrf.mxu0
      %v3223 = vadd.f32 %v2989, %v3222
      %v3224 = vpop.f32.mrf.mxu0
      %3225 = vmatprep.mubr.f32.mxu0 0.0
      %3226 = vmatmul.mubr.f32.gmra.mxu0 %v2785
      %v3227 = vpop.f32.mrf.mxu0
      %v3228 = vadd.f32 %v2994, %v3227
      %v3229 = vpop.f32.mrf.mxu0
      %3230 = vmatprep.mubr.f32.mxu0 0.0
      %3231 = vmatmul.mubr.f32.gmra.mxu0 %v2788
      %v3232 = vpop.f32.mrf.mxu0
      %v3233 = vadd.f32 %v2999, %v3232
      %v3234 = vpop.f32.mrf.mxu0
      %3235 = vmatprep.mubr.f32.mxu0 0.0
      %3236 = vmatmul.mubr.f32.gmra.mxu0 %v2791
      %v3237 = vpop.f32.mrf.mxu0
      %v3238 = vadd.f32 %v3004, %v3237
      %v3239 = vpop.f32.mrf.mxu0
      %3240 = vmatprep.mubr.f32.mxu0 0.0
      %3241 = vmatmul.mubr.f32.gmra.mxu0 %v2794
      %v3242 = vpop.f32.mrf.mxu0
      %v3243 = vadd.f32 %v3009, %v3242
      %v3244 = vpop.f32.mrf.mxu0
      %3245 = vmatprep.mubr.f32.mxu0 0.0
      %3246 = vmatmul.mubr.f32.gmra.mxu0 %v2797
      %v3247 = vpop.f32.mrf.mxu0
      %v3248 = vadd.f32 %v3014, %v3247
      %v3249 = vpop.f32.mrf.mxu0
      %3250 = vmatprep.mubr.f32.mxu0 0.0
      %3251 = vmatmul.mubr.f32.gmra.mxu0 %v2800
      %v3252 = vpop.f32.mrf.mxu0
      %v3253 = vadd.f32 %v3019, %v3252
      %v3254 = vpop.f32.mrf.mxu0
      %3255 = vmatprep.mubr.f32.mxu0 0.0
      %3256 = vmatmul.mubr.f32.gmra.mxu0 %v2803
      %v3257 = vpop.f32.mrf.mxu0
      %v3258 = vadd.f32 %v3024, %v3257
      %v3259 = vpop.f32.mrf.mxu0
      %3260 = vmatprep.mubr.f32.mxu0 0.0
      %3261 = vmatmul.mubr.f32.gmra.mxu0 %v2806
      %v3262 = vpop.f32.mrf.mxu0
      %v3263 = vadd.f32 %v3029, %v3262
      %v3264 = vpop.f32.mrf.mxu0
      %3265 = vmatprep.mubr.f32.mxu0 0.0
      %3266 = vmatmul.mubr.f32.gmra.mxu0 %v2809
      %v3267 = vpop.f32.mrf.mxu0
      %v3268 = vadd.f32 %v3034, %v3267
      %v3269 = vpop.f32.mrf.mxu0
      %3270 = vmatprep.mubr.f32.mxu0 0.0
      %3271 = vmatmul.mubr.f32.gmra.mxu0 %v2812
      %v3272 = vpop.f32.mrf.mxu0
      %v3273 = vadd.f32 %v3039, %v3272
      %v3274 = vpop.f32.mrf.mxu0
      %3275 = vmatprep.mubr.f32.mxu0 0.0
      %3276 = vmatmul.mubr.f32.gmra.mxu0 %v2815
      %v3277 = vpop.f32.mrf.mxu0
      %v3278 = vadd.f32 %v3044, %v3277
      %v3279 = vpop.f32.mrf.mxu0
      %3280 = vmatprep.mubr.f32.mxu0 0.0
      %3281 = vmatmul.mubr.f32.gmra.mxu0 %v2818
      %v3282 = vpop.f32.mrf.mxu0
      %v3283 = vadd.f32 %v3049, %v3282
      %v3284 = vpop.f32.mrf.mxu0
      %3285 = vmatprep.mubr.f32.mxu0 0.0
      %3286 = vmatmul.mubr.f32.gmra.mxu0 %v2821
      %v3287 = vpop.f32.mrf.mxu0
      %v3288 = vadd.f32 %v3054, %v3287
      %v3289 = vpop.f32.mrf.mxu0
      %3290 = vdwg.mxu0
      %v3292 = vsel %vm975, %v2725, 0
      %v3295 = vsel %vm975, %v2726, 0
      %v3298 = vsel %vm1072, %v2732, 0
      %3300 = vmatprep.subr.mxu0 0.0
      %3301 = vmatpush1.msra.mxu0 0.0
      %3302 = vmatprep.subr.mxu0 0.0
      %3303 = vmatpush1.msra.mxu0 0.0
      %3304 = vmatprep.subr.mxu0 0.0
      %3305 = vmatpush1.msra.mxu0 0.0
      %3306 = vmatprep.subr.mxu0 0.0
      %3307 = vmatpush1.msra.mxu0 0.0
      %3308 = vmatprep.subr.mxu0 0.0
      %3309 = vmatpush1.msra.mxu0 0.0
      %3310 = vmatprep.subr.mxu0 0.0
      %3311 = vmatpush1.msra.mxu0 0.0
      %3312 = vmatprep.subr.mxu0 0.0
      %3313 = vmatpush1.msra.mxu0 0.0
      %3314 = vmatprep.subr.mxu0 0.0
      %3315 = vmatpush1.msra.mxu0 0.0
      %3316 = vmatprep.subr.mxu0 0.0
      %3317 = vmatpush1.msra.mxu0 0.0
      %3318 = vmatprep.subr.mxu0 0.0
      %3319 = vmatpush1.msra.mxu0 0.0
      %3320 = vmatprep.subr.mxu0 0.0
      %3321 = vmatpush1.msra.mxu0 0.0
      %3322 = vmatprep.subr.mxu0 0.0
      %3323 = vmatpush1.msra.mxu0 0.0
      %3324 = vmatprep.subr.mxu0 0.0
      %3325 = vmatpush1.msra.mxu0 0.0
      %3326 = vmatprep.subr.mxu0 0.0
      %3327 = vmatpush1.msra.mxu0 0.0
      %3328 = vmatprep.subr.mxu0 0.0
      %3329 = vmatpush1.msra.mxu0 %v3298
      %3330 = vmatprep.subr.mxu0 0.0
      %3331 = vmatpush1.msra.mxu0 %v2731
      %3332 = vmatprep.subr.mxu0 0.0
      %3333 = vmatpush2.msra.mxu0 0.0
      %3334 = vmatprep.subr.mxu0 0.0
      %3335 = vmatpush2.msra.mxu0 0.0
      %3336 = vmatprep.subr.mxu0 0.0
      %3337 = vmatpush2.msra.mxu0 0.0
      %3338 = vmatprep.subr.mxu0 0.0
      %3339 = vmatpush2.msra.mxu0 0.0
      %3340 = vmatprep.subr.mxu0 0.0
      %3341 = vmatpush2.msra.mxu0 0.0
      %3342 = vmatprep.subr.mxu0 0.0
      %3343 = vmatpush2.msra.mxu0 0.0
      %3344 = vmatprep.subr.mxu0 0.0
      %3345 = vmatpush2.msra.mxu0 0.0
      %3346 = vmatprep.subr.mxu0 0.0
      %3347 = vmatpush2.msra.mxu0 0.0
      %3348 = vmatprep.subr.mxu0 0.0
      %3349 = vmatpush2.msra.mxu0 0.0
      %3350 = vmatprep.subr.mxu0 0.0
      %3351 = vmatpush2.msra.mxu0 0.0
      %3352 = vmatprep.subr.mxu0 0.0
      %3353 = vmatpush2.msra.mxu0 0.0
      %3354 = vmatprep.subr.mxu0 0.0
      %3355 = vmatpush2.msra.mxu0 0.0
      %3356 = vmatprep.subr.mxu0 0.0
      %3357 = vmatpush2.msra.mxu0 0.0
      %3358 = vmatprep.subr.mxu0 0.0
      %3359 = vmatpush2.msra.mxu0 0.0
      %3360 = vmatprep.subr.mxu0 0.0
      %3361 = vmatpush2.msra.mxu0 0.0
      %3362 = vmatprep.subr.mxu0 0.0
      %3363 = vmatpush2.msra.mxu0 0.0
      %3364 = vmatprep.mubr.f32.mxu0 0.0
      %3365 = vmatmul.mubr.f32.gmra.mxu0 %v2740
      %v3366 = vpop.f32.mrf.mxu0
      %v3367 = vadd.f32 0.0, %v3366
      %v3368 = vpop.f32.mrf.mxu0
      %3369 = vmatprep.mubr.f32.mxu0 0.0
      %3370 = vmatmul.mubr.f32.gmra.mxu0 %v2743
      %v3371 = vpop.f32.mrf.mxu0
      %v3372 = vadd.f32 0.0, %v3371
      %v3373 = vpop.f32.mrf.mxu0
      %3374 = vmatprep.mubr.f32.mxu0 0.0
      %3375 = vmatmul.mubr.f32.gmra.mxu0 %v2746
      %v3376 = vpop.f32.mrf.mxu0
      %v3377 = vadd.f32 0.0, %v3376
      %v3378 = vpop.f32.mrf.mxu0
      %3379 = vmatprep.mubr.f32.mxu0 0.0
      %3380 = vmatmul.mubr.f32.gmra.mxu0 %v2749
      %v3381 = vpop.f32.mrf.mxu0
      %v3382 = vadd.f32 0.0, %v3381
      %v3383 = vpop.f32.mrf.mxu0
      %3384 = vmatprep.mubr.f32.mxu0 0.0
      %3385 = vmatmul.mubr.f32.gmra.mxu0 %v2752
      %v3386 = vpop.f32.mrf.mxu0
      %v3387 = vadd.f32 0.0, %v3386
      %v3388 = vpop.f32.mrf.mxu0
      %3389 = vmatprep.mubr.f32.mxu0 0.0
      %3390 = vmatmul.mubr.f32.gmra.mxu0 %v2755
      %v3391 = vpop.f32.mrf.mxu0
      %v3392 = vadd.f32 0.0, %v3391
      %v3393 = vpop.f32.mrf.mxu0
      %3394 = vmatprep.mubr.f32.mxu0 0.0
      %3395 = vmatmul.mubr.f32.gmra.mxu0 %v2758
      %v3396 = vpop.f32.mrf.mxu0
      %v3397 = vadd.f32 0.0, %v3396
      %v3398 = vpop.f32.mrf.mxu0
      %3399 = vmatprep.mubr.f32.mxu0 0.0
      %3400 = vmatmul.mubr.f32.gmra.mxu0 %v2761
      %v3401 = vpop.f32.mrf.mxu0
      %v3402 = vadd.f32 0.0, %v3401
      %v3403 = vpop.f32.mrf.mxu0
      %3404 = vmatprep.mubr.f32.mxu0 0.0
      %3405 = vmatmul.mubr.f32.gmra.mxu0 %v2764
      %v3406 = vpop.f32.mrf.mxu0
      %v3407 = vadd.f32 0.0, %v3406
      %v3408 = vpop.f32.mrf.mxu0
      %3409 = vmatprep.mubr.f32.mxu0 0.0
      %3410 = vmatmul.mubr.f32.gmra.mxu0 %v2767
      %v3411 = vpop.f32.mrf.mxu0
      %v3412 = vadd.f32 0.0, %v3411
      %v3413 = vpop.f32.mrf.mxu0
      %3414 = vmatprep.mubr.f32.mxu0 0.0
      %3415 = vmatmul.mubr.f32.gmra.mxu0 %v2770
      %v3416 = vpop.f32.mrf.mxu0
      %v3417 = vadd.f32 0.0, %v3416
      %v3418 = vpop.f32.mrf.mxu0
      %3419 = vmatprep.mubr.f32.mxu0 0.0
      %3420 = vmatmul.mubr.f32.gmra.mxu0 %v2773
      %v3421 = vpop.f32.mrf.mxu0
      %v3422 = vadd.f32 0.0, %v3421
      %v3423 = vpop.f32.mrf.mxu0
      %3424 = vmatprep.mubr.f32.mxu0 0.0
      %3425 = vmatmul.mubr.f32.gmra.mxu0 %v2776
      %v3426 = vpop.f32.mrf.mxu0
      %v3427 = vadd.f32 0.0, %v3426
      %v3428 = vpop.f32.mrf.mxu0
      %3429 = vmatprep.mubr.f32.mxu0 0.0
      %3430 = vmatmul.mubr.f32.gmra.mxu0 %v2779
      %v3431 = vpop.f32.mrf.mxu0
      %v3432 = vadd.f32 0.0, %v3431
      %v3433 = vpop.f32.mrf.mxu0
      %3434 = vmatprep.mubr.f32.mxu0 0.0
      %3435 = vmatmul.mubr.f32.gmra.mxu0 %v2782
      %v3436 = vpop.f32.mrf.mxu0
      %v3437 = vadd.f32 0.0, %v3436
      %v3438 = vpop.f32.mrf.mxu0
      %3439 = vmatprep.mubr.f32.mxu0 0.0
      %3440 = vmatmul.mubr.f32.gmra.mxu0 %v2785
      %v3441 = vpop.f32.mrf.mxu0
      %v3442 = vadd.f32 0.0, %v3441
      %v3443 = vpop.f32.mrf.mxu0
      %3444 = vmatprep.mubr.f32.mxu0 0.0
      %3445 = vmatmul.mubr.f32.gmra.mxu0 %v2788
      %v3446 = vpop.f32.mrf.mxu0
      %v3447 = vadd.f32 0.0, %v3446
      %v3448 = vpop.f32.mrf.mxu0
      %3449 = vmatprep.mubr.f32.mxu0 0.0
      %3450 = vmatmul.mubr.f32.gmra.mxu0 %v2791
      %v3451 = vpop.f32.mrf.mxu0
      %v3452 = vadd.f32 0.0, %v3451
      %v3453 = vpop.f32.mrf.mxu0
      %3454 = vmatprep.mubr.f32.mxu0 0.0
      %3455 = vmatmul.mubr.f32.gmra.mxu0 %v2794
      %v3456 = vpop.f32.mrf.mxu0
      %v3457 = vadd.f32 0.0, %v3456
      %v3458 = vpop.f32.mrf.mxu0
      %3459 = vmatprep.mubr.f32.mxu0 0.0
      %3460 = vmatmul.mubr.f32.gmra.mxu0 %v2797
      %v3461 = vpop.f32.mrf.mxu0
      %v3462 = vadd.f32 0.0, %v3461
      %v3463 = vpop.f32.mrf.mxu0
      %3464 = vmatprep.mubr.f32.mxu0 0.0
      %3465 = vmatmul.mubr.f32.gmra.mxu0 %v2800
      %v3466 = vpop.f32.mrf.mxu0
      %v3467 = vadd.f32 0.0, %v3466
      %v3468 = vpop.f32.mrf.mxu0
      %3469 = vmatprep.mubr.f32.mxu0 0.0
      %3470 = vmatmul.mubr.f32.gmra.mxu0 %v2803
      %v3471 = vpop.f32.mrf.mxu0
      %v3472 = vadd.f32 0.0, %v3471
      %v3473 = vpop.f32.mrf.mxu0
      %3474 = vmatprep.mubr.f32.mxu0 0.0
      %3475 = vmatmul.mubr.f32.gmra.mxu0 %v2806
      %v3476 = vpop.f32.mrf.mxu0
      %v3477 = vadd.f32 0.0, %v3476
      %v3478 = vpop.f32.mrf.mxu0
      %3479 = vmatprep.mubr.f32.mxu0 0.0
      %3480 = vmatmul.mubr.f32.gmra.mxu0 %v2809
      %v3481 = vpop.f32.mrf.mxu0
      %v3482 = vadd.f32 0.0, %v3481
      %v3483 = vpop.f32.mrf.mxu0
      %3484 = vmatprep.mubr.f32.mxu0 0.0
      %3485 = vmatmul.mubr.f32.gmra.mxu0 %v2812
      %v3486 = vpop.f32.mrf.mxu0
      %v3487 = vadd.f32 0.0, %v3486
      %v3488 = vpop.f32.mrf.mxu0
      %3489 = vmatprep.mubr.f32.mxu0 0.0
      %3490 = vmatmul.mubr.f32.gmra.mxu0 %v2815
      %v3491 = vpop.f32.mrf.mxu0
      %v3492 = vadd.f32 0.0, %v3491
      %v3493 = vpop.f32.mrf.mxu0
      %3494 = vmatprep.mubr.f32.mxu0 0.0
      %3495 = vmatmul.mubr.f32.gmra.mxu0 %v2818
      %v3496 = vpop.f32.mrf.mxu0
      %v3497 = vadd.f32 0.0, %v3496
      %v3498 = vpop.f32.mrf.mxu0
      %3499 = vmatprep.mubr.f32.mxu0 0.0
      %3500 = vmatmul.mubr.f32.gmra.mxu0 %v2821
      %v3501 = vpop.f32.mrf.mxu0
      %v3502 = vadd.f32 0.0, %v3501
      %v3503 = vpop.f32.mrf.mxu0
      %3504 = vmatprep.mubr.f32.mxu0 0.0
      %3505 = vmatmul.mubr.f32.gmra.mxu0 %v2824
      %v3506 = vpop.f32.mrf.mxu0
      %v3507 = vadd.f32 0.0, %v3506
      %v3508 = vpop.f32.mrf.mxu0
      %3509 = vmatprep.mubr.f32.mxu0 0.0
      %3510 = vmatmul.mubr.f32.gmra.mxu0 %v2827
      %v3511 = vpop.f32.mrf.mxu0
      %v3512 = vadd.f32 0.0, %v3511
      %v3513 = vpop.f32.mrf.mxu0
      %3514 = vmatprep.mubr.f32.mxu0 0.0
      %3515 = vmatmul.mubr.f32.gmra.mxu0 %v3292
      %v3516 = vpop.f32.mrf.mxu0
      %v3517 = vadd.f32 0.0, %v3516
      %v3518 = vpop.f32.mrf.mxu0
      %3519 = vmatprep.mubr.f32.mxu0 0.0
      %3520 = vmatmul.mubr.f32.gmra.mxu0 %v3295
      %v3521 = vpop.f32.mrf.mxu0
      %v3522 = vadd.f32 0.0, %v3521
      %v3523 = vpop.f32.mrf.mxu0
      %3524 = vdwg.mxu0
      %v3525 = vadd.f32 %v3133, %v3367
      %v3526 = vadd.f32 %v3138, %v3372
      %v3527 = vadd.f32 %v3143, %v3377
      %v3528 = vadd.f32 %v3148, %v3382
      %v3529 = vadd.f32 %v3153, %v3387
      %v3530 = vadd.f32 %v3158, %v3392
      %v3531 = vadd.f32 %v3163, %v3397
      %v3532 = vadd.f32 %v3168, %v3402
      %v3533 = vadd.f32 %v3173, %v3407
      %v3534 = vadd.f32 %v3178, %v3412
      %v3535 = vadd.f32 %v3183, %v3417
      %v3536 = vadd.f32 %v3188, %v3422
      %v3537 = vadd.f32 %v3193, %v3427
      %v3538 = vadd.f32 %v3198, %v3432
      %v3539 = vadd.f32 %v3203, %v3437
      %v3540 = vadd.f32 %v3208, %v3442
      %v3541 = vadd.f32 %v3213, %v3447
      %v3542 = vadd.f32 %v3218, %v3452
      %v3543 = vadd.f32 %v3223, %v3457
      %v3544 = vadd.f32 %v3228, %v3462
      %v3545 = vadd.f32 %v3233, %v3467
      %v3546 = vadd.f32 %v3238, %v3472
      %v3547 = vadd.f32 %v3243, %v3477
      %v3548 = vadd.f32 %v3248, %v3482
      %v3549 = vadd.f32 %v3253, %v3487
      %v3550 = vadd.f32 %v3258, %v3492
      %v3551 = vadd.f32 %v3263, %v3497
      %v3552 = vadd.f32 %v3268, %v3502
      %v3553 = vadd.f32 %v3273, %v3507
      %v3554 = vadd.f32 %v3278, %v3512
      %v3555 = vadd.f32 %v3283, %v3517
      %v3556 = vadd.f32 %v3288, %v3522
      %v3557 = vsel %vm279, %v3525, 0.0
      %v3558 = vsel %vm279, %v3526, 0.0
      %v3559 = vadd.f32 %v3557, %v3558
      %v3560 = vsel %vm279, %v3527, 0.0
      %v3561 = vadd.f32 %v3559, %v3560
      %v3562 = vsel %vm279, %v3528, 0.0
      %v3563 = vadd.f32 %v3561, %v3562
      %v3564 = vsel %vm279, %v3529, 0.0
      %v3565 = vadd.f32 %v3563, %v3564
      %v3566 = vsel %vm279, %v3530, 0.0
      %v3567 = vadd.f32 %v3565, %v3566
      %v3568 = vsel %vm279, %v3531, 0.0
      %v3569 = vadd.f32 %v3567, %v3568
      %v3570 = vsel %vm279, %v3532, 0.0
      %v3571 = vadd.f32 %v3569, %v3570
      %v3572 = vsel %vm279, %v3533, 0.0
      %v3573 = vadd.f32 %v3571, %v3572
      %v3574 = vsel %vm279, %v3534, 0.0
      %v3575 = vadd.f32 %v3573, %v3574
      %v3576 = vsel %vm279, %v3535, 0.0
      %v3577 = vadd.f32 %v3575, %v3576
      %v3578 = vsel %vm279, %v3536, 0.0
      %v3579 = vadd.f32 %v3577, %v3578
      %v3580 = vsel %vm279, %v3537, 0.0
      %v3581 = vadd.f32 %v3579, %v3580
      %v3582 = vsel %vm279, %v3538, 0.0
      %v3583 = vadd.f32 %v3581, %v3582
      %v3584 = vsel %vm279, %v3539, 0.0
      %v3585 = vadd.f32 %v3583, %v3584
      %v3586 = vsel %vm279, %v3540, 0.0
      %v3587 = vadd.f32 %v3585, %v3586
      %v3588 = vsel %vm279, %v3541, 0.0
      %v3589 = vadd.f32 %v3587, %v3588
      %v3590 = vsel %vm279, %v3542, 0.0
      %v3591 = vadd.f32 %v3589, %v3590
      %v3592 = vsel %vm279, %v3543, 0.0
      %v3593 = vadd.f32 %v3591, %v3592
      %v3594 = vsel %vm279, %v3544, 0.0
      %v3595 = vadd.f32 %v3593, %v3594
      %v3596 = vsel %vm279, %v3545, 0.0
      %v3597 = vadd.f32 %v3595, %v3596
      %v3598 = vsel %vm279, %v3546, 0.0
      %v3599 = vadd.f32 %v3597, %v3598
      %v3600 = vsel %vm279, %v3547, 0.0
      %v3601 = vadd.f32 %v3599, %v3600
      %v3602 = vsel %vm279, %v3548, 0.0
      %v3603 = vadd.f32 %v3601, %v3602
      %v3604 = vsel %vm279, %v3549, 0.0
      %v3605 = vadd.f32 %v3603, %v3604
      %v3606 = vsel %vm279, %v3550, 0.0
      %v3607 = vadd.f32 %v3605, %v3606
      %v3608 = vsel %vm279, %v3551, 0.0
      %v3609 = vadd.f32 %v3607, %v3608
      %v3610 = vsel %vm279, %v3552, 0.0
      %v3611 = vadd.f32 %v3609, %v3610
      %v3612 = vsel %vm279, %v3553, 0.0
      %v3613 = vadd.f32 %v3611, %v3612
      %v3614 = vsel %vm279, %v3554, 0.0
      %v3615 = vadd.f32 %v3613, %v3614
      %v3616 = vsel %vm279, %v3555, 0.0
      %v3617 = vadd.f32 %v3615, %v3616
      %v3618 = vsel %vm279, %v3556, 0.0
      %v3619 = vadd.f32 %v3617, %v3618
      %v3620 = vrot.slane %v3619, 4
      %v3621 = vadd.f32 %v3619, %v3620
      %v3622 = vrot.slane %v3621, 2
      %v3623 = vadd.f32 %v3621, %v3622
      %v3624 = vrot.slane %v3623, 1
      %v3625 = vadd.f32 %v3623, %v3624
      %v3626 = vmul.f32 %v3525, %v3525
      %v3627 = vmul.f32 %v3526, %v3526
      %v3628 = vmul.f32 %v3527, %v3527
      %v3629 = vmul.f32 %v3528, %v3528
      %v3630 = vmul.f32 %v3529, %v3529
      %v3631 = vmul.f32 %v3530, %v3530
      %v3632 = vmul.f32 %v3531, %v3531
      %v3633 = vmul.f32 %v3532, %v3532
      %v3634 = vmul.f32 %v3533, %v3533
      %v3635 = vmul.f32 %v3534, %v3534
      %v3636 = vmul.f32 %v3535, %v3535
      %v3637 = vmul.f32 %v3536, %v3536
      %v3638 = vmul.f32 %v3537, %v3537
      %v3639 = vmul.f32 %v3538, %v3538
      %v3640 = vmul.f32 %v3539, %v3539
      %v3641 = vmul.f32 %v3540, %v3540
      %v3642 = vmul.f32 %v3541, %v3541
      %v3643 = vmul.f32 %v3542, %v3542
      %v3644 = vmul.f32 %v3543, %v3543
      %v3645 = vmul.f32 %v3544, %v3544
      %v3646 = vmul.f32 %v3545, %v3545
      %v3647 = vmul.f32 %v3546, %v3546
      %v3648 = vmul.f32 %v3547, %v3547
      %v3649 = vmul.f32 %v3548, %v3548
      %v3650 = vmul.f32 %v3549, %v3549
      %v3651 = vmul.f32 %v3550, %v3550
      %v3652 = vmul.f32 %v3551, %v3551
      %v3653 = vmul.f32 %v3552, %v3552
      %v3654 = vmul.f32 %v3553, %v3553
      %v3655 = vmul.f32 %v3554, %v3554
      %v3656 = vmul.f32 %v3555, %v3555
      %v3657 = vmul.f32 %v3556, %v3556
      %v3658 = vsel %vm279, %v3626, 0.0
      %v3659 = vsel %vm279, %v3627, 0.0
      %v3660 = vadd.f32 %v3658, %v3659
      %v3661 = vsel %vm279, %v3628, 0.0
      %v3662 = vadd.f32 %v3660, %v3661
      %v3663 = vsel %vm279, %v3629, 0.0
      %v3664 = vadd.f32 %v3662, %v3663
      %v3665 = vsel %vm279, %v3630, 0.0
      %v3666 = vadd.f32 %v3664, %v3665
      %v3667 = vsel %vm279, %v3631, 0.0
      %v3668 = vadd.f32 %v3666, %v3667
      %v3669 = vsel %vm279, %v3632, 0.0
      %v3670 = vadd.f32 %v3668, %v3669
      %v3671 = vsel %vm279, %v3633, 0.0
      %v3672 = vadd.f32 %v3670, %v3671
      %v3673 = vsel %vm279, %v3634, 0.0
      %v3674 = vadd.f32 %v3672, %v3673
      %v3675 = vsel %vm279, %v3635, 0.0
      %v3676 = vadd.f32 %v3674, %v3675
      %v3677 = vsel %vm279, %v3636, 0.0
      %v3678 = vadd.f32 %v3676, %v3677
      %v3679 = vsel %vm279, %v3637, 0.0
      %v3680 = vadd.f32 %v3678, %v3679
      %v3681 = vsel %vm279, %v3638, 0.0
      %v3682 = vadd.f32 %v3680, %v3681
      %v3683 = vsel %vm279, %v3639, 0.0
      %v3684 = vadd.f32 %v3682, %v3683
      %v3685 = vsel %vm279, %v3640, 0.0
      %v3686 = vadd.f32 %v3684, %v3685
      %v3687 = vsel %vm279, %v3641, 0.0
      %v3688 = vadd.f32 %v3686, %v3687
      %v3689 = vsel %vm279, %v3642, 0.0
      %v3690 = vadd.f32 %v3688, %v3689
      %v3691 = vsel %vm279, %v3643, 0.0
      %v3692 = vadd.f32 %v3690, %v3691
      %v3693 = vsel %vm279, %v3644, 0.0
      %v3694 = vadd.f32 %v3692, %v3693
      %v3695 = vsel %vm279, %v3645, 0.0
      %v3696 = vadd.f32 %v3694, %v3695
      %v3697 = vsel %vm279, %v3646, 0.0
      %v3698 = vadd.f32 %v3696, %v3697
      %v3699 = vsel %vm279, %v3647, 0.0
      %v3700 = vadd.f32 %v3698, %v3699
      %v3701 = vsel %vm279, %v3648, 0.0
      %v3702 = vadd.f32 %v3700, %v3701
      %v3703 = vsel %vm279, %v3649, 0.0
      %v3704 = vadd.f32 %v3702, %v3703
      %v3705 = vsel %vm279, %v3650, 0.0
      %v3706 = vadd.f32 %v3704, %v3705
      %v3707 = vsel %vm279, %v3651, 0.0
      %v3708 = vadd.f32 %v3706, %v3707
      %v3709 = vsel %vm279, %v3652, 0.0
      %v3710 = vadd.f32 %v3708, %v3709
      %v3711 = vsel %vm279, %v3653, 0.0
      %v3712 = vadd.f32 %v3710, %v3711
      %v3713 = vsel %vm279, %v3654, 0.0
      %v3714 = vadd.f32 %v3712, %v3713
      %v3715 = vsel %vm279, %v3655, 0.0
      %v3716 = vadd.f32 %v3714, %v3715
      %v3717 = vsel %vm279, %v3656, 0.0
      %v3718 = vadd.f32 %v3716, %v3717
      %v3719 = vsel %vm279, %v3657, 0.0
      %v3720 = vadd.f32 %v3718, %v3719
      %v3721 = vrot.slane %v3720, 4
      %v3722 = vadd.f32 %v3720, %v3721
      %v3723 = vrot.slane %v3722, 2
      %v3724 = vadd.f32 %v3722, %v3723
      %v3725 = vrot.slane %v3724, 1
      %v3726 = vadd.f32 %v3724, %v3725
      %v3727 = vmul.f32 %v3625, 0.00390625
      %v3728 = vmul.f32 %v3726, 0.00390625
      %v3729 = vmul.f32 %v3727, %v3727
      %v3730 = vsub.f32 %v3728, %v3729
      %v3731 = vmax.f32 %v3730, 0.0
      %v3732 = vadd.f32 %v3731, 1e-05
      %v3733 = vrsqrt.pop %v3732
      %v3734 = vld [vmem:[%s5] sm:$0x1]
      %v3735 = vmul.f32 %v3733, %v3734
      %v3736 = vsub.f32 %v3525, %v3727
      %v3737 = vsub.f32 %v3526, %v3727
      %v3738 = vsub.f32 %v3527, %v3727
      %v3739 = vsub.f32 %v3528, %v3727
      %v3740 = vsub.f32 %v3529, %v3727
      %v3741 = vsub.f32 %v3530, %v3727
      %v3742 = vsub.f32 %v3531, %v3727
      %v3743 = vsub.f32 %v3532, %v3727
      %v3744 = vsub.f32 %v3533, %v3727
      %v3745 = vsub.f32 %v3534, %v3727
      %v3746 = vsub.f32 %v3535, %v3727
      %v3747 = vsub.f32 %v3536, %v3727
      %v3748 = vsub.f32 %v3537, %v3727
      %v3749 = vsub.f32 %v3538, %v3727
      %v3750 = vsub.f32 %v3539, %v3727
      %v3751 = vsub.f32 %v3540, %v3727
      %v3752 = vsub.f32 %v3541, %v3727
      %v3753 = vsub.f32 %v3542, %v3727
      %v3754 = vsub.f32 %v3543, %v3727
      %v3755 = vsub.f32 %v3544, %v3727
      %v3756 = vsub.f32 %v3545, %v3727
      %v3757 = vsub.f32 %v3546, %v3727
      %v3758 = vsub.f32 %v3547, %v3727
      %v3759 = vsub.f32 %v3548, %v3727
      %v3760 = vsub.f32 %v3549, %v3727
      %v3761 = vsub.f32 %v3550, %v3727
      %v3762 = vsub.f32 %v3551, %v3727
      %v3763 = vsub.f32 %v3552, %v3727
      %v3764 = vsub.f32 %v3553, %v3727
      %v3765 = vsub.f32 %v3554, %v3727
      %v3766 = vsub.f32 %v3555, %v3727
      %v3767 = vsub.f32 %v3556, %v3727
      %v3768 = vlaneseq
      %v3769 = vshrl.u32 %v3768, 7
      %v3770 = vsub.s32 0, %v3769
      %v3771 = vrot.slane %v3735, %v3770
      %v3772 = vmul.f32 %v3736, %v3771
      %v3773 = vmul.f32 %v3737, %v3771
      %v3774 = vmul.f32 %v3738, %v3771
      %v3775 = vmul.f32 %v3739, %v3771
      %v3776 = vmul.f32 %v3740, %v3771
      %v3777 = vmul.f32 %v3741, %v3771
      %v3778 = vmul.f32 %v3742, %v3771
      %v3779 = vmul.f32 %v3743, %v3771
      %v3780 = vmul.f32 %v3744, %v3771
      %v3781 = vmul.f32 %v3745, %v3771
      %v3782 = vmul.f32 %v3746, %v3771
      %v3783 = vmul.f32 %v3747, %v3771
      %v3784 = vmul.f32 %v3748, %v3771
      %v3785 = vmul.f32 %v3749, %v3771
      %v3786 = vmul.f32 %v3750, %v3771
      %v3787 = vmul.f32 %v3751, %v3771
      %v3788 = vmul.f32 %v3752, %v3771
      %v3789 = vmul.f32 %v3753, %v3771
      %v3790 = vmul.f32 %v3754, %v3771
      %v3791 = vmul.f32 %v3755, %v3771
      %v3792 = vmul.f32 %v3756, %v3771
      %v3793 = vmul.f32 %v3757, %v3771
      %v3794 = vmul.f32 %v3758, %v3771
      %v3795 = vmul.f32 %v3759, %v3771
      %v3796 = vmul.f32 %v3760, %v3771
      %v3797 = vmul.f32 %v3761, %v3771
      %v3798 = vmul.f32 %v3762, %v3771
      %v3799 = vmul.f32 %v3763, %v3771
      %v3800 = vmul.f32 %v3764, %v3771
      %v3801 = vmul.f32 %v3765, %v3771
      %v3802 = vmul.f32 %v3766, %v3771
      %v3803 = vmul.f32 %v3767, %v3771
      %v3804 = vld [vmem:[%s6] sm:$0x1]
      %v3806 = vlaneseq
      %v3807 = vshrl.u32 %v3806, 7
      %v3808 = vsub.s32 0, %v3807
      %v3809 = vrot.slane %v3804, %v3808
      %v3811 = vadd.f32 %v3772, %v3809
      %v3812 = vadd.f32 %v3773, %v3809
      %v3813 = vadd.f32 %v3774, %v3809
      %v3814 = vadd.f32 %v3775, %v3809
      %v3815 = vadd.f32 %v3776, %v3809
      %v3816 = vadd.f32 %v3777, %v3809
      %v3817 = vadd.f32 %v3778, %v3809
      %v3818 = vadd.f32 %v3779, %v3809
      %v3819 = vadd.f32 %v3780, %v3809
      %v3820 = vadd.f32 %v3781, %v3809
      %v3821 = vadd.f32 %v3782, %v3809
      %v3822 = vadd.f32 %v3783, %v3809
      %v3823 = vadd.f32 %v3784, %v3809
      %v3824 = vadd.f32 %v3785, %v3809
      %v3825 = vadd.f32 %v3786, %v3809
      %v3826 = vadd.f32 %v3787, %v3809
      %v3827 = vadd.f32 %v3788, %v3809
      %v3828 = vadd.f32 %v3789, %v3809
      %v3829 = vadd.f32 %v3790, %v3809
      %v3830 = vadd.f32 %v3791, %v3809
      %v3831 = vadd.f32 %v3792, %v3809
      %v3832 = vadd.f32 %v3793, %v3809
      %v3833 = vadd.f32 %v3794, %v3809
      %v3834 = vadd.f32 %v3795, %v3809
      %v3835 = vadd.f32 %v3796, %v3809
      %v3836 = vadd.f32 %v3797, %v3809
      %v3837 = vadd.f32 %v3798, %v3809
      %v3838 = vadd.f32 %v3799, %v3809
      %v3839 = vadd.f32 %v3800, %v3809
      %v3840 = vadd.f32 %v3801, %v3809
      %v3841 = vadd.f32 %v3802, %v3809
      %v3842 = vadd.f32 %v3803, %v3809
      %v3843 = vld [vmem:[%s273] sm:$0xff]
      %v3844 = vld [vmem:[%s273 + $0x8] sm:$0xff]
      %v3845 = vld [vmem:[%s273 + $0x10] sm:$0xff]
      %v3846 = vld [vmem:[%s273 + $0x18] sm:$0xff]
      %v3847 = vld [vmem:[%s273 + $0x20] sm:$0xff]
      %v3848 = vld [vmem:[%s273 + $0x28] sm:$0xff]
      %v3849 = vld [vmem:[%s273 + $0x30] sm:$0xff]
      %v3850 = vld [vmem:[%s273 + $0x38] sm:$0xff]
      %v3851 = vld [vmem:[%s273 + $0x40] sm:$0xff]
      %v3852 = vld [vmem:[%s273 + $0x48] sm:$0xff]
      %v3853 = vld [vmem:[%s273 + $0x50] sm:$0xff]
      %v3854 = vld [vmem:[%s273 + $0x58] sm:$0xff]
      %v3855 = vld [vmem:[%s273 + $0x60] sm:$0xff]
      %v3856 = vld [vmem:[%s273 + $0x68] sm:$0xff]
      %v3857 = vld [vmem:[%s273 + $0x70] sm:$0xff]
      %v3858 = vld [vmem:[%s273 + $0x78] sm:$0xff]
      %v3859 = vld [vmem:[%s273 + $0x80] sm:$0xff]
      %v3860 = vld [vmem:[%s273 + $0x88] sm:$0xff]
      %v3861 = vld [vmem:[%s273 + $0x90] sm:$0xff]
      %v3862 = vld [vmem:[%s273 + $0x98] sm:$0xff]
      %v3863 = vld [vmem:[%s273 + $0xa0] sm:$0xff]
      %v3864 = vld [vmem:[%s273 + $0xa8] sm:$0xff]
      %v3865 = vld [vmem:[%s273 + $0xb0] sm:$0xff]
      %v3866 = vld [vmem:[%s273 + $0xb8] sm:$0xff]
      %v3867 = vld [vmem:[%s273 + $0xc0] sm:$0xff]
      %v3868 = vld [vmem:[%s273 + $0xc8] sm:$0xff]
      %v3869 = vld [vmem:[%s273 + $0xd0] sm:$0xff]
      %v3870 = vld [vmem:[%s273 + $0xd8] sm:$0xff]
      %v3871 = vld [vmem:[%s273 + $0xe0] sm:$0xff]
      %v3872 = vld [vmem:[%s273 + $0xe8] sm:$0xff]
      %v3873 = vld [vmem:[%s273 + $0xf0] sm:$0xff]
      %v3874 = vld [vmem:[%s273 + $0xf8] sm:$0xff]
      %v3875 = vadd.f32 %v3843, %v3811
      %v3876 = vadd.f32 %v3844, %v3812
      %v3877 = vadd.f32 %v3845, %v3813
      %v3878 = vadd.f32 %v3846, %v3814
      %v3879 = vadd.f32 %v3847, %v3815
      %v3880 = vadd.f32 %v3848, %v3816
      %v3881 = vadd.f32 %v3849, %v3817
      %v3882 = vadd.f32 %v3850, %v3818
      %v3883 = vadd.f32 %v3851, %v3819
      %v3884 = vadd.f32 %v3852, %v3820
      %v3885 = vadd.f32 %v3853, %v3821
      %v3886 = vadd.f32 %v3854, %v3822
      %v3887 = vadd.f32 %v3855, %v3823
      %v3888 = vadd.f32 %v3856, %v3824
      %v3889 = vadd.f32 %v3857, %v3825
      %v3890 = vadd.f32 %v3858, %v3826
      %v3891 = vadd.f32 %v3859, %v3827
      %v3892 = vadd.f32 %v3860, %v3828
      %v3893 = vadd.f32 %v3861, %v3829
      %v3894 = vadd.f32 %v3862, %v3830
      %v3895 = vadd.f32 %v3863, %v3831
      %v3896 = vadd.f32 %v3864, %v3832
      %v3897 = vadd.f32 %v3865, %v3833
      %v3898 = vadd.f32 %v3866, %v3834
      %v3899 = vadd.f32 %v3867, %v3835
      %v3900 = vadd.f32 %v3868, %v3836
      %v3901 = vadd.f32 %v3869, %v3837
      %v3902 = vadd.f32 %v3870, %v3838
      %v3903 = vadd.f32 %v3871, %v3839
      %v3904 = vadd.f32 %v3872, %v3840
      %v3905 = vadd.f32 %v3873, %v3841
      %v3906 = vadd.f32 %v3874, %v3842
      %3907 = vst.msk [vmem:[%s278] sm:$0xff] %vm279, %v3875
      %3908 = vst.msk [vmem:[%s278 + $0x8] sm:$0xff] %vm279, %v3876
      %3909 = vst.msk [vmem:[%s278 + $0x10] sm:$0xff] %vm279, %v3877
      %3910 = vst.msk [vmem:[%s278 + $0x18] sm:$0xff] %vm279, %v3878
      %3911 = vst.msk [vmem:[%s278 + $0x20] sm:$0xff] %vm279, %v3879
      %3912 = vst.msk [vmem:[%s278 + $0x28] sm:$0xff] %vm279, %v3880
      %3913 = vst.msk [vmem:[%s278 + $0x30] sm:$0xff] %vm279, %v3881
      %3914 = vst.msk [vmem:[%s278 + $0x38] sm:$0xff] %vm279, %v3882
      %3915 = vst.msk [vmem:[%s278 + $0x40] sm:$0xff] %vm279, %v3883
      %3916 = vst.msk [vmem:[%s278 + $0x48] sm:$0xff] %vm279, %v3884
      %3917 = vst.msk [vmem:[%s278 + $0x50] sm:$0xff] %vm279, %v3885
      %3918 = vst.msk [vmem:[%s278 + $0x58] sm:$0xff] %vm279, %v3886
      %3919 = vst.msk [vmem:[%s278 + $0x60] sm:$0xff] %vm279, %v3887
      %3920 = vst.msk [vmem:[%s278 + $0x68] sm:$0xff] %vm279, %v3888
      %3921 = vst.msk [vmem:[%s278 + $0x70] sm:$0xff] %vm279, %v3889
      %3922 = vst.msk [vmem:[%s278 + $0x78] sm:$0xff] %vm279, %v3890
      %3923 = vst.msk [vmem:[%s278 + $0x80] sm:$0xff] %vm279, %v3891
      %3924 = vst.msk [vmem:[%s278 + $0x88] sm:$0xff] %vm279, %v3892
      %3925 = vst.msk [vmem:[%s278 + $0x90] sm:$0xff] %vm279, %v3893
      %3926 = vst.msk [vmem:[%s278 + $0x98] sm:$0xff] %vm279, %v3894
      %3927 = vst.msk [vmem:[%s278 + $0xa0] sm:$0xff] %vm279, %v3895
      %3928 = vst.msk [vmem:[%s278 + $0xa8] sm:$0xff] %vm279, %v3896
      %3929 = vst.msk [vmem:[%s278 + $0xb0] sm:$0xff] %vm279, %v3897
      %3930 = vst.msk [vmem:[%s278 + $0xb8] sm:$0xff] %vm279, %v3898
      %3931 = vst.msk [vmem:[%s278 + $0xc0] sm:$0xff] %vm279, %v3899
      %3932 = vst.msk [vmem:[%s278 + $0xc8] sm:$0xff] %vm279, %v3900
      %3933 = vst.msk [vmem:[%s278 + $0xd0] sm:$0xff] %vm279, %v3901
      %3934 = vst.msk [vmem:[%s278 + $0xd8] sm:$0xff] %vm279, %v3902
      %3935 = vst.msk [vmem:[%s278 + $0xe0] sm:$0xff] %vm279, %v3903
      %3936 = vst.msk [vmem:[%s278 + $0xe8] sm:$0xff] %vm279, %v3904
      %3937 = vst.msk [vmem:[%s278 + $0xf0] sm:$0xff] %vm279, %v3905
      %3938 = vst.msk [vmem:[%s278 + $0xf8] sm:$0xff] %vm279, %v3906
      %p3939 = scmp.lt.s32.totalorder %s18, 1
      %s3940 = scalar_select %p3939, %s18, 1
      %s3941 = smul.addr %s3940, 32
      %s3942 = smul.addr %s3941, 8
      %s3943 = scalar_lea.vmem %s7, %s3942
      // Predicated region
      $region49: #{tpu_custom_call.1} parent=47 // pred_check
        %p3944 = pneg %p188
      $region50: #{tpu_custom_call.1} parent=47 // pred_check_branch
        %3946 = sbr.rel (%p3944) target = $region52
      $region51: #{tpu_custom_call.1} parent=47 // pred_region
        _
      $region52: #{tpu_custom_call.1} parent=47 // pred_fallthru
        _
    $region48: #{tpu_custom_call.1} parent=5 // pred_fallthru
      _
    %p3947 = scmp.le.s32.totalorder 2, %s13
    // Predicated region
    $region53: #{tpu_custom_call.1} parent=5 // pred_check
      %p3948 = pneg %p3947
    $region54: #{tpu_custom_call.1} parent=5 // pred_check_branch
      %3950 = sbr.rel (%p3948) target = $region56
    $region55: #{tpu_custom_call.1} parent=5 // pred_region
      %s3951 = ssub.s32 %s13, 2
      // Predicated region
      $region57: #{tpu_custom_call.1} parent=55 // pred_check
        %p3952 = pneg %p194
      $region58: #{tpu_custom_call.1} parent=55 // pred_check_branch
        %3954 = sbr.rel (%p3952) target = $region60
      $region59: #{tpu_custom_call.1} parent=55 // pred_region
        %p3955 = scmp.lt.s32.totalorder %s19, 1
        %s3956 = scalar_select %p3955, %s19, 1
        %s3957 = smul.addr %s3956, 32
        %s3958 = smul.addr %s3957, 8
        %s3959 = scalar_lea.vmem %s7, %s3958
      $region60: #{tpu_custom_call.1} parent=55 // pred_fallthru
        _
    $region56: #{tpu_custom_call.1} parent=5 // pred_fallthru
      _
  $region6: #{tpu_custom_call.1} parent=0 // loop_footer
    %s17 = sadd.s32 1, %s13
  $region7: #{tpu_custom_call.1} parent=0 // loop_footer_branch
    %12 = sbr.rel target = $region3
  $region8: #{tpu_custom_call.1} parent=0 // loop_exit
    _

</llo_original>
